<compile_context>
chip_gen: v5e
topology: v5e:2x2
jax: 0.10.0
libtpu: 0.0.40
codegen_flags: <defaults>
</compile_context>

<pallas_src>
import numpy as np
import jax
import jax.numpy as jnp
from jax.experimental import pallas as pl
from jax.experimental.pallas import tpu as pltpu


def _mish(v):
    # Mish(x) = x * tanh(softplus(x)); stable softplus = max(x,0) + log(1+e^-|x|)
    sp = jnp.maximum(v, 0.0) + jnp.log(1.0 + jnp.exp(-jnp.abs(v)))
    return v * jnp.tanh(sp)


def _reflect_pad1_into(t, xp_ref):
    """ReflectionPad2d(1): write padded copy of t (H, W, C) into xp_ref (H+2, W+2, C)."""
    H, W = t.shape[0], t.shape[1]
    xp_ref[1:H + 1, 1:W + 1, :] = t
    xp_ref[0:1, 1:W + 1, :] = t[1:2]                    # top row    <- row 1
    xp_ref[H + 1:H + 2, 1:W + 1, :] = t[H - 2:H - 1]    # bottom row <- row H-2
    xp_ref[:, 0:1, :] = xp_ref[:, 2:3, :]               # left col   <- col 1 (incl. corners)
    xp_ref[:, W + 1:W + 2, :] = xp_ref[:, W - 1:W, :]   # right col  <- col W-2


def _conv3x3_mish(xp_ref, w_ref, b_ref, H, W):
    """3x3 stride-1 conv over the padded plane in xp_ref, then Mish.

    xp_ref: (H+2, W+2, Cin) VMEM scratch with the reflection-padded input.
    w_ref:  (9, Cin, Cout)  taps flattened as kh*3+kw.
    b_ref:  (1, Cout)
    Returns (H, W, Cout) float32.
    """
    Cin = xp_ref.shape[-1]
    Cout = w_ref.shape[-1]
    acc = jnp.broadcast_to(b_ref[...].astype(jnp.float32), (H * W, Cout))
    for kh in range(3):
        for kw in range(3):
            patch = xp_ref[kh:kh + H, kw:kw + W, :].reshape(H * W, Cin)
            acc = acc + jnp.dot(patch, w_ref[kh * 3 + kw],
                                preferred_element_type=jnp.float32)
    return _mish(acc).reshape(H, W, Cout)


def _encode_fused_kernel(x_ref, w1_ref, b1_ref, w2_ref, b2_ref, o_ref, xp_ref):
    """Fused: conv1 (1x1) + Mish + reflect-pad(1) + conv2 (3x3, stride 1) + Mish."""
    _, H, W, Cin = x_ref.shape
    Cmid = w1_ref.shape[1]
    x = x_ref[0].reshape(H * W, Cin)
    t = _mish(jnp.dot(x, w1_ref[...], preferred_element_type=jnp.float32)
              + b1_ref[...])
    _reflect_pad1_into(t.reshape(H, W, Cmid), xp_ref)
    o_ref[0] = _conv3x3_mish(xp_ref, w2_ref, b2_ref, H, W).astype(o_ref.dtype)


def _pad_conv3_mish_kernel(n_ref, w_ref, b_ref, o_ref, xp_ref):
    """reflect-pad(1) + 3x3 conv (dense, stride 1) + Mish (downsample branch)."""
    _, H, W, _ = n_ref.shape
    _reflect_pad1_into(n_ref[0], xp_ref)
    o_ref[0] = _conv3x3_mish(xp_ref, w_ref, b_ref, H, W).astype(o_ref.dtype)


def _encode_fused_call(x_nhwc, w1, b1, w2, b2):
    B, H, W, Cin = x_nhwc.shape
    Cmid = w1.shape[1]
    Cout = w2.shape[-1]
    return pl.pallas_call(
        _encode_fused_kernel,
        out_shape=jax.ShapeDtypeStruct((B, H, W, Cout), x_nhwc.dtype),
        grid_spec=pltpu.PrefetchScalarGridSpec(
            num_scalar_prefetch=0,
            grid=(B,),
            in_specs=[
                pl.BlockSpec((1, H, W, Cin), lambda b: (b, 0, 0, 0)),
                pl.BlockSpec((Cin, Cmid), lambda b: (0, 0)),
                pl.BlockSpec((1, Cmid), lambda b: (0, 0)),
                pl.BlockSpec((9, Cmid, Cout), lambda b: (0, 0, 0)),
                pl.BlockSpec((1, Cout), lambda b: (0, 0)),
            ],
            out_specs=pl.BlockSpec((1, H, W, Cout), lambda b: (b, 0, 0, 0)),
            scratch_shapes=[pltpu.VMEM((H + 2, W + 2, Cmid), jnp.float32)],
        ),
        compiler_params=pltpu.CompilerParams(
            dimension_semantics=("parallel",)),
    )(x_nhwc, w1, b1, w2, b2)


def _pad_conv3_mish_call(n_nhwc, w, b):
    B, H, W, C = n_nhwc.shape
    Cout = w.shape[-1]
    return pl.pallas_call(
        _pad_conv3_mish_kernel,
        out_shape=jax.ShapeDtypeStruct((B, H, W, Cout), n_nhwc.dtype),
        grid_spec=pltpu.PrefetchScalarGridSpec(
            num_scalar_prefetch=0,
            grid=(B,),
            in_specs=[
                pl.BlockSpec((1, H, W, C), lambda b: (b, 0, 0, 0)),
                pl.BlockSpec((9, C, Cout), lambda b: (0, 0, 0)),
                pl.BlockSpec((1, Cout), lambda b: (0, 0)),
            ],
            out_specs=pl.BlockSpec((1, H, W, Cout), lambda b: (b, 0, 0, 0)),
            scratch_shapes=[pltpu.VMEM((H + 2, W + 2, C), n_nhwc.dtype)],
        ),
        compiler_params=pltpu.CompilerParams(
            dimension_semantics=("parallel",)),
    )(n_nhwc, w, b)


def encode_block_forward(x, params, scales, stride=1):
    """Pallas implementation of EncodeBlock.forward(x, scales).

    x: (B, Cin, H, W) NCHW like PyTorch.
    params: (w1, b1, w2, b2, w3, b3) in PyTorch layouts:
      w1 (Cmid, Cin, 1, 1), w2 (Cout, Cmid, 3, 3), w3 (Cout, Cout, 3, 3),
      biases (C,), with Cmid = Cin // 2.
    Returns an NCHW array (scales == 4) or an NCHW (normal, down) pair.
    """
    w1, b1, w2, b2, w3, b3 = params
    B, Cin, H, W = x.shape
    Cmid = w1.shape[0]
    Cout = w2.shape[0]
    assert H >= 2 and W >= 2, "ReflectionPad2d(1) requires spatial dims >= 2"

    x_nhwc = jnp.transpose(x, (0, 2, 3, 1))
    if stride > 1:
        # 1x1 conv at stride s == subsample input, then 1x1 conv at stride 1.
        x_nhwc = x_nhwc[:, ::stride, ::stride, :]

    w1k = jnp.transpose(w1[:, :, 0, 0], (1, 0))                   # (Cin, Cmid)
    b1k = b1.reshape(1, Cmid)
    w2k = jnp.transpose(w2, (2, 3, 1, 0)).reshape(9, Cmid, Cout)  # tap-major (kh*3+kw)
    b2k = b2.reshape(1, Cout)

    normal = _encode_fused_call(x_nhwc, w1k, b1k, w2k, b2k)
    if stride > 1:
        # k=3 / reflect-pad 1 conv at stride s == dense conv subsampled by s.
        normal = normal[:, ::stride, ::stride, :]

    if scales == 4:
        return jnp.transpose(normal, (0, 3, 1, 2))

    # Downsample branch (ConvLayer1 with Downsample == 'stride').
    w3k = jnp.transpose(w3, (2, 3, 1, 0)).reshape(9, Cout, Cout)
    b3k = b3.reshape(1, Cout)
    dense = _pad_conv3_mish_call(normal, w3k, b3k)
    # TODO(synk): fold the stride-2 subsample into the kernel (strided taps)
    # instead of computing the dense map and slicing in the wrapper.
    down = dense[:, ::2, ::2, :]
    return (jnp.transpose(normal, (0, 3, 1, 2)),
            jnp.transpose(down, (0, 3, 1, 2)))


# ----------------------------- pure-JAX reference -----------------------------
def _ref_conv_nchw(x, w, b, stride, pad):
    if pad:
        x = jnp.pad(x, ((0, 0), (0, 0), (pad, pad), (pad, pad)), mode="reflect")
    y = jax.lax.conv_general_dilated(
        x, w, (stride, stride), "VALID",
        dimension_numbers=("NCHW", "OIHW", "NCHW"),
        precision=jax.lax.Precision.HIGHEST)
    return y + b[None, :, None, None]


def _ref_encode_block(x, params, scales, stride=1):
    w1, b1, w2, b2, w3, b3 = params
    t = _mish(_ref_conv_nchw(x, w1, b1, stride, 0))
    n = _mish(_ref_conv_nchw(t, w2, b2, stride, 1))
    if scales == 4:
        return n
    d = _mish(_ref_conv_nchw(n, w3, b3, 2, 1))
    return n, d


if __name__ == "__main__":
    key = jax.random.PRNGKey(0)
    ks = jax.random.split(key, 7)

    B, Cin, H, W = 2, 4, 16, 16
    Cmid, Cout = Cin // 2, 8
    stride = 1

    x = jax.random.normal(ks[0], (B, Cin, H, W), dtype=jnp.float32)
    w1 = jax.random.normal(ks[1], (Cmid, Cin, 1, 1), dtype=jnp.float32) * 0.3
    b1 = jax.random.normal(ks[2], (Cmid,), dtype=jnp.float32) * 0.1
    w2 = jax.random.normal(ks[3], (Cout, Cmid, 3, 3), dtype=jnp.float32) * 0.3
    b2 = jax.random.normal(ks[4], (Cout,), dtype=jnp.float32) * 0.1
    w3 = jax.random.normal(ks[5], (Cout, Cout, 3, 3), dtype=jnp.float32) * 0.3
    b3 = jax.random.normal(ks[6], (Cout,), dtype=jnp.float32) * 0.1
    params = (w1, b1, w2, b2, w3, b3)

    # Tolerance covers MXU reduced-precision passes for f32 operands; any
    # structural bug (wrong pad index / tap / layout) produces O(1) errors.
    rtol = atol = 2e-2

    # scales == 4 branch: returns `normal` only.
    out4 = jax.block_until_ready(encode_block_forward(x, params, scales=4, stride=stride))
    ref4 = _ref_encode_block(x, params, scales=4, stride=stride)
    assert out4.shape == (B, Cout, H, W), out4.shape
    np.testing.assert_allclose(np.asarray(out4), np.asarray(ref4), rtol=rtol, atol=atol)

    # scales != 4 branch: returns (normal, downsampled).
    n_out, d_out = encode_block_forward(x, params, scales=2, stride=stride)
    n_out = jax.block_until_ready(n_out)
    d_out = jax.block_until_ready(d_out)
    n_ref, d_ref = _ref_encode_block(x, params, scales=2, stride=stride)
    assert n_out.shape == (B, Cout, H, W), n_out.shape
    assert d_out.shape == (B, Cout, H // 2, W // 2), d_out.shape
    np.testing.assert_allclose(np.asarray(n_out), np.asarray(n_ref), rtol=rtol, atol=atol)
    np.testing.assert_allclose(np.asarray(d_out), np.asarray(d_ref), rtol=rtol, atol=atol)

    print("KERNEL_OK")
</pallas_src>

<mosaic_0001>
module attributes {stable_mosaic.version = 11 : i64} {
  func.func @_encode_fused_kernel(%arg0: i32, %arg1: memref<1x16x16x4xf32, #tpu.memory_space<vmem>>, %arg2: memref<4x2xf32, #tpu.memory_space<vmem>>, %arg3: memref<1x2xf32, #tpu.memory_space<vmem>>, %arg4: memref<9x2x8xf32, #tpu.memory_space<vmem>>, %arg5: memref<1x8xf32, #tpu.memory_space<vmem>>, %arg6: memref<1x16x16x8xf32, #tpu.memory_space<vmem>>, %arg7: memref<18x18x2xf32, #tpu.memory_space<vmem>>) attributes {dimension_semantics = [#tpu.dimension_semantics<parallel>], iteration_bounds = array<i64: 2>, scalar_prefetch = 0 : i64, scratch_operands = 1 : i64, tpu.core_type = #tpu.core_type<tc>, window_params = [{transform_indices = @transform_0, window_bounds = array<i64: 1, 16, 16, 4>}, {pipeline_mode = #tpu.pipeline_mode<synchronous>, transform_indices = @transform_1, window_bounds = array<i64: 4, 2>}, {pipeline_mode = #tpu.pipeline_mode<synchronous>, transform_indices = @transform_2, window_bounds = array<i64: 1, 2>}, {pipeline_mode = #tpu.pipeline_mode<synchronous>, transform_indices = @transform_3, window_bounds = array<i64: 9, 2, 8>}, {pipeline_mode = #tpu.pipeline_mode<synchronous>, transform_indices = @transform_4, window_bounds = array<i64: 1, 8>}, {transform_indices = @transform_5, window_bounds = array<i64: 1, 16, 16, 8>}]} {
    %c0 = arith.constant 0 : index
    %c0_0 = arith.constant 0 : index
    %c0_1 = arith.constant 0 : index
    %c0_2 = arith.constant 0 : index
    %0 = vector.load %arg1[%c0, %c0_0, %c0_1, %c0_2] : memref<1x16x16x4xf32, #tpu.memory_space<vmem>>, vector<1x16x16x4xf32>
    %1 = vector.shape_cast %0 : vector<1x16x16x4xf32> to vector<16x16x4xf32>
    %2 = vector.shape_cast %1 : vector<16x16x4xf32> to vector<256x4xf32>
    %c0_3 = arith.constant 0 : index
    %c0_4 = arith.constant 0 : index
    %3 = vector.load %arg2[%c0_3, %c0_4] : memref<4x2xf32, #tpu.memory_space<vmem>>, vector<4x2xf32>
    %cst = arith.constant dense<0.000000e+00> : vector<256x2xf32>
    %4 = tpu.matmul %2, %3, %cst {dimension_numbers = #tpu.dot_dimension_numbers<[1], [0], [0], [1], [0, 0, 1, 1], [], []>} : vector<256x4xf32>, vector<4x2xf32>, vector<256x2xf32> -> vector<256x2xf32>
    %c0_5 = arith.constant 0 : index
    %c0_6 = arith.constant 0 : index
    %5 = vector.load %arg3[%c0_5, %c0_6] : memref<1x2xf32, #tpu.memory_space<vmem>>, vector<1x2xf32>
    %6 = vector.broadcast %5 : vector<1x2xf32> to vector<256x2xf32>
    %7 = arith.addf %4, %6 : vector<256x2xf32>
    %cst_7 = arith.constant 0.000000e+00 : f32
    %8 = vector.broadcast %cst_7 : f32 to vector<256x2xf32>
    %9 = arith.maximumf %7, %8 : vector<256x2xf32>
    %10 = math.absf %7 : vector<256x2xf32>
    %cst_8 = arith.constant 0.000000e+00 : f32
    %11 = vector.broadcast %cst_8 : f32 to vector<256x2xf32>
    %12 = arith.subf %11, %10 : vector<256x2xf32>
    %13 = math.exp %12 : vector<256x2xf32>
    %cst_9 = arith.constant 1.000000e+00 : f32
    %14 = vector.broadcast %cst_9 : f32 to vector<256x2xf32>
    %15 = arith.addf %14, %13 : vector<256x2xf32>
    %16 = math.log %15 : vector<256x2xf32>
    %17 = arith.addf %9, %16 : vector<256x2xf32>
    %18 = math.tanh %17 : vector<256x2xf32>
    %19 = arith.mulf %7, %18 : vector<256x2xf32>
    %20 = vector.shape_cast %19 : vector<256x2xf32> to vector<16x16x2xf32>
    %c1 = arith.constant 1 : index
    %c1_10 = arith.constant 1 : index
    %c0_11 = arith.constant 0 : index
    %21 = vector.load %arg7[%c1, %c1_10, %c0_11] : memref<18x18x2xf32, #tpu.memory_space<vmem>>, vector<16x16x2xf32>
    tpu.vector_store %arg7[%c1, %c1_10, %c0_11], %20 {strides = array<i32>} : memref<18x18x2xf32, #tpu.memory_space<vmem>>, vector<16x16x2xf32>,
    %22 = vector.extract_strided_slice %20 {offsets = [1, 0, 0], sizes = [1, 16, 2], strides = [1, 1, 1]} : vector<16x16x2xf32> to vector<1x16x2xf32>
    %c0_12 = arith.constant 0 : index
    %c1_13 = arith.constant 1 : index
    %c0_14 = arith.constant 0 : index
    %23 = vector.load %arg7[%c0_12, %c1_13, %c0_14] : memref<18x18x2xf32, #tpu.memory_space<vmem>>, vector<1x16x2xf32>
    tpu.vector_store %arg7[%c0_12, %c1_13, %c0_14], %22 {strides = array<i32>} : memref<18x18x2xf32, #tpu.memory_space<vmem>>, vector<1x16x2xf32>,
    %24 = vector.extract_strided_slice %20 {offsets = [14, 0, 0], sizes = [1, 16, 2], strides = [1, 1, 1]} : vector<16x16x2xf32> to vector<1x16x2xf32>
    %c17 = arith.constant 17 : index
    %c1_15 = arith.constant 1 : index
    %c0_16 = arith.constant 0 : index
    %25 = vector.load %arg7[%c17, %c1_15, %c0_16] : memref<18x18x2xf32, #tpu.memory_space<vmem>>, vector<1x16x2xf32>
    tpu.vector_store %arg7[%c17, %c1_15, %c0_16], %24 {strides = array<i32>} : memref<18x18x2xf32, #tpu.memory_space<vmem>>, vector<1x16x2xf32>,
    %c0_17 = arith.constant 0 : index
    %c2 = arith.constant 2 : index
    %c0_18 = arith.constant 0 : index
    %26 = vector.load %arg7[%c0_17, %c2, %c0_18] : memref<18x18x2xf32, #tpu.memory_space<vmem>>, vector<18x1x2xf32>
    %c0_19 = arith.constant 0 : index
    %c0_20 = arith.constant 0 : index
    %c0_21 = arith.constant 0 : index
    %27 = vector.load %arg7[%c0_19, %c0_20, %c0_21] : memref<18x18x2xf32, #tpu.memory_space<vmem>>, vector<18x1x2xf32>
    tpu.vector_store %arg7[%c0_19, %c0_20, %c0_21], %26 {strides = array<i32>} : memref<18x18x2xf32, #tpu.memory_space<vmem>>, vector<18x1x2xf32>,
    %c0_22 = arith.constant 0 : index
    %c15 = arith.constant 15 : index
    %c0_23 = arith.constant 0 : index
    %28 = vector.load %arg7[%c0_22, %c15, %c0_23] : memref<18x18x2xf32, #tpu.memory_space<vmem>>, vector<18x1x2xf32>
    %c0_24 = arith.constant 0 : index
    %c17_25 = arith.constant 17 : index
    %c0_26 = arith.constant 0 : index
    %29 = vector.load %arg7[%c0_24, %c17_25, %c0_26] : memref<18x18x2xf32, #tpu.memory_space<vmem>>, vector<18x1x2xf32>
    tpu.vector_store %arg7[%c0_24, %c17_25, %c0_26], %28 {strides = array<i32>} : memref<18x18x2xf32, #tpu.memory_space<vmem>>, vector<18x1x2xf32>,
    %c0_27 = arith.constant 0 : index
    %c0_28 = arith.constant 0 : index
    %30 = vector.load %arg5[%c0_27, %c0_28] : memref<1x8xf32, #tpu.memory_space<vmem>>, vector<1x8xf32>
    %31 = vector.shape_cast %30 : vector<1x8xf32> to vector<1x8xf32>
    %32 = vector.broadcast %31 : vector<1x8xf32> to vector<256x8xf32>
    %c0_29 = arith.constant 0 : index
    %c0_30 = arith.constant 0 : index
    %c0_31 = arith.constant 0 : index
    %33 = vector.load %arg7[%c0_29, %c0_30, %c0_31] : memref<18x18x2xf32, #tpu.memory_space<vmem>>, vector<16x16x2xf32>
    %34 = vector.shape_cast %33 : vector<16x16x2xf32> to vector<256x2xf32>
    %c0_32 = arith.constant 0 : index
    %c0_33 = arith.constant 0 : index
    %c0_34 = arith.constant 0 : index
    %35 = vector.load %arg4[%c0_32, %c0_33, %c0_34] : memref<9x2x8xf32, #tpu.memory_space<vmem>>, vector<1x2x8xf32>
    %36 = vector.shape_cast %35 : vector<1x2x8xf32> to vector<2x8xf32>
    %cst_35 = arith.constant dense<0.000000e+00> : vector<256x8xf32>
    %37 = tpu.matmul %34, %36, %cst_35 {dimension_numbers = #tpu.dot_dimension_numbers<[1], [0], [0], [1], [0, 0, 1, 1], [], []>} : vector<256x2xf32>, vector<2x8xf32>, vector<256x8xf32> -> vector<256x8xf32>
    %38 = arith.addf %32, %37 : vector<256x8xf32>
    %c0_36 = arith.constant 0 : index
    %c1_37 = arith.constant 1 : index
    %c0_38 = arith.constant 0 : index
    %39 = vector.load %arg7[%c0_36, %c1_37, %c0_38] : memref<18x18x2xf32, #tpu.memory_space<vmem>>, vector<16x16x2xf32>
    %40 = vector.shape_cast %39 : vector<16x16x2xf32> to vector<256x2xf32>
    %c1_39 = arith.constant 1 : index
    %c0_40 = arith.constant 0 : index
    %c0_41 = arith.constant 0 : index
    %41 = vector.load %arg4[%c1_39, %c0_40, %c0_41] : memref<9x2x8xf32, #tpu.memory_space<vmem>>, vector<1x2x8xf32>
    %42 = vector.shape_cast %41 : vector<1x2x8xf32> to vector<2x8xf32>
    %cst_42 = arith.constant dense<0.000000e+00> : vector<256x8xf32>
    %43 = tpu.matmul %40, %42, %cst_42 {dimension_numbers = #tpu.dot_dimension_numbers<[1], [0], [0], [1], [0, 0, 1, 1], [], []>} : vector<256x2xf32>, vector<2x8xf32>, vector<256x8xf32> -> vector<256x8xf32>
    %44 = arith.addf %38, %43 : vector<256x8xf32>
    %c0_43 = arith.constant 0 : index
    %c2_44 = arith.constant 2 : index
    %c0_45 = arith.constant 0 : index
    %45 = vector.load %arg7[%c0_43, %c2_44, %c0_45] : memref<18x18x2xf32, #tpu.memory_space<vmem>>, vector<16x16x2xf32>
    %46 = vector.shape_cast %45 : vector<16x16x2xf32> to vector<256x2xf32>
    %c2_46 = arith.constant 2 : index
    %c0_47 = arith.constant 0 : index
    %c0_48 = arith.constant 0 : index
    %47 = vector.load %arg4[%c2_46, %c0_47, %c0_48] : memref<9x2x8xf32, #tpu.memory_space<vmem>>, vector<1x2x8xf32>
    %48 = vector.shape_cast %47 : vector<1x2x8xf32> to vector<2x8xf32>
    %cst_49 = arith.constant dense<0.000000e+00> : vector<256x8xf32>
    %49 = tpu.matmul %46, %48, %cst_49 {dimension_numbers = #tpu.dot_dimension_numbers<[1], [0], [0], [1], [0, 0, 1, 1], [], []>} : vector<256x2xf32>, vector<2x8xf32>, vector<256x8xf32> -> vector<256x8xf32>
    %50 = arith.addf %44, %49 : vector<256x8xf32>
    %c1_50 = arith.constant 1 : index
    %c0_51 = arith.constant 0 : index
    %c0_52 = arith.constant 0 : index
    %51 = vector.load %arg7[%c1_50, %c0_51, %c0_52] : memref<18x18x2xf32, #tpu.memory_space<vmem>>, vector<16x16x2xf32>
    %52 = vector.shape_cast %51 : vector<16x16x2xf32> to vector<256x2xf32>
    %c3 = arith.constant 3 : index
    %c0_53 = arith.constant 0 : index
    %c0_54 = arith.constant 0 : index
    %53 = vector.load %arg4[%c3, %c0_53, %c0_54] : memref<9x2x8xf32, #tpu.memory_space<vmem>>, vector<1x2x8xf32>
    %54 = vector.shape_cast %53 : vector<1x2x8xf32> to vector<2x8xf32>
    %cst_55 = arith.constant dense<0.000000e+00> : vector<256x8xf32>
    %55 = tpu.matmul %52, %54, %cst_55 {dimension_numbers = #tpu.dot_dimension_numbers<[1], [0], [0], [1], [0, 0, 1, 1], [], []>} : vector<256x2xf32>, vector<2x8xf32>, vector<256x8xf32> -> vector<256x8xf32>
    %56 = arith.addf %50, %55 : vector<256x8xf32>
    %c1_56 = arith.constant 1 : index
    %c1_57 = arith.constant 1 : index
    %c0_58 = arith.constant 0 : index
    %57 = vector.load %arg7[%c1_56, %c1_57, %c0_58] : memref<18x18x2xf32, #tpu.memory_space<vmem>>, vector<16x16x2xf32>
    %58 = vector.shape_cast %57 : vector<16x16x2xf32> to vector<256x2xf32>
    %c4 = arith.constant 4 : index
    %c0_59 = arith.constant 0 : index
    %c0_60 = arith.constant 0 : index
    %59 = vector.load %arg4[%c4, %c0_59, %c0_60] : memref<9x2x8xf32, #tpu.memory_space<vmem>>, vector<1x2x8xf32>
    %60 = vector.shape_cast %59 : vector<1x2x8xf32> to vector<2x8xf32>
    %cst_61 = arith.constant dense<0.000000e+00> : vector<256x8xf32>
    %61 = tpu.matmul %58, %60, %cst_61 {dimension_numbers = #tpu.dot_dimension_numbers<[1], [0], [0], [1], [0, 0, 1, 1], [], []>} : vector<256x2xf32>, vector<2x8xf32>, vector<256x8xf32> -> vector<256x8xf32>
    %62 = arith.addf %56, %61 : vector<256x8xf32>
    %c1_62 = arith.constant 1 : index
    %c2_63 = arith.constant 2 : index
    %c0_64 = arith.constant 0 : index
    %63 = vector.load %arg7[%c1_62, %c2_63, %c0_64] : memref<18x18x2xf32, #tpu.memory_space<vmem>>, vector<16x16x2xf32>
    %64 = vector.shape_cast %63 : vector<16x16x2xf32> to vector<256x2xf32>
    %c5 = arith.constant 5 : index
    %c0_65 = arith.constant 0 : index
    %c0_66 = arith.constant 0 : index
    %65 = vector.load %arg4[%c5, %c0_65, %c0_66] : memref<9x2x8xf32, #tpu.memory_space<vmem>>, vector<1x2x8xf32>
    %66 = vector.shape_cast %65 : vector<1x2x8xf32> to vector<2x8xf32>
    %cst_67 = arith.constant dense<0.000000e+00> : vector<256x8xf32>
    %67 = tpu.matmul %64, %66, %cst_67 {dimension_numbers = #tpu.dot_dimension_numbers<[1], [0], [0], [1], [0, 0, 1, 1], [], []>} : vector<256x2xf32>, vector<2x8xf32>, vector<256x8xf32> -> vector<256x8xf32>
    %68 = arith.addf %62, %67 : vector<256x8xf32>
    %c2_68 = arith.constant 2 : index
    %c0_69 = arith.constant 0 : index
    %c0_70 = arith.constant 0 : index
    %69 = vector.load %arg7[%c2_68, %c0_69, %c0_70] : memref<18x18x2xf32, #tpu.memory_space<vmem>>, vector<16x16x2xf32>
    %70 = vector.shape_cast %69 : vector<16x16x2xf32> to vector<256x2xf32>
    %c6 = arith.constant 6 : index
    %c0_71 = arith.constant 0 : index
    %c0_72 = arith.constant 0 : index
    %71 = vector.load %arg4[%c6, %c0_71, %c0_72] : memref<9x2x8xf32, #tpu.memory_space<vmem>>, vector<1x2x8xf32>
    %72 = vector.shape_cast %71 : vector<1x2x8xf32> to vector<2x8xf32>
    %cst_73 = arith.constant dense<0.000000e+00> : vector<256x8xf32>
    %73 = tpu.matmul %70, %72, %cst_73 {dimension_numbers = #tpu.dot_dimension_numbers<[1], [0], [0], [1], [0, 0, 1, 1], [], []>} : vector<256x2xf32>, vector<2x8xf32>, vector<256x8xf32> -> vector<256x8xf32>
    %74 = arith.addf %68, %73 : vector<256x8xf32>
    %c2_74 = arith.constant 2 : index
    %c1_75 = arith.constant 1 : index
    %c0_76 = arith.constant 0 : index
    %75 = vector.load %arg7[%c2_74, %c1_75, %c0_76] : memref<18x18x2xf32, #tpu.memory_space<vmem>>, vector<16x16x2xf32>
    %76 = vector.shape_cast %75 : vector<16x16x2xf32> to vector<256x2xf32>
    %c7 = arith.constant 7 : index
    %c0_77 = arith.constant 0 : index
    %c0_78 = arith.constant 0 : index
    %77 = vector.load %arg4[%c7, %c0_77, %c0_78] : memref<9x2x8xf32, #tpu.memory_space<vmem>>, vector<1x2x8xf32>
    %78 = vector.shape_cast %77 : vector<1x2x8xf32> to vector<2x8xf32>
    %cst_79 = arith.constant dense<0.000000e+00> : vector<256x8xf32>
    %79 = tpu.matmul %76, %78, %cst_79 {dimension_numbers = #tpu.dot_dimension_numbers<[1], [0], [0], [1], [0, 0, 1, 1], [], []>} : vector<256x2xf32>, vector<2x8xf32>, vector<256x8xf32> -> vector<256x8xf32>
    %80 = arith.addf %74, %79 : vector<256x8xf32>
    %c2_80 = arith.constant 2 : index
    %c2_81 = arith.constant 2 : index
    %c0_82 = arith.constant 0 : index
    %81 = vector.load %arg7[%c2_80, %c2_81, %c0_82] : memref<18x18x2xf32, #tpu.memory_space<vmem>>, vector<16x16x2xf32>
    %82 = vector.shape_cast %81 : vector<16x16x2xf32> to vector<256x2xf32>
    %c8 = arith.constant 8 : index
    %c0_83 = arith.constant 0 : index
    %c0_84 = arith.constant 0 : index
    %83 = vector.load %arg4[%c8, %c0_83, %c0_84] : memref<9x2x8xf32, #tpu.memory_space<vmem>>, vector<1x2x8xf32>
    %84 = vector.shape_cast %83 : vector<1x2x8xf32> to vector<2x8xf32>
    %cst_85 = arith.constant dense<0.000000e+00> : vector<256x8xf32>
    %85 = tpu.matmul %82, %84, %cst_85 {dimension_numbers = #tpu.dot_dimension_numbers<[1], [0], [0], [1], [0, 0, 1, 1], [], []>} : vector<256x2xf32>, vector<2x8xf32>, vector<256x8xf32> -> vector<256x8xf32>
    %86 = arith.addf %80, %85 : vector<256x8xf32>
    %cst_86 = arith.constant 0.000000e+00 : f32
    %87 = vector.broadcast %cst_86 : f32 to vector<256x8xf32>
    %88 = arith.maximumf %86, %87 : vector<256x8xf32>
    %89 = math.absf %86 : vector<256x8xf32>
    %cst_87 = arith.constant 0.000000e+00 : f32
    %90 = vector.broadcast %cst_87 : f32 to vector<256x8xf32>
    %91 = arith.subf %90, %89 : vector<256x8xf32>
    %92 = math.exp %91 : vector<256x8xf32>
    %cst_88 = arith.constant 1.000000e+00 : f32
    %93 = vector.broadcast %cst_88 : f32 to vector<256x8xf32>
    %94 = arith.addf %93, %92 : vector<256x8xf32>
    %95 = math.log %94 : vector<256x8xf32>
    %96 = arith.addf %88, %95 : vector<256x8xf32>
    %97 = math.tanh %96 : vector<256x8xf32>
    %98 = arith.mulf %86, %97 : vector<256x8xf32>
    %99 = vector.shape_cast %98 : vector<256x8xf32> to vector<16x16x8xf32>
    %c0_89 = arith.constant 0 : index
    %c0_90 = arith.constant 0 : index
    %c0_91 = arith.constant 0 : index
    %c0_92 = arith.constant 0 : index
    %100 = vector.load %arg6[%c0_89, %c0_90, %c0_91, %c0_92] : memref<1x16x16x8xf32, #tpu.memory_space<vmem>>, vector<1x16x16x8xf32>
    %101 = vector.shape_cast %100 : vector<1x16x16x8xf32> to vector<16x16x8xf32>
    %102 = vector.shape_cast %99 : vector<16x16x8xf32> to vector<1x16x16x8xf32>
    tpu.vector_store %arg6[%c0_89, %c0_90, %c0_91, %c0_92], %102 {strides = array<i32>} : memref<1x16x16x8xf32, #tpu.memory_space<vmem>>, vector<1x16x16x8xf32>,
    return
  }
  func.func @transform_0(%arg0: i32) -> (i32, i32, i32, i32) {
    %c0_i32 = arith.constant 0 : i32
    %c0_i32_0 = arith.constant 0 : i32
    %c0_i32_1 = arith.constant 0 : i32
    %c0_i32_2 = arith.constant 0 : i32
    return %arg0, %c0_i32, %c0_i32_0, %c0_i32_1 : i32, i32, i32, i32
  }
  func.func @transform_1(%arg0: i32) -> (i32, i32) {
    %c0_i32 = arith.constant 0 : i32
    %c0_i32_0 = arith.constant 0 : i32
    %c0_i32_1 = arith.constant 0 : i32
    return %c0_i32, %c0_i32_0 : i32, i32
  }
  func.func @transform_2(%arg0: i32) -> (i32, i32) {
    %c0_i32 = arith.constant 0 : i32
    %c0_i32_0 = arith.constant 0 : i32
    %c0_i32_1 = arith.constant 0 : i32
    return %c0_i32, %c0_i32_0 : i32, i32
  }
  func.func @transform_3(%arg0: i32) -> (i32, i32, i32) {
    %c0_i32 = arith.constant 0 : i32
    %c0_i32_0 = arith.constant 0 : i32
    %c0_i32_1 = arith.constant 0 : i32
    %c0_i32_2 = arith.constant 0 : i32
    return %c0_i32, %c0_i32_0, %c0_i32_1 : i32, i32, i32
  }
  func.func @transform_4(%arg0: i32) -> (i32, i32) {
    %c0_i32 = arith.constant 0 : i32
    %c0_i32_0 = arith.constant 0 : i32
    %c0_i32_1 = arith.constant 0 : i32
    return %c0_i32, %c0_i32_0 : i32, i32
  }
  func.func @transform_5(%arg0: i32) -> (i32, i32, i32, i32) {
    %c0_i32 = arith.constant 0 : i32
    %c0_i32_0 = arith.constant 0 : i32
    %c0_i32_1 = arith.constant 0 : i32
    %c0_i32_2 = arith.constant 0 : i32
    return %arg0, %c0_i32, %c0_i32_0, %c0_i32_1 : i32, i32, i32, i32
  }
}

</mosaic_0001>

<llo_original>
// kernel: tpu_custom_call.1
$region0: #{tpu_custom_call.1}
  #allocation0 [shape = 'u32[]', space=smem, size = 0x4, offset = 0x4, fixed_abs, tag = 'smem constant byte address 0x4 - core index']
  #allocation1 [shape = 'u32[72,128]{1,0:T(1,128)}', space=vmem, size = 0x9000, scoped, tag = 'internal scratch']
  #allocation2 [shape = 'f32[18,18,2]{2,1,0:T(8,128)}', space=vmem, size = 0x36000, scoped, tag = 'scratch operand']
  %s0 = inlined_call_operand.vmem [shape: f32[2,16,16,4], index: 0, kind: input, shape index: {}]
  %s1 = inlined_call_operand.vmem [shape: f32[4,2], index: 1, kind: input, shape index: {}]
  %s2 = inlined_call_operand.vmem [shape: f32[1,2], index: 2, kind: input, shape index: {}]
  %s3 = inlined_call_operand.vmem [shape: f32[9,2,8], index: 3, kind: input, shape index: {}]
  %s4 = inlined_call_operand.vmem [shape: f32[1,8], index: 4, kind: input, shape index: {}]
  %s5 = inlined_call_operand.vmem [shape: f32[2,16,16,8], index: 5, kind: output, shape index: {}]
  %s6 = sld [smem:[#allocation0]]
  $region53: #{tpu_custom_call.1} parent=0
    _
  %s8 = ssub.s32 1, %s6
  %s9 = scalar_select 0, %s8, %s6
  loop: start=0, step=1, limit=4
  $region2: #{tpu_custom_call.1} parent=0 // loop_pre_header
    _
  $region3: #{tpu_custom_call.1} parent=0 // loop_header
    %s11 = sphi 0, %s15
    %p12 = scmp.ge.s32.totalorder %s11, 4
    %s21 = sphi 0, %s23
    %s24 = sphi 0, %s21
    %s25 = sphi 0, %s24
    %s41 = sphi 0, %s25
    %s45 = sphi 0, %s45
    %s47 = sphi 0, %s45
    %s48 = sphi 0, %s47
    %s62 = sphi 0, %s48
    %s66 = sphi 0, %s66
    %s68 = sphi 0, %s66
    %s69 = sphi 0, %s68
    %s83 = sphi 0, %s69
    %s87 = sphi 0, %s87
    %s89 = sphi 0, %s87
    %s90 = sphi 0, %s89
    %s104 = sphi 0, %s90
    %s108 = sphi 0, %s108
    %s110 = sphi 0, %s108
    %s111 = sphi 0, %s110
    %s125 = sphi 0, %s111
    %s131 = sphi 0, %s133
    %s134 = sphi 0, %s131
    %s135 = sphi 0, %s134
    %s151 = sphi 0, %s135
  $region4: #{tpu_custom_call.1} parent=0 // loop_header_branch
    %14 = sbr.rel (%p12) target = $region8
  $region5: #{tpu_custom_call.1} parent=0 // loop_body
    %s16 = ssub.s32 %s11, 1
    %s17 = ssub.s32 %s11, 2
    %s18 = sadd.s32 %s11, 1
    %s19 = ssub.s32 %s11, %s18
    %p20 = scmp.eq.s32.totalorder %s19, 0
    %s22 = sadd.s32 %s21, 1
    %s23 = scalar_select %p20, %s21, %s22
    %p26 = pneg %p20
    %p27 = scmp.eq.s32.totalorder %s11, 1
    %p28 = por %p26, %p27
    %p29 = scmp.ne.s32.totalorder %s21, %s24
    %p30 = scmp.eq.s32.totalorder %s11, 0
    %p31 = por %p29, %p30
    %p32 = scmp.ne.s32.totalorder %s21, %s24
    %p33 = scmp.eq.s32.totalorder %s16, 1
    %p34 = por %p32, %p33
    %p35 = scmp.ne.s32.totalorder %s24, %s25
    %p36 = scmp.eq.s32.totalorder %s16, 0
    %p37 = por %p35, %p36
    %p38 = scmp.ne.s32.totalorder %s24, %s25
    %p39 = scmp.eq.s32.totalorder %s17, 1
    %p40 = por %p38, %p39
    %p42 = scmp.ne.s32.totalorder %s25, %s41
    %p43 = scmp.eq.s32.totalorder %s17, 0
    %p44 = por %p42, %p43
    %s46 = sadd.s32 %s45, 1
    %p49 = scmp.eq.s32.totalorder %s11, 1
    %p50 = scmp.ne.s32.totalorder %s45, %s47
    %p51 = scmp.eq.s32.totalorder %s11, 0
    %p52 = por %p50, %p51
    %p53 = scmp.ne.s32.totalorder %s45, %s47
    %p54 = scmp.eq.s32.totalorder %s16, 1
    %p55 = por %p53, %p54
    %p56 = scmp.ne.s32.totalorder %s47, %s48
    %p57 = scmp.eq.s32.totalorder %s16, 0
    %p58 = por %p56, %p57
    %p59 = scmp.ne.s32.totalorder %s47, %s48
    %p60 = scmp.eq.s32.totalorder %s17, 1
    %p61 = por %p59, %p60
    %p63 = scmp.ne.s32.totalorder %s48, %s62
    %p64 = scmp.eq.s32.totalorder %s17, 0
    %p65 = por %p63, %p64
    %s67 = sadd.s32 %s66, 1
    %p70 = scmp.eq.s32.totalorder %s11, 1
    %p71 = scmp.ne.s32.totalorder %s66, %s68
    %p72 = scmp.eq.s32.totalorder %s11, 0
    %p73 = por %p71, %p72
    %p74 = scmp.ne.s32.totalorder %s66, %s68
    %p75 = scmp.eq.s32.totalorder %s16, 1
    %p76 = por %p74, %p75
    %p77 = scmp.ne.s32.totalorder %s68, %s69
    %p78 = scmp.eq.s32.totalorder %s16, 0
    %p79 = por %p77, %p78
    %p80 = scmp.ne.s32.totalorder %s68, %s69
    %p81 = scmp.eq.s32.totalorder %s17, 1
    %p82 = por %p80, %p81
    %p84 = scmp.ne.s32.totalorder %s69, %s83
    %p85 = scmp.eq.s32.totalorder %s17, 0
    %p86 = por %p84, %p85
    %s88 = sadd.s32 %s87, 1
    %p91 = scmp.eq.s32.totalorder %s11, 1
    %p92 = scmp.ne.s32.totalorder %s87, %s89
    %p93 = scmp.eq.s32.totalorder %s11, 0
    %p94 = por %p92, %p93
    %p95 = scmp.ne.s32.totalorder %s87, %s89
    %p96 = scmp.eq.s32.totalorder %s16, 1
    %p97 = por %p95, %p96
    %p98 = scmp.ne.s32.totalorder %s89, %s90
    %p99 = scmp.eq.s32.totalorder %s16, 0
    %p100 = por %p98, %p99
    %p101 = scmp.ne.s32.totalorder %s89, %s90
    %p102 = scmp.eq.s32.totalorder %s17, 1
    %p103 = por %p101, %p102
    %p105 = scmp.ne.s32.totalorder %s90, %s104
    %p106 = scmp.eq.s32.totalorder %s17, 0
    %p107 = por %p105, %p106
    %s109 = sadd.s32 %s108, 1
    %p112 = scmp.eq.s32.totalorder %s11, 1
    %p113 = scmp.ne.s32.totalorder %s108, %s110
    %p114 = scmp.eq.s32.totalorder %s11, 0
    %p115 = por %p113, %p114
    %p116 = scmp.ne.s32.totalorder %s108, %s110
    %p117 = scmp.eq.s32.totalorder %s16, 1
    %p118 = por %p116, %p117
    %p119 = scmp.ne.s32.totalorder %s110, %s111
    %p120 = scmp.eq.s32.totalorder %s16, 0
    %p121 = por %p119, %p120
    %p122 = scmp.ne.s32.totalorder %s110, %s111
    %p123 = scmp.eq.s32.totalorder %s17, 1
    %p124 = por %p122, %p123
    %p126 = scmp.ne.s32.totalorder %s111, %s125
    %p127 = scmp.eq.s32.totalorder %s17, 0
    %p128 = por %p126, %p127
    %s129 = ssub.s32 %s11, %s18
    %p130 = scmp.eq.s32.totalorder %s129, 0
    %s132 = sadd.s32 %s131, 1
    %s133 = scalar_select %p130, %s131, %s132
    %p136 = pneg %p130
    %p137 = scmp.eq.s32.totalorder %s11, 1
    %p138 = por %p136, %p137
    %p139 = scmp.ne.s32.totalorder %s131, %s134
    %p140 = scmp.eq.s32.totalorder %s11, 0
    %p141 = por %p139, %p140
    %p142 = scmp.ne.s32.totalorder %s131, %s134
    %p143 = scmp.eq.s32.totalorder %s16, 1
    %p144 = por %p142, %p143
    %p145 = scmp.ne.s32.totalorder %s134, %s135
    %p146 = scmp.eq.s32.totalorder %s16, 0
    %p147 = por %p145, %p146
    %p148 = scmp.ne.s32.totalorder %s134, %s135
    %p149 = scmp.eq.s32.totalorder %s17, 1
    %p150 = por %p148, %p149
    %p152 = scmp.ne.s32.totalorder %s135, %s151
    %p153 = scmp.eq.s32.totalorder %s17, 0
    %p154 = por %p152, %p153
    %p155 = scmp.le.s32.totalorder 1, %s11
    %p156 = scmp.lt.s32.totalorder %s11, 3
    %p157 = pnand %p155, %p156
    %p158 = pneg %p157
    // Predicated region
    $region9: #{tpu_custom_call.1} parent=5 // pred_check
      _
    $region10: #{tpu_custom_call.1} parent=5 // pred_check_branch
      %160 = sbr.rel (%p157) target = $region12
    $region11: #{tpu_custom_call.1} parent=5 // pred_region
      %s161 = ssub.s32 %s11, 1
      // Predicated region
      $region13: #{tpu_custom_call.1} parent=11 // pred_check
        %p162 = pneg %p58
      $region14: #{tpu_custom_call.1} parent=11 // pred_check_branch
        %164 = sbr.rel (%p162) target = $region16
      $region15: #{tpu_custom_call.1} parent=11 // pred_region
        _
      $region16: #{tpu_custom_call.1} parent=11 // pred_fallthru
        _
      // Predicated region
      $region17: #{tpu_custom_call.1} parent=11 // pred_check
        %p165 = pneg %p79
      $region18: #{tpu_custom_call.1} parent=11 // pred_check_branch
        %167 = sbr.rel (%p165) target = $region20
      $region19: #{tpu_custom_call.1} parent=11 // pred_region
        _
      $region20: #{tpu_custom_call.1} parent=11 // pred_fallthru
        _
      // Predicated region
      $region21: #{tpu_custom_call.1} parent=11 // pred_check
        %p168 = pneg %p100
      $region22: #{tpu_custom_call.1} parent=11 // pred_check_branch
        %170 = sbr.rel (%p168) target = $region24
      $region23: #{tpu_custom_call.1} parent=11 // pred_region
        _
      $region24: #{tpu_custom_call.1} parent=11 // pred_fallthru
        _
      // Predicated region
      $region25: #{tpu_custom_call.1} parent=11 // pred_check
        %p171 = pneg %p121
      $region26: #{tpu_custom_call.1} parent=11 // pred_check_branch
        %173 = sbr.rel (%p171) target = $region28
      $region27: #{tpu_custom_call.1} parent=11 // pred_region
        _
      $region28: #{tpu_custom_call.1} parent=11 // pred_fallthru
        _
    $region12: #{tpu_custom_call.1} parent=5 // pred_fallthru
      _
    %p174 = scmp.lt.s32.totalorder %s11, 2
    // Predicated region
    $region29: #{tpu_custom_call.1} parent=5 // pred_check
      %p175 = pneg %p174
    $region30: #{tpu_custom_call.1} parent=5 // pred_check_branch
      %177 = sbr.rel (%p175) target = $region32
    $region31: #{tpu_custom_call.1} parent=5 // pred_region
      // Predicated region
      $region33: #{tpu_custom_call.1} parent=31 // pred_check
        %p178 = pneg %p31
      $region34: #{tpu_custom_call.1} parent=31 // pred_check_branch
        %180 = sbr.rel (%p178) target = $region36
      $region35: #{tpu_custom_call.1} parent=31 // pred_region
        %p181 = scmp.lt.s32.totalorder %s11, 1
        %s182 = scalar_select %p181, %s11, 1
        %s183 = smul.addr %s182, 32
        %s184 = smul.addr %s183, 8
        %s185 = scalar_lea.vmem %s0, %s184
      $region36: #{tpu_custom_call.1} parent=31 // pred_fallthru
        _
    $region32: #{tpu_custom_call.1} parent=5 // pred_fallthru
      _
    %p186 = scmp.le.s32.totalorder 1, %s11
    %p187 = scmp.lt.s32.totalorder %s11, 3
    %p188 = pnand %p186, %p187
    %p189 = pneg %p188
    // Predicated region
    $region37: #{tpu_custom_call.1} parent=5 // pred_check
      _
    $region38: #{tpu_custom_call.1} parent=5 // pred_check_branch
      %191 = sbr.rel (%p188) target = $region40
    $region39: #{tpu_custom_call.1} parent=5 // pred_region
      %s192 = ssub.s32 %s11, 1
      %p193 = scmp.lt.s32.totalorder %s16, 1
      %s194 = scalar_select %p193, %s16, 1
      %s195 = smul.addr %s194, 32
      %s196 = smul.addr %s195, 8
      %s197 = scalar_lea.vmem %s0, %s196
      %p198 = pneg %p37
      %p199 = pneg %p34
      %p200 = pneg %p58
      %p201 = pneg %p55
      %p202 = pneg %p79
      %p203 = pneg %p76
      %p204 = pneg %p100
      %p205 = pneg %p97
      %p206 = pneg %p121
      %p207 = pneg %p118
      %p208 = pneg %p147
      %p209 = pneg %p144
      %p210 = scmp.lt.s32.totalorder %s16, 1
      %s211 = scalar_select %p210, %s16, 1
      %s212 = smul.addr %s211, 32
      %s213 = smul.addr %s212, 8
      %s214 = scalar_lea.vmem %s5, %s213
      %p215 = scmp.lt.s32.totalorder %s16, 1
      %s216 = scalar_select %p215, %s16, 1
      %s217 = smul.addr %s216, 32
      %s218 = smul.addr %s217, 8
      %s219 = scalar_lea.vmem %s0, %s218
      %p220 = scmp.lt.s32.totalorder %s16, 1
      %s221 = scalar_select %p220, %s16, 1
      %s222 = smul.addr %s221, 32
      %s223 = smul.addr %s222, 8
      %s224 = scalar_lea.vmem %s5, %s223
      %v225 = vld [vmem:[%s219] sm:$0xff]
      %v226 = vld [vmem:[%s219 + $0x8] sm:$0xff]
      %v227 = vld [vmem:[%s219 + $0x10] sm:$0xff]
      %v228 = vld [vmem:[%s219 + $0x18] sm:$0xff]
      %v229 = vld [vmem:[%s219 + $0x20] sm:$0xff]
      %v230 = vld [vmem:[%s219 + $0x28] sm:$0xff]
      %v231 = vld [vmem:[%s219 + $0x30] sm:$0xff]
      %v232 = vld [vmem:[%s219 + $0x38] sm:$0xff]
      %v233 = vld [vmem:[%s219 + $0x40] sm:$0xff]
      %v234 = vld [vmem:[%s219 + $0x48] sm:$0xff]
      %v235 = vld [vmem:[%s219 + $0x50] sm:$0xff]
      %v236 = vld [vmem:[%s219 + $0x58] sm:$0xff]
      %v237 = vld [vmem:[%s219 + $0x60] sm:$0xff]
      %v238 = vld [vmem:[%s219 + $0x68] sm:$0xff]
      %v239 = vld [vmem:[%s219 + $0x70] sm:$0xff]
      %v240 = vld [vmem:[%s219 + $0x78] sm:$0xff]
      %v241 = vld [vmem:[%s219 + $0x80] sm:$0xff]
      %v242 = vld [vmem:[%s219 + $0x88] sm:$0xff]
      %v243 = vld [vmem:[%s219 + $0x90] sm:$0xff]
      %v244 = vld [vmem:[%s219 + $0x98] sm:$0xff]
      %v245 = vld [vmem:[%s219 + $0xa0] sm:$0xff]
      %v246 = vld [vmem:[%s219 + $0xa8] sm:$0xff]
      %v247 = vld [vmem:[%s219 + $0xb0] sm:$0xff]
      %v248 = vld [vmem:[%s219 + $0xb8] sm:$0xff]
      %v249 = vld [vmem:[%s219 + $0xc0] sm:$0xff]
      %v250 = vld [vmem:[%s219 + $0xc8] sm:$0xff]
      %v251 = vld [vmem:[%s219 + $0xd0] sm:$0xff]
      %v252 = vld [vmem:[%s219 + $0xd8] sm:$0xff]
      %v253 = vld [vmem:[%s219 + $0xe0] sm:$0xff]
      %v254 = vld [vmem:[%s219 + $0xe8] sm:$0xff]
      %v255 = vld [vmem:[%s219 + $0xf0] sm:$0xff]
      %v256 = vld [vmem:[%s219 + $0xf8] sm:$0xff]
      %v257 = vld [vmem:[%s1] sm:$0xf]
      %v258 = vld [vmem:[%s2] sm:$0x1]
      %v260 = vperm.slane %v258, 0
      %vm262 = vcmask 31744
      %v264 = vsel %vm262, %v225, 0
      %v267 = vsel %vm262, %v226, 0
      %v270 = vsel %vm262, %v227, 0
      %v273 = vsel %vm262, %v228, 0
      %v276 = vsel %vm262, %v229, 0
      %v279 = vsel %vm262, %v230, 0
      %v282 = vsel %vm262, %v231, 0
      %v285 = vsel %vm262, %v232, 0
      %v288 = vsel %vm262, %v233, 0
      %v291 = vsel %vm262, %v234, 0
      %v294 = vsel %vm262, %v235, 0
      %v297 = vsel %vm262, %v236, 0
      %v300 = vsel %vm262, %v237, 0
      %v303 = vsel %vm262, %v238, 0
      %v306 = vsel %vm262, %v239, 0
      %v309 = vsel %vm262, %v240, 0
      %v312 = vsel %vm262, %v241, 0
      %v315 = vsel %vm262, %v242, 0
      %v318 = vsel %vm262, %v243, 0
      %v321 = vsel %vm262, %v244, 0
      %v324 = vsel %vm262, %v245, 0
      %v327 = vsel %vm262, %v246, 0
      %v330 = vsel %vm262, %v247, 0
      %v333 = vsel %vm262, %v248, 0
      %v336 = vsel %vm262, %v249, 0
      %v339 = vsel %vm262, %v250, 0
      %v342 = vsel %vm262, %v251, 0
      %v345 = vsel %vm262, %v252, 0
      %v348 = vsel %vm262, %v253, 0
      %v351 = vsel %vm262, %v254, 0
      %v354 = vsel %vm262, %v255, 0
      %v357 = vsel %vm262, %v256, 0
      %vm359 = vcmask 1043456
      %v361 = vsel %vm359, %v257, 0
      %363 = vmatpush.msra.mxu0 0.0
      %364 = vmatpush.msra.mxu0 0.0
      %365 = vmatpush.msra.mxu0 0.0
      %366 = vmatpush.msra.mxu0 0.0
      %367 = vmatpush.msra.mxu0 0.0
      %368 = vmatpush.msra.mxu0 0.0
      %369 = vmatpush.msra.mxu0 0.0
      %370 = vmatpush.msra.mxu0 0.0
      %371 = vmatpush.msra.mxu0 0.0
      %372 = vmatpush.msra.mxu0 0.0
      %373 = vmatpush.msra.mxu0 0.0
      %374 = vmatpush.msra.mxu0 0.0
      %375 = vmatpush.msra.mxu0 0.0
      %376 = vmatpush.msra.mxu0 0.0
      %377 = vmatpush.msra.mxu0 0.0
      %378 = vmatpush.msra.mxu0 %v361
      %379 = vmatmul.f32.gmra.mxu0 %v264
      %v380 = vpop.f32.mrf.mxu0
      %v381 = vadd.f32 %v260, %v380
      %382 = vmatmul.f32.gmra.mxu0 %v267
      %v383 = vpop.f32.mrf.mxu0
      %v384 = vadd.f32 %v260, %v383
      %385 = vmatmul.f32.gmra.mxu0 %v270
      %v386 = vpop.f32.mrf.mxu0
      %v387 = vadd.f32 %v260, %v386
      %388 = vmatmul.f32.gmra.mxu0 %v273
      %v389 = vpop.f32.mrf.mxu0
      %v390 = vadd.f32 %v260, %v389
      %391 = vmatmul.f32.gmra.mxu0 %v276
      %v392 = vpop.f32.mrf.mxu0
      %v393 = vadd.f32 %v260, %v392
      %394 = vmatmul.f32.gmra.mxu0 %v279
      %v395 = vpop.f32.mrf.mxu0
      %v396 = vadd.f32 %v260, %v395
      %397 = vmatmul.f32.gmra.mxu0 %v282
      %v398 = vpop.f32.mrf.mxu0
      %v399 = vadd.f32 %v260, %v398
      %400 = vmatmul.f32.gmra.mxu0 %v285
      %v401 = vpop.f32.mrf.mxu0
      %v402 = vadd.f32 %v260, %v401
      %403 = vmatmul.f32.gmra.mxu0 %v288
      %v404 = vpop.f32.mrf.mxu0
      %v405 = vadd.f32 %v260, %v404
      %406 = vmatmul.f32.gmra.mxu0 %v291
      %v407 = vpop.f32.mrf.mxu0
      %v408 = vadd.f32 %v260, %v407
      %409 = vmatmul.f32.gmra.mxu0 %v294
      %v410 = vpop.f32.mrf.mxu0
      %v411 = vadd.f32 %v260, %v410
      %412 = vmatmul.f32.gmra.mxu0 %v297
      %v413 = vpop.f32.mrf.mxu0
      %v414 = vadd.f32 %v260, %v413
      %415 = vmatmul.f32.gmra.mxu0 %v300
      %v416 = vpop.f32.mrf.mxu0
      %v417 = vadd.f32 %v260, %v416
      %418 = vmatmul.f32.gmra.mxu0 %v303
      %v419 = vpop.f32.mrf.mxu0
      %v420 = vadd.f32 %v260, %v419
      %421 = vmatmul.f32.gmra.mxu0 %v306
      %v422 = vpop.f32.mrf.mxu0
      %v423 = vadd.f32 %v260, %v422
      %424 = vmatmul.f32.gmra.mxu0 %v309
      %v425 = vpop.f32.mrf.mxu0
      %v426 = vadd.f32 %v260, %v425
      %427 = vmatmul.f32.gmra.mxu0 %v312
      %v428 = vpop.f32.mrf.mxu0
      %v429 = vadd.f32 %v260, %v428
      %430 = vmatmul.f32.gmra.mxu0 %v315
      %v431 = vpop.f32.mrf.mxu0
      %v432 = vadd.f32 %v260, %v431
      %433 = vmatmul.f32.gmra.mxu0 %v318
      %v434 = vpop.f32.mrf.mxu0
      %v435 = vadd.f32 %v260, %v434
      %436 = vmatmul.f32.gmra.mxu0 %v321
      %v437 = vpop.f32.mrf.mxu0
      %v438 = vadd.f32 %v260, %v437
      %439 = vmatmul.f32.gmra.mxu0 %v324
      %v440 = vpop.f32.mrf.mxu0
      %v441 = vadd.f32 %v260, %v440
      %442 = vmatmul.f32.gmra.mxu0 %v327
      %v443 = vpop.f32.mrf.mxu0
      %v444 = vadd.f32 %v260, %v443
      %445 = vmatmul.f32.gmra.mxu0 %v330
      %v446 = vpop.f32.mrf.mxu0
      %v447 = vadd.f32 %v260, %v446
      %448 = vmatmul.f32.gmra.mxu0 %v333
      %v449 = vpop.f32.mrf.mxu0
      %v450 = vadd.f32 %v260, %v449
      %451 = vmatmul.f32.gmra.mxu0 %v336
      %v452 = vpop.f32.mrf.mxu0
      %v453 = vadd.f32 %v260, %v452
      %454 = vmatmul.f32.gmra.mxu0 %v339
      %v455 = vpop.f32.mrf.mxu0
      %v456 = vadd.f32 %v260, %v455
      %457 = vmatmul.f32.gmra.mxu0 %v342
      %v458 = vpop.f32.mrf.mxu0
      %v459 = vadd.f32 %v260, %v458
      %460 = vmatmul.f32.gmra.mxu0 %v345
      %v461 = vpop.f32.mrf.mxu0
      %v462 = vadd.f32 %v260, %v461
      %463 = vmatmul.f32.gmra.mxu0 %v348
      %v464 = vpop.f32.mrf.mxu0
      %v465 = vadd.f32 %v260, %v464
      %466 = vmatmul.f32.gmra.mxu0 %v351
      %v467 = vpop.f32.mrf.mxu0
      %v468 = vadd.f32 %v260, %v467
      %469 = vmatmul.f32.gmra.mxu0 %v354
      %v470 = vpop.f32.mrf.mxu0
      %v471 = vadd.f32 %v260, %v470
      %472 = vmatmul.f32.gmra.mxu0 %v357
      %v473 = vpop.f32.mrf.mxu0
      %v474 = vadd.f32 %v260, %v473
      %475 = vdwg.mxu0
      %v476 = vmax.f32 %v381, 0.0
      %v477 = vmax.f32 %v384, 0.0
      %v478 = vmax.f32 %v387, 0.0
      %v479 = vmax.f32 %v390, 0.0
      %v480 = vmax.f32 %v393, 0.0
      %v481 = vmax.f32 %v396, 0.0
      %v482 = vmax.f32 %v399, 0.0
      %v483 = vmax.f32 %v402, 0.0
      %v484 = vmax.f32 %v405, 0.0
      %v485 = vmax.f32 %v408, 0.0
      %v486 = vmax.f32 %v411, 0.0
      %v487 = vmax.f32 %v414, 0.0
      %v488 = vmax.f32 %v417, 0.0
      %v489 = vmax.f32 %v420, 0.0
      %v490 = vmax.f32 %v423, 0.0
      %v491 = vmax.f32 %v426, 0.0
      %v492 = vmax.f32 %v429, 0.0
      %v493 = vmax.f32 %v432, 0.0
      %v494 = vmax.f32 %v435, 0.0
      %v495 = vmax.f32 %v438, 0.0
      %v496 = vmax.f32 %v441, 0.0
      %v497 = vmax.f32 %v444, 0.0
      %v498 = vmax.f32 %v447, 0.0
      %v499 = vmax.f32 %v450, 0.0
      %v500 = vmax.f32 %v453, 0.0
      %v501 = vmax.f32 %v456, 0.0
      %v502 = vmax.f32 %v459, 0.0
      %v503 = vmax.f32 %v462, 0.0
      %v504 = vmax.f32 %v465, 0.0
      %v505 = vmax.f32 %v468, 0.0
      %v506 = vmax.f32 %v471, 0.0
      %v507 = vmax.f32 %v474, 0.0
      %v508 = vand.u32 2147483647, %v381
      %v509 = vand.u32 2147483647, %v384
      %v510 = vand.u32 2147483647, %v387
      %v511 = vand.u32 2147483647, %v390
      %v512 = vand.u32 2147483647, %v393
      %v513 = vand.u32 2147483647, %v396
      %v514 = vand.u32 2147483647, %v399
      %v515 = vand.u32 2147483647, %v402
      %v516 = vand.u32 2147483647, %v405
      %v517 = vand.u32 2147483647, %v408
      %v518 = vand.u32 2147483647, %v411
      %v519 = vand.u32 2147483647, %v414
      %v520 = vand.u32 2147483647, %v417
      %v521 = vand.u32 2147483647, %v420
      %v522 = vand.u32 2147483647, %v423
      %v523 = vand.u32 2147483647, %v426
      %v524 = vand.u32 2147483647, %v429
      %v525 = vand.u32 2147483647, %v432
      %v526 = vand.u32 2147483647, %v435
      %v527 = vand.u32 2147483647, %v438
      %v528 = vand.u32 2147483647, %v441
      %v529 = vand.u32 2147483647, %v444
      %v530 = vand.u32 2147483647, %v447
      %v531 = vand.u32 2147483647, %v450
      %v532 = vand.u32 2147483647, %v453
      %v533 = vand.u32 2147483647, %v456
      %v534 = vand.u32 2147483647, %v459
      %v535 = vand.u32 2147483647, %v462
      %v536 = vand.u32 2147483647, %v465
      %v537 = vand.u32 2147483647, %v468
      %v538 = vand.u32 2147483647, %v471
      %v539 = vand.u32 2147483647, %v474
      %v540 = vsub.f32 0.0, %v508
      %v541 = vsub.f32 0.0, %v509
      %v542 = vsub.f32 0.0, %v510
      %v543 = vsub.f32 0.0, %v511
      %v544 = vsub.f32 0.0, %v512
      %v545 = vsub.f32 0.0, %v513
      %v546 = vsub.f32 0.0, %v514
      %v547 = vsub.f32 0.0, %v515
      %v548 = vsub.f32 0.0, %v516
      %v549 = vsub.f32 0.0, %v517
      %v550 = vsub.f32 0.0, %v518
      %v551 = vsub.f32 0.0, %v519
      %v552 = vsub.f32 0.0, %v520
      %v553 = vsub.f32 0.0, %v521
      %v554 = vsub.f32 0.0, %v522
      %v555 = vsub.f32 0.0, %v523
      %v556 = vsub.f32 0.0, %v524
      %v557 = vsub.f32 0.0, %v525
      %v558 = vsub.f32 0.0, %v526
      %v559 = vsub.f32 0.0, %v527
      %v560 = vsub.f32 0.0, %v528
      %v561 = vsub.f32 0.0, %v529
      %v562 = vsub.f32 0.0, %v530
      %v563 = vsub.f32 0.0, %v531
      %v564 = vsub.f32 0.0, %v532
      %v565 = vsub.f32 0.0, %v533
      %v566 = vsub.f32 0.0, %v534
      %v567 = vsub.f32 0.0, %v535
      %v568 = vsub.f32 0.0, %v536
      %v569 = vsub.f32 0.0, %v537
      %v570 = vsub.f32 0.0, %v538
      %v571 = vsub.f32 0.0, %v539
      %v572 = vmul.f32 %v540, 1.442695
      %v573 = vpow.pop %v572
      %v574 = vmul.f32 %v541, 1.442695
      %v575 = vpow.pop %v574
      %v576 = vmul.f32 %v542, 1.442695
      %v577 = vpow.pop %v576
      %v578 = vmul.f32 %v543, 1.442695
      %v579 = vpow.pop %v578
      %v580 = vmul.f32 %v544, 1.442695
      %v581 = vpow.pop %v580
      %v582 = vmul.f32 %v545, 1.442695
      %v583 = vpow.pop %v582
      %v584 = vmul.f32 %v546, 1.442695
      %v585 = vpow.pop %v584
      %v586 = vmul.f32 %v547, 1.442695
      %v587 = vpow.pop %v586
      %v588 = vmul.f32 %v548, 1.442695
      %v589 = vpow.pop %v588
      %v590 = vmul.f32 %v549, 1.442695
      %v591 = vpow.pop %v590
      %v592 = vmul.f32 %v550, 1.442695
      %v593 = vpow.pop %v592
      %v594 = vmul.f32 %v551, 1.442695
      %v595 = vpow.pop %v594
      %v596 = vmul.f32 %v552, 1.442695
      %v597 = vpow.pop %v596
      %v598 = vmul.f32 %v553, 1.442695
      %v599 = vpow.pop %v598
      %v600 = vmul.f32 %v554, 1.442695
      %v601 = vpow.pop %v600
      %v602 = vmul.f32 %v555, 1.442695
      %v603 = vpow.pop %v602
      %v604 = vmul.f32 %v556, 1.442695
      %v605 = vpow.pop %v604
      %v606 = vmul.f32 %v557, 1.442695
      %v607 = vpow.pop %v606
      %v608 = vmul.f32 %v558, 1.442695
      %v609 = vpow.pop %v608
      %v610 = vmul.f32 %v559, 1.442695
      %v611 = vpow.pop %v610
      %v612 = vmul.f32 %v560, 1.442695
      %v613 = vpow.pop %v612
      %v614 = vmul.f32 %v561, 1.442695
      %v615 = vpow.pop %v614
      %v616 = vmul.f32 %v562, 1.442695
      %v617 = vpow.pop %v616
      %v618 = vmul.f32 %v563, 1.442695
      %v619 = vpow.pop %v618
      %v620 = vmul.f32 %v564, 1.442695
      %v621 = vpow.pop %v620
      %v622 = vmul.f32 %v565, 1.442695
      %v623 = vpow.pop %v622
      %v624 = vmul.f32 %v566, 1.442695
      %v625 = vpow.pop %v624
      %v626 = vmul.f32 %v567, 1.442695
      %v627 = vpow.pop %v626
      %v628 = vmul.f32 %v568, 1.442695
      %v629 = vpow.pop %v628
      %v630 = vmul.f32 %v569, 1.442695
      %v631 = vpow.pop %v630
      %v632 = vmul.f32 %v570, 1.442695
      %v633 = vpow.pop %v632
      %v634 = vmul.f32 %v571, 1.442695
      %v635 = vpow.pop %v634
      %v636 = vadd.f32 %v573, 1.0
      %v637 = vadd.f32 %v575, 1.0
      %v638 = vadd.f32 %v577, 1.0
      %v639 = vadd.f32 %v579, 1.0
      %v640 = vadd.f32 %v581, 1.0
      %v641 = vadd.f32 %v583, 1.0
      %v642 = vadd.f32 %v585, 1.0
      %v643 = vadd.f32 %v587, 1.0
      %v644 = vadd.f32 %v589, 1.0
      %v645 = vadd.f32 %v591, 1.0
      %v646 = vadd.f32 %v593, 1.0
      %v647 = vadd.f32 %v595, 1.0
      %v648 = vadd.f32 %v597, 1.0
      %v649 = vadd.f32 %v599, 1.0
      %v650 = vadd.f32 %v601, 1.0
      %v651 = vadd.f32 %v603, 1.0
      %v652 = vadd.f32 %v605, 1.0
      %v653 = vadd.f32 %v607, 1.0
      %v654 = vadd.f32 %v609, 1.0
      %v655 = vadd.f32 %v611, 1.0
      %v656 = vadd.f32 %v613, 1.0
      %v657 = vadd.f32 %v615, 1.0
      %v658 = vadd.f32 %v617, 1.0
      %v659 = vadd.f32 %v619, 1.0
      %v660 = vadd.f32 %v621, 1.0
      %v661 = vadd.f32 %v623, 1.0
      %v662 = vadd.f32 %v625, 1.0
      %v663 = vadd.f32 %v627, 1.0
      %v664 = vadd.f32 %v629, 1.0
      %v665 = vadd.f32 %v631, 1.0
      %v666 = vadd.f32 %v633, 1.0
      %v667 = vadd.f32 %v635, 1.0
      %v668 = vlog2.pop %v636
      %v669 = vmul.f32 %v668, 0.6931472
      %v670 = vlog2.pop %v637
      %v671 = vmul.f32 %v670, 0.6931472
      %v672 = vlog2.pop %v638
      %v673 = vmul.f32 %v672, 0.6931472
      %v674 = vlog2.pop %v639
      %v675 = vmul.f32 %v674, 0.6931472
      %v676 = vlog2.pop %v640
      %v677 = vmul.f32 %v676, 0.6931472
      %v678 = vlog2.pop %v641
      %v679 = vmul.f32 %v678, 0.6931472
      %v680 = vlog2.pop %v642
      %v681 = vmul.f32 %v680, 0.6931472
      %v682 = vlog2.pop %v643
      %v683 = vmul.f32 %v682, 0.6931472
      %v684 = vlog2.pop %v644
      %v685 = vmul.f32 %v684, 0.6931472
      %v686 = vlog2.pop %v645
      %v687 = vmul.f32 %v686, 0.6931472
      %v688 = vlog2.pop %v646
      %v689 = vmul.f32 %v688, 0.6931472
      %v690 = vlog2.pop %v647
      %v691 = vmul.f32 %v690, 0.6931472
      %v692 = vlog2.pop %v648
      %v693 = vmul.f32 %v692, 0.6931472
      %v694 = vlog2.pop %v649
      %v695 = vmul.f32 %v694, 0.6931472
      %v696 = vlog2.pop %v650
      %v697 = vmul.f32 %v696, 0.6931472
      %v698 = vlog2.pop %v651
      %v699 = vmul.f32 %v698, 0.6931472
      %v700 = vlog2.pop %v652
      %v701 = vmul.f32 %v700, 0.6931472
      %v702 = vlog2.pop %v653
      %v703 = vmul.f32 %v702, 0.6931472
      %v704 = vlog2.pop %v654
      %v705 = vmul.f32 %v704, 0.6931472
      %v706 = vlog2.pop %v655
      %v707 = vmul.f32 %v706, 0.6931472
      %v708 = vlog2.pop %v656
      %v709 = vmul.f32 %v708, 0.6931472
      %v710 = vlog2.pop %v657
      %v711 = vmul.f32 %v710, 0.6931472
      %v712 = vlog2.pop %v658
      %v713 = vmul.f32 %v712, 0.6931472
      %v714 = vlog2.pop %v659
      %v715 = vmul.f32 %v714, 0.6931472
      %v716 = vlog2.pop %v660
      %v717 = vmul.f32 %v716, 0.6931472
      %v718 = vlog2.pop %v661
      %v719 = vmul.f32 %v718, 0.6931472
      %v720 = vlog2.pop %v662
      %v721 = vmul.f32 %v720, 0.6931472
      %v722 = vlog2.pop %v663
      %v723 = vmul.f32 %v722, 0.6931472
      %v724 = vlog2.pop %v664
      %v725 = vmul.f32 %v724, 0.6931472
      %v726 = vlog2.pop %v665
      %v727 = vmul.f32 %v726, 0.6931472
      %v728 = vlog2.pop %v666
      %v729 = vmul.f32 %v728, 0.6931472
      %v730 = vlog2.pop %v667
      %v731 = vmul.f32 %v730, 0.6931472
      %v732 = vadd.f32 %v476, %v669
      %v733 = vadd.f32 %v477, %v671
      %v734 = vadd.f32 %v478, %v673
      %v735 = vadd.f32 %v479, %v675
      %v736 = vadd.f32 %v480, %v677
      %v737 = vadd.f32 %v481, %v679
      %v738 = vadd.f32 %v482, %v681
      %v739 = vadd.f32 %v483, %v683
      %v740 = vadd.f32 %v484, %v685
      %v741 = vadd.f32 %v485, %v687
      %v742 = vadd.f32 %v486, %v689
      %v743 = vadd.f32 %v487, %v691
      %v744 = vadd.f32 %v488, %v693
      %v745 = vadd.f32 %v489, %v695
      %v746 = vadd.f32 %v490, %v697
      %v747 = vadd.f32 %v491, %v699
      %v748 = vadd.f32 %v492, %v701
      %v749 = vadd.f32 %v493, %v703
      %v750 = vadd.f32 %v494, %v705
      %v751 = vadd.f32 %v495, %v707
      %v752 = vadd.f32 %v496, %v709
      %v753 = vadd.f32 %v497, %v711
      %v754 = vadd.f32 %v498, %v713
      %v755 = vadd.f32 %v499, %v715
      %v756 = vadd.f32 %v500, %v717
      %v757 = vadd.f32 %v501, %v719
      %v758 = vadd.f32 %v502, %v721
      %v759 = vadd.f32 %v503, %v723
      %v760 = vadd.f32 %v504, %v725
      %v761 = vadd.f32 %v505, %v727
      %v762 = vadd.f32 %v506, %v729
      %v763 = vadd.f32 %v507, %v731
      %v764 = vtanh.pop %v732
      %v765 = vtanh.pop %v733
      %v766 = vtanh.pop %v734
      %v767 = vtanh.pop %v735
      %v768 = vtanh.pop %v736
      %v769 = vtanh.pop %v737
      %v770 = vtanh.pop %v738
      %v771 = vtanh.pop %v739
      %v772 = vtanh.pop %v740
      %v773 = vtanh.pop %v741
      %v774 = vtanh.pop %v742
      %v775 = vtanh.pop %v743
      %v776 = vtanh.pop %v744
      %v777 = vtanh.pop %v745
      %v778 = vtanh.pop %v746
      %v779 = vtanh.pop %v747
      %v780 = vtanh.pop %v748
      %v781 = vtanh.pop %v749
      %v782 = vtanh.pop %v750
      %v783 = vtanh.pop %v751
      %v784 = vtanh.pop %v752
      %v785 = vtanh.pop %v753
      %v786 = vtanh.pop %v754
      %v787 = vtanh.pop %v755
      %v788 = vtanh.pop %v756
      %v789 = vtanh.pop %v757
      %v790 = vtanh.pop %v758
      %v791 = vtanh.pop %v759
      %v792 = vtanh.pop %v760
      %v793 = vtanh.pop %v761
      %v794 = vtanh.pop %v762
      %v795 = vtanh.pop %v763
      %v796 = vmul.f32 %v381, %v764
      %v797 = vmul.f32 %v384, %v765
      %v798 = vmul.f32 %v387, %v766
      %v799 = vmul.f32 %v390, %v767
      %v800 = vmul.f32 %v393, %v768
      %v801 = vmul.f32 %v396, %v769
      %v802 = vmul.f32 %v399, %v770
      %v803 = vmul.f32 %v402, %v771
      %v804 = vmul.f32 %v405, %v772
      %v805 = vmul.f32 %v408, %v773
      %v806 = vmul.f32 %v411, %v774
      %v807 = vmul.f32 %v414, %v775
      %v808 = vmul.f32 %v417, %v776
      %v809 = vmul.f32 %v420, %v777
      %v810 = vmul.f32 %v423, %v778
      %v811 = vmul.f32 %v426, %v779
      %v812 = vmul.f32 %v429, %v780
      %v813 = vmul.f32 %v432, %v781
      %v814 = vmul.f32 %v435, %v782
      %v815 = vmul.f32 %v438, %v783
      %v816 = vmul.f32 %v441, %v784
      %v817 = vmul.f32 %v444, %v785
      %v818 = vmul.f32 %v447, %v786
      %v819 = vmul.f32 %v450, %v787
      %v820 = vmul.f32 %v453, %v788
      %v821 = vmul.f32 %v456, %v789
      %v822 = vmul.f32 %v459, %v790
      %v823 = vmul.f32 %v462, %v791
      %v824 = vmul.f32 %v465, %v792
      %v825 = vmul.f32 %v468, %v793
      %v826 = vmul.f32 %v471, %v794
      %v827 = vmul.f32 %v474, %v795
      %s828 = scalar_lea.vmem [#allocation2], 24
      %vm829 = vcmask 15360
      %830 = vst.msk [vmem:[%s828 + $0x1] sm:$0xff] %vm829, %v796
      %831 = vst.msk [vmem:[%s828 + $0x9] sm:$0xff] %vm829, %v797
      %832 = vst.msk [vmem:[%s828 + $0x19] sm:$0xff] %vm829, %v798
      %833 = vst.msk [vmem:[%s828 + $0x21] sm:$0xff] %vm829, %v799
      %834 = vst.msk [vmem:[%s828 + $0x31] sm:$0xff] %vm829, %v800
      %835 = vst.msk [vmem:[%s828 + $0x39] sm:$0xff] %vm829, %v801
      %836 = vst.msk [vmem:[%s828 + $0x49] sm:$0xff] %vm829, %v802
      %837 = vst.msk [vmem:[%s828 + $0x51] sm:$0xff] %vm829, %v803
      %838 = vst.msk [vmem:[%s828 + $0x61] sm:$0xff] %vm829, %v804
      %839 = vst.msk [vmem:[%s828 + $0x69] sm:$0xff] %vm829, %v805
      %840 = vst.msk [vmem:[%s828 + $0x79] sm:$0xff] %vm829, %v806
      %841 = vst.msk [vmem:[%s828 + $0x81] sm:$0xff] %vm829, %v807
      %842 = vst.msk [vmem:[%s828 + $0x91] sm:$0xff] %vm829, %v808
      %843 = vst.msk [vmem:[%s828 + $0x99] sm:$0xff] %vm829, %v809
      %844 = vst.msk [vmem:[%s828 + $0xa9] sm:$0xff] %vm829, %v810
      %845 = vst.msk [vmem:[%s828 + $0xb1] sm:$0xff] %vm829, %v811
      %846 = vst.msk [vmem:[%s828 + $0xc1] sm:$0xff] %vm829, %v812
      %847 = vst.msk [vmem:[%s828 + $0xc9] sm:$0xff] %vm829, %v813
      %848 = vst.msk [vmem:[%s828 + $0xd9] sm:$0xff] %vm829, %v814
      %849 = vst.msk [vmem:[%s828 + $0xe1] sm:$0xff] %vm829, %v815
      %850 = vst.msk [vmem:[%s828 + $0xf1] sm:$0xff] %vm829, %v816
      %851 = vst.msk [vmem:[%s828 + $0xf9] sm:$0xff] %vm829, %v817
      %852 = vst.msk [vmem:[%s828 + $0x109] sm:$0xff] %vm829, %v818
      %853 = vst.msk [vmem:[%s828 + $0x111] sm:$0xff] %vm829, %v819
      %854 = vst.msk [vmem:[%s828 + $0x121] sm:$0xff] %vm829, %v820
      %855 = vst.msk [vmem:[%s828 + $0x129] sm:$0xff] %vm829, %v821
      %856 = vst.msk [vmem:[%s828 + $0x139] sm:$0xff] %vm829, %v822
      %857 = vst.msk [vmem:[%s828 + $0x141] sm:$0xff] %vm829, %v823
      %858 = vst.msk [vmem:[%s828 + $0x151] sm:$0xff] %vm829, %v824
      %859 = vst.msk [vmem:[%s828 + $0x159] sm:$0xff] %vm829, %v825
      %860 = vst.msk [vmem:[%s828 + $0x169] sm:$0xff] %vm829, %v826
      %861 = vst.msk [vmem:[%s828 + $0x171] sm:$0xff] %vm829, %v827
      %862 = vst.msk [vmem:[#allocation2 + $0x1] sm:$0xff] %vm829, %v798
      %863 = vst.msk [vmem:[#allocation2 + $0x9] sm:$0xff] %vm829, %v799
      %s864 = scalar_lea.vmem [#allocation2], 408
      %865 = vst.msk [vmem:[%s864 + $0x1] sm:$0xff] %vm829, %v824
      %866 = vst.msk [vmem:[%s864 + $0x9] sm:$0xff] %vm829, %v825
      %v867 = vld [vmem:[#allocation2 + $0x2] sm:$0x1]
      %v868 = vld [vmem:[#allocation2 + $0x1a] sm:$0x1]
      %v869 = vld [vmem:[#allocation2 + $0x32] sm:$0x1]
      %v870 = vld [vmem:[#allocation2 + $0x4a] sm:$0x1]
      %v871 = vld [vmem:[#allocation2 + $0x62] sm:$0x1]
      %v872 = vld [vmem:[#allocation2 + $0x7a] sm:$0x1]
      %v873 = vld [vmem:[#allocation2 + $0x92] sm:$0x1]
      %v874 = vld [vmem:[#allocation2 + $0xaa] sm:$0x1]
      %v875 = vld [vmem:[#allocation2 + $0xc2] sm:$0x1]
      %v876 = vld [vmem:[#allocation2 + $0xda] sm:$0x1]
      %v877 = vld [vmem:[#allocation2 + $0xf2] sm:$0x1]
      %v878 = vld [vmem:[#allocation2 + $0x10a] sm:$0x1]
      %v879 = vld [vmem:[#allocation2 + $0x122] sm:$0x1]
      %v880 = vld [vmem:[#allocation2 + $0x13a] sm:$0x1]
      %v881 = vld [vmem:[#allocation2 + $0x152] sm:$0x1]
      %v882 = vld [vmem:[#allocation2 + $0x16a] sm:$0x1]
      %v883 = vld [vmem:[#allocation2 + $0x182] sm:$0x1]
      %v884 = vld [vmem:[#allocation2 + $0x19a] sm:$0x1]
      %vm885 = vcmask 8192
      %886 = vst.msk [vmem:[#allocation2] sm:$0x1] %vm885, %v867
      %887 = vst.msk [vmem:[#allocation2 + $0x18] sm:$0x1] %vm885, %v868
      %888 = vst.msk [vmem:[#allocation2 + $0x30] sm:$0x1] %vm885, %v869
      %889 = vst.msk [vmem:[#allocation2 + $0x48] sm:$0x1] %vm885, %v870
      %890 = vst.msk [vmem:[#allocation2 + $0x60] sm:$0x1] %vm885, %v871
      %891 = vst.msk [vmem:[#allocation2 + $0x78] sm:$0x1] %vm885, %v872
      %892 = vst.msk [vmem:[#allocation2 + $0x90] sm:$0x1] %vm885, %v873
      %893 = vst.msk [vmem:[#allocation2 + $0xa8] sm:$0x1] %vm885, %v874
      %894 = vst.msk [vmem:[#allocation2 + $0xc0] sm:$0x1] %vm885, %v875
      %895 = vst.msk [vmem:[#allocation2 + $0xd8] sm:$0x1] %vm885, %v876
      %896 = vst.msk [vmem:[#allocation2 + $0xf0] sm:$0x1] %vm885, %v877
      %897 = vst.msk [vmem:[#allocation2 + $0x108] sm:$0x1] %vm885, %v878
      %898 = vst.msk [vmem:[#allocation2 + $0x120] sm:$0x1] %vm885, %v879
      %899 = vst.msk [vmem:[#allocation2 + $0x138] sm:$0x1] %vm885, %v880
      %900 = vst.msk [vmem:[#allocation2 + $0x150] sm:$0x1] %vm885, %v881
      %901 = vst.msk [vmem:[#allocation2 + $0x168] sm:$0x1] %vm885, %v882
      %902 = vst.msk [vmem:[#allocation2 + $0x180] sm:$0x1] %vm885, %v883
      %903 = vst.msk [vmem:[#allocation2 + $0x198] sm:$0x1] %vm885, %v884
      %v904 = vld [vmem:[#allocation2 + $0xf] sm:$0x1]
      %v905 = vld [vmem:[#allocation2 + $0x27] sm:$0x1]
      %v906 = vld [vmem:[#allocation2 + $0x3f] sm:$0x1]
      %v907 = vld [vmem:[#allocation2 + $0x57] sm:$0x1]
      %v908 = vld [vmem:[#allocation2 + $0x6f] sm:$0x1]
      %v909 = vld [vmem:[#allocation2 + $0x87] sm:$0x1]
      %v910 = vld [vmem:[#allocation2 + $0x9f] sm:$0x1]
      %v911 = vld [vmem:[#allocation2 + $0xb7] sm:$0x1]
      %v912 = vld [vmem:[#allocation2 + $0xcf] sm:$0x1]
      %v913 = vld [vmem:[#allocation2 + $0xe7] sm:$0x1]
      %v914 = vld [vmem:[#allocation2 + $0xff] sm:$0x1]
      %v915 = vld [vmem:[#allocation2 + $0x117] sm:$0x1]
      %v916 = vld [vmem:[#allocation2 + $0x12f] sm:$0x1]
      %v917 = vld [vmem:[#allocation2 + $0x147] sm:$0x1]
      %v918 = vld [vmem:[#allocation2 + $0x15f] sm:$0x1]
      %v919 = vld [vmem:[#allocation2 + $0x177] sm:$0x1]
      %v920 = vld [vmem:[#allocation2 + $0x18f] sm:$0x1]
      %v921 = vld [vmem:[#allocation2 + $0x1a7] sm:$0x1]
      %922 = vst.msk [vmem:[#allocation2 + $0x11] sm:$0x1] %vm885, %v904
      %923 = vst.msk [vmem:[#allocation2 + $0x29] sm:$0x1] %vm885, %v905
      %924 = vst.msk [vmem:[#allocation2 + $0x41] sm:$0x1] %vm885, %v906
      %925 = vst.msk [vmem:[#allocation2 + $0x59] sm:$0x1] %vm885, %v907
      %926 = vst.msk [vmem:[#allocation2 + $0x71] sm:$0x1] %vm885, %v908
      %927 = vst.msk [vmem:[#allocation2 + $0x89] sm:$0x1] %vm885, %v909
      %928 = vst.msk [vmem:[#allocation2 + $0xa1] sm:$0x1] %vm885, %v910
      %929 = vst.msk [vmem:[#allocation2 + $0xb9] sm:$0x1] %vm885, %v911
      %930 = vst.msk [vmem:[#allocation2 + $0xd1] sm:$0x1] %vm885, %v912
      %931 = vst.msk [vmem:[#allocation2 + $0xe9] sm:$0x1] %vm885, %v913
      %932 = vst.msk [vmem:[#allocation2 + $0x101] sm:$0x1] %vm885, %v914
      %933 = vst.msk [vmem:[#allocation2 + $0x119] sm:$0x1] %vm885, %v915
      %934 = vst.msk [vmem:[#allocation2 + $0x131] sm:$0x1] %vm885, %v916
      %935 = vst.msk [vmem:[#allocation2 + $0x149] sm:$0x1] %vm885, %v917
      %936 = vst.msk [vmem:[#allocation2 + $0x161] sm:$0x1] %vm885, %v918
      %937 = vst.msk [vmem:[#allocation2 + $0x179] sm:$0x1] %vm885, %v919
      %938 = vst.msk [vmem:[#allocation2 + $0x191] sm:$0x1] %vm885, %v920
      %939 = vst.msk [vmem:[#allocation2 + $0x1a9] sm:$0x1] %vm885, %v921
      %v940 = vld [vmem:[%s4] sm:$0x1]
      %v942 = vperm.slane %v940, 0
      %v944 = vld [vmem:[#allocation2] sm:$0xff]
      %v945 = vld [vmem:[#allocation2 + $0x8] sm:$0xff]
      %v946 = vld [vmem:[#allocation2 + $0x18] sm:$0xff]
      %v947 = vld [vmem:[#allocation2 + $0x20] sm:$0xff]
      %v948 = vld [vmem:[#allocation2 + $0x30] sm:$0xff]
      %v949 = vld [vmem:[#allocation2 + $0x38] sm:$0xff]
      %v950 = vld [vmem:[#allocation2 + $0x48] sm:$0xff]
      %v951 = vld [vmem:[#allocation2 + $0x50] sm:$0xff]
      %v952 = vld [vmem:[#allocation2 + $0x60] sm:$0xff]
      %v953 = vld [vmem:[#allocation2 + $0x68] sm:$0xff]
      %v954 = vld [vmem:[#allocation2 + $0x78] sm:$0xff]
      %v955 = vld [vmem:[#allocation2 + $0x80] sm:$0xff]
      %v956 = vld [vmem:[#allocation2 + $0x90] sm:$0xff]
      %v957 = vld [vmem:[#allocation2 + $0x98] sm:$0xff]
      %v958 = vld [vmem:[#allocation2 + $0xa8] sm:$0xff]
      %v959 = vld [vmem:[#allocation2 + $0xb0] sm:$0xff]
      %v960 = vld [vmem:[#allocation2 + $0xc0] sm:$0xff]
      %v961 = vld [vmem:[#allocation2 + $0xc8] sm:$0xff]
      %v962 = vld [vmem:[#allocation2 + $0xd8] sm:$0xff]
      %v963 = vld [vmem:[#allocation2 + $0xe0] sm:$0xff]
      %v964 = vld [vmem:[#allocation2 + $0xf0] sm:$0xff]
      %v965 = vld [vmem:[#allocation2 + $0xf8] sm:$0xff]
      %v966 = vld [vmem:[#allocation2 + $0x108] sm:$0xff]
      %v967 = vld [vmem:[#allocation2 + $0x110] sm:$0xff]
      %v968 = vld [vmem:[#allocation2 + $0x120] sm:$0xff]
      %v969 = vld [vmem:[#allocation2 + $0x128] sm:$0xff]
      %v970 = vld [vmem:[#allocation2 + $0x138] sm:$0xff]
      %v971 = vld [vmem:[#allocation2 + $0x140] sm:$0xff]
      %v972 = vld [vmem:[#allocation2 + $0x150] sm:$0xff]
      %v973 = vld [vmem:[#allocation2 + $0x158] sm:$0xff]
      %v974 = vld [vmem:[#allocation2 + $0x168] sm:$0xff]
      %v975 = vld [vmem:[#allocation2 + $0x170] sm:$0xff]
      %v976 = vld [vmem:[%s3] sm:$0x3]
      %v978 = vsel %vm829, %v944, 0
      %v981 = vsel %vm829, %v945, 0
      %v984 = vsel %vm829, %v946, 0
      %v987 = vsel %vm829, %v947, 0
      %v990 = vsel %vm829, %v948, 0
      %v993 = vsel %vm829, %v949, 0
      %v996 = vsel %vm829, %v950, 0
      %v999 = vsel %vm829, %v951, 0
      %v1002 = vsel %vm829, %v952, 0
      %v1005 = vsel %vm829, %v953, 0
      %v1008 = vsel %vm829, %v954, 0
      %v1011 = vsel %vm829, %v955, 0
      %v1014 = vsel %vm829, %v956, 0
      %v1017 = vsel %vm829, %v957, 0
      %v1020 = vsel %vm829, %v958, 0
      %v1023 = vsel %vm829, %v959, 0
      %v1026 = vsel %vm829, %v960, 0
      %v1029 = vsel %vm829, %v961, 0
      %v1032 = vsel %vm829, %v962, 0
      %v1035 = vsel %vm829, %v963, 0
      %v1038 = vsel %vm829, %v964, 0
      %v1041 = vsel %vm829, %v965, 0
      %v1044 = vsel %vm829, %v966, 0
      %v1047 = vsel %vm829, %v967, 0
      %v1050 = vsel %vm829, %v968, 0
      %v1053 = vsel %vm829, %v969, 0
      %v1056 = vsel %vm829, %v970, 0
      %v1059 = vsel %vm829, %v971, 0
      %v1062 = vsel %vm829, %v972, 0
      %v1065 = vsel %vm829, %v973, 0
      %v1068 = vsel %vm829, %v974, 0
      %v1071 = vsel %vm829, %v975, 0
      %vm1073 = vcmask 1041408
      %v1075 = vsel %vm1073, %v976, 0
      %1077 = vmatpush.msra.mxu0 0.0
      %1078 = vmatpush.msra.mxu0 0.0
      %1079 = vmatpush.msra.mxu0 0.0
      %1080 = vmatpush.msra.mxu0 0.0
      %1081 = vmatpush.msra.mxu0 0.0
      %1082 = vmatpush.msra.mxu0 0.0
      %1083 = vmatpush.msra.mxu0 0.0
      %1084 = vmatpush.msra.mxu0 0.0
      %1085 = vmatpush.msra.mxu0 0.0
      %1086 = vmatpush.msra.mxu0 0.0
      %1087 = vmatpush.msra.mxu0 0.0
      %1088 = vmatpush.msra.mxu0 0.0
      %1089 = vmatpush.msra.mxu0 0.0
      %1090 = vmatpush.msra.mxu0 0.0
      %1091 = vmatpush.msra.mxu0 0.0
      %1092 = vmatpush.msra.mxu0 %v1075
      %1093 = vmatmul.f32.gmra.mxu0 %v978
      %v1094 = vpop.f32.mrf.mxu0
      %v1095 = vadd.f32 0.0, %v1094
      %1096 = vmatmul.f32.gmra.mxu0 %v981
      %v1097 = vpop.f32.mrf.mxu0
      %v1098 = vadd.f32 0.0, %v1097
      %1099 = vmatmul.f32.gmra.mxu0 %v984
      %v1100 = vpop.f32.mrf.mxu0
      %v1101 = vadd.f32 0.0, %v1100
      %1102 = vmatmul.f32.gmra.mxu0 %v987
      %v1103 = vpop.f32.mrf.mxu0
      %v1104 = vadd.f32 0.0, %v1103
      %1105 = vmatmul.f32.gmra.mxu0 %v990
      %v1106 = vpop.f32.mrf.mxu0
      %v1107 = vadd.f32 0.0, %v1106
      %1108 = vmatmul.f32.gmra.mxu0 %v993
      %v1109 = vpop.f32.mrf.mxu0
      %v1110 = vadd.f32 0.0, %v1109
      %1111 = vmatmul.f32.gmra.mxu0 %v996
      %v1112 = vpop.f32.mrf.mxu0
      %v1113 = vadd.f32 0.0, %v1112
      %1114 = vmatmul.f32.gmra.mxu0 %v999
      %v1115 = vpop.f32.mrf.mxu0
      %v1116 = vadd.f32 0.0, %v1115
      %1117 = vmatmul.f32.gmra.mxu0 %v1002
      %v1118 = vpop.f32.mrf.mxu0
      %v1119 = vadd.f32 0.0, %v1118
      %1120 = vmatmul.f32.gmra.mxu0 %v1005
      %v1121 = vpop.f32.mrf.mxu0
      %v1122 = vadd.f32 0.0, %v1121
      %1123 = vmatmul.f32.gmra.mxu0 %v1008
      %v1124 = vpop.f32.mrf.mxu0
      %v1125 = vadd.f32 0.0, %v1124
      %1126 = vmatmul.f32.gmra.mxu0 %v1011
      %v1127 = vpop.f32.mrf.mxu0
      %v1128 = vadd.f32 0.0, %v1127
      %1129 = vmatmul.f32.gmra.mxu0 %v1014
      %v1130 = vpop.f32.mrf.mxu0
      %v1131 = vadd.f32 0.0, %v1130
      %1132 = vmatmul.f32.gmra.mxu0 %v1017
      %v1133 = vpop.f32.mrf.mxu0
      %v1134 = vadd.f32 0.0, %v1133
      %1135 = vmatmul.f32.gmra.mxu0 %v1020
      %v1136 = vpop.f32.mrf.mxu0
      %v1137 = vadd.f32 0.0, %v1136
      %1138 = vmatmul.f32.gmra.mxu0 %v1023
      %v1139 = vpop.f32.mrf.mxu0
      %v1140 = vadd.f32 0.0, %v1139
      %1141 = vmatmul.f32.gmra.mxu0 %v1026
      %v1142 = vpop.f32.mrf.mxu0
      %v1143 = vadd.f32 0.0, %v1142
      %1144 = vmatmul.f32.gmra.mxu0 %v1029
      %v1145 = vpop.f32.mrf.mxu0
      %v1146 = vadd.f32 0.0, %v1145
      %1147 = vmatmul.f32.gmra.mxu0 %v1032
      %v1148 = vpop.f32.mrf.mxu0
      %v1149 = vadd.f32 0.0, %v1148
      %1150 = vmatmul.f32.gmra.mxu0 %v1035
      %v1151 = vpop.f32.mrf.mxu0
      %v1152 = vadd.f32 0.0, %v1151
      %1153 = vmatmul.f32.gmra.mxu0 %v1038
      %v1154 = vpop.f32.mrf.mxu0
      %v1155 = vadd.f32 0.0, %v1154
      %1156 = vmatmul.f32.gmra.mxu0 %v1041
      %v1157 = vpop.f32.mrf.mxu0
      %v1158 = vadd.f32 0.0, %v1157
      %1159 = vmatmul.f32.gmra.mxu0 %v1044
      %v1160 = vpop.f32.mrf.mxu0
      %v1161 = vadd.f32 0.0, %v1160
      %1162 = vmatmul.f32.gmra.mxu0 %v1047
      %v1163 = vpop.f32.mrf.mxu0
      %v1164 = vadd.f32 0.0, %v1163
      %1165 = vmatmul.f32.gmra.mxu0 %v1050
      %v1166 = vpop.f32.mrf.mxu0
      %v1167 = vadd.f32 0.0, %v1166
      %1168 = vmatmul.f32.gmra.mxu0 %v1053
      %v1169 = vpop.f32.mrf.mxu0
      %v1170 = vadd.f32 0.0, %v1169
      %1171 = vmatmul.f32.gmra.mxu0 %v1056
      %v1172 = vpop.f32.mrf.mxu0
      %v1173 = vadd.f32 0.0, %v1172
      %1174 = vmatmul.f32.gmra.mxu0 %v1059
      %v1175 = vpop.f32.mrf.mxu0
      %v1176 = vadd.f32 0.0, %v1175
      %1177 = vmatmul.f32.gmra.mxu0 %v1062
      %v1178 = vpop.f32.mrf.mxu0
      %v1179 = vadd.f32 0.0, %v1178
      %1180 = vmatmul.f32.gmra.mxu0 %v1065
      %v1181 = vpop.f32.mrf.mxu0
      %v1182 = vadd.f32 0.0, %v1181
      %1183 = vmatmul.f32.gmra.mxu0 %v1068
      %v1184 = vpop.f32.mrf.mxu0
      %v1185 = vadd.f32 0.0, %v1184
      %1186 = vmatmul.f32.gmra.mxu0 %v1071
      %v1187 = vpop.f32.mrf.mxu0
      %v1188 = vadd.f32 0.0, %v1187
      %1189 = vdwg.mxu0
      %v1190 = vadd.f32 %v942, %v1095
      %v1191 = vadd.f32 %v942, %v1098
      %v1192 = vadd.f32 %v942, %v1101
      %v1193 = vadd.f32 %v942, %v1104
      %v1194 = vadd.f32 %v942, %v1107
      %v1195 = vadd.f32 %v942, %v1110
      %v1196 = vadd.f32 %v942, %v1113
      %v1197 = vadd.f32 %v942, %v1116
      %v1198 = vadd.f32 %v942, %v1119
      %v1199 = vadd.f32 %v942, %v1122
      %v1200 = vadd.f32 %v942, %v1125
      %v1201 = vadd.f32 %v942, %v1128
      %v1202 = vadd.f32 %v942, %v1131
      %v1203 = vadd.f32 %v942, %v1134
      %v1204 = vadd.f32 %v942, %v1137
      %v1205 = vadd.f32 %v942, %v1140
      %v1206 = vadd.f32 %v942, %v1143
      %v1207 = vadd.f32 %v942, %v1146
      %v1208 = vadd.f32 %v942, %v1149
      %v1209 = vadd.f32 %v942, %v1152
      %v1210 = vadd.f32 %v942, %v1155
      %v1211 = vadd.f32 %v942, %v1158
      %v1212 = vadd.f32 %v942, %v1161
      %v1213 = vadd.f32 %v942, %v1164
      %v1214 = vadd.f32 %v942, %v1167
      %v1215 = vadd.f32 %v942, %v1170
      %v1216 = vadd.f32 %v942, %v1173
      %v1217 = vadd.f32 %v942, %v1176
      %v1218 = vadd.f32 %v942, %v1179
      %v1219 = vadd.f32 %v942, %v1182
      %v1220 = vadd.f32 %v942, %v1185
      %v1221 = vadd.f32 %v942, %v1188
      %v1222 = vld [vmem:[#allocation2 + $0x1] sm:$0xff]
      %v1223 = vld [vmem:[#allocation2 + $0x9] sm:$0xff]
      %v1224 = vld [vmem:[#allocation2 + $0x19] sm:$0xff]
      %v1225 = vld [vmem:[#allocation2 + $0x21] sm:$0xff]
      %v1226 = vld [vmem:[#allocation2 + $0x31] sm:$0xff]
      %v1227 = vld [vmem:[#allocation2 + $0x39] sm:$0xff]
      %v1228 = vld [vmem:[#allocation2 + $0x49] sm:$0xff]
      %v1229 = vld [vmem:[#allocation2 + $0x51] sm:$0xff]
      %v1230 = vld [vmem:[#allocation2 + $0x61] sm:$0xff]
      %v1231 = vld [vmem:[#allocation2 + $0x69] sm:$0xff]
      %v1232 = vld [vmem:[#allocation2 + $0x79] sm:$0xff]
      %v1233 = vld [vmem:[#allocation2 + $0x81] sm:$0xff]
      %v1234 = vld [vmem:[#allocation2 + $0x91] sm:$0xff]
      %v1235 = vld [vmem:[#allocation2 + $0x99] sm:$0xff]
      %v1236 = vld [vmem:[#allocation2 + $0xa9] sm:$0xff]
      %v1237 = vld [vmem:[#allocation2 + $0xb1] sm:$0xff]
      %v1238 = vld [vmem:[#allocation2 + $0xc1] sm:$0xff]
      %v1239 = vld [vmem:[#allocation2 + $0xc9] sm:$0xff]
      %v1240 = vld [vmem:[#allocation2 + $0xd9] sm:$0xff]
      %v1241 = vld [vmem:[#allocation2 + $0xe1] sm:$0xff]
      %v1242 = vld [vmem:[#allocation2 + $0xf1] sm:$0xff]
      %v1243 = vld [vmem:[#allocation2 + $0xf9] sm:$0xff]
      %v1244 = vld [vmem:[#allocation2 + $0x109] sm:$0xff]
      %v1245 = vld [vmem:[#allocation2 + $0x111] sm:$0xff]
      %v1246 = vld [vmem:[#allocation2 + $0x121] sm:$0xff]
      %v1247 = vld [vmem:[#allocation2 + $0x129] sm:$0xff]
      %v1248 = vld [vmem:[#allocation2 + $0x139] sm:$0xff]
      %v1249 = vld [vmem:[#allocation2 + $0x141] sm:$0xff]
      %v1250 = vld [vmem:[#allocation2 + $0x151] sm:$0xff]
      %v1251 = vld [vmem:[#allocation2 + $0x159] sm:$0xff]
      %v1252 = vld [vmem:[#allocation2 + $0x169] sm:$0xff]
      %v1253 = vld [vmem:[#allocation2 + $0x171] sm:$0xff]
      %s1254 = scalar_lea.vmem %s3, 2
      %v1255 = vld [vmem:[%s1254] sm:$0x3]
      %v1257 = vsel %vm829, %v1222, 0
      %v1260 = vsel %vm829, %v1223, 0
      %v1263 = vsel %vm829, %v1224, 0
      %v1266 = vsel %vm829, %v1225, 0
      %v1269 = vsel %vm829, %v1226, 0
      %v1272 = vsel %vm829, %v1227, 0
      %v1275 = vsel %vm829, %v1228, 0
      %v1278 = vsel %vm829, %v1229, 0
      %v1281 = vsel %vm829, %v1230, 0
      %v1284 = vsel %vm829, %v1231, 0
      %v1287 = vsel %vm829, %v1232, 0
      %v1290 = vsel %vm829, %v1233, 0
      %v1293 = vsel %vm829, %v1234, 0
      %v1296 = vsel %vm829, %v1235, 0
      %v1299 = vsel %vm829, %v1236, 0
      %v1302 = vsel %vm829, %v1237, 0
      %v1305 = vsel %vm829, %v1238, 0
      %v1308 = vsel %vm829, %v1239, 0
      %v1311 = vsel %vm829, %v1240, 0
      %v1314 = vsel %vm829, %v1241, 0
      %v1317 = vsel %vm829, %v1242, 0
      %v1320 = vsel %vm829, %v1243, 0
      %v1323 = vsel %vm829, %v1244, 0
      %v1326 = vsel %vm829, %v1245, 0
      %v1329 = vsel %vm829, %v1246, 0
      %v1332 = vsel %vm829, %v1247, 0
      %v1335 = vsel %vm829, %v1248, 0
      %v1338 = vsel %vm829, %v1249, 0
      %v1341 = vsel %vm829, %v1250, 0
      %v1344 = vsel %vm829, %v1251, 0
      %v1347 = vsel %vm829, %v1252, 0
      %v1350 = vsel %vm829, %v1253, 0
      %v1353 = vsel %vm1073, %v1255, 0
      %1355 = vmatpush.msra.mxu0 0.0
      %1356 = vmatpush.msra.mxu0 0.0
      %1357 = vmatpush.msra.mxu0 0.0
      %1358 = vmatpush.msra.mxu0 0.0
      %1359 = vmatpush.msra.mxu0 0.0
      %1360 = vmatpush.msra.mxu0 0.0
      %1361 = vmatpush.msra.mxu0 0.0
      %1362 = vmatpush.msra.mxu0 0.0
      %1363 = vmatpush.msra.mxu0 0.0
      %1364 = vmatpush.msra.mxu0 0.0
      %1365 = vmatpush.msra.mxu0 0.0
      %1366 = vmatpush.msra.mxu0 0.0
      %1367 = vmatpush.msra.mxu0 0.0
      %1368 = vmatpush.msra.mxu0 0.0
      %1369 = vmatpush.msra.mxu0 0.0
      %1370 = vmatpush.msra.mxu0 %v1353
      %1371 = vmatmul.f32.gmra.mxu0 %v1257
      %v1372 = vpop.f32.mrf.mxu0
      %v1373 = vadd.f32 0.0, %v1372
      %1374 = vmatmul.f32.gmra.mxu0 %v1260
      %v1375 = vpop.f32.mrf.mxu0
      %v1376 = vadd.f32 0.0, %v1375
      %1377 = vmatmul.f32.gmra.mxu0 %v1263
      %v1378 = vpop.f32.mrf.mxu0
      %v1379 = vadd.f32 0.0, %v1378
      %1380 = vmatmul.f32.gmra.mxu0 %v1266
      %v1381 = vpop.f32.mrf.mxu0
      %v1382 = vadd.f32 0.0, %v1381
      %1383 = vmatmul.f32.gmra.mxu0 %v1269
      %v1384 = vpop.f32.mrf.mxu0
      %v1385 = vadd.f32 0.0, %v1384
      %1386 = vmatmul.f32.gmra.mxu0 %v1272
      %v1387 = vpop.f32.mrf.mxu0
      %v1388 = vadd.f32 0.0, %v1387
      %1389 = vmatmul.f32.gmra.mxu0 %v1275
      %v1390 = vpop.f32.mrf.mxu0
      %v1391 = vadd.f32 0.0, %v1390
      %1392 = vmatmul.f32.gmra.mxu0 %v1278
      %v1393 = vpop.f32.mrf.mxu0
      %v1394 = vadd.f32 0.0, %v1393
      %1395 = vmatmul.f32.gmra.mxu0 %v1281
      %v1396 = vpop.f32.mrf.mxu0
      %v1397 = vadd.f32 0.0, %v1396
      %1398 = vmatmul.f32.gmra.mxu0 %v1284
      %v1399 = vpop.f32.mrf.mxu0
      %v1400 = vadd.f32 0.0, %v1399
      %1401 = vmatmul.f32.gmra.mxu0 %v1287
      %v1402 = vpop.f32.mrf.mxu0
      %v1403 = vadd.f32 0.0, %v1402
      %1404 = vmatmul.f32.gmra.mxu0 %v1290
      %v1405 = vpop.f32.mrf.mxu0
      %v1406 = vadd.f32 0.0, %v1405
      %1407 = vmatmul.f32.gmra.mxu0 %v1293
      %v1408 = vpop.f32.mrf.mxu0
      %v1409 = vadd.f32 0.0, %v1408
      %1410 = vmatmul.f32.gmra.mxu0 %v1296
      %v1411 = vpop.f32.mrf.mxu0
      %v1412 = vadd.f32 0.0, %v1411
      %1413 = vmatmul.f32.gmra.mxu0 %v1299
      %v1414 = vpop.f32.mrf.mxu0
      %v1415 = vadd.f32 0.0, %v1414
      %1416 = vmatmul.f32.gmra.mxu0 %v1302
      %v1417 = vpop.f32.mrf.mxu0
      %v1418 = vadd.f32 0.0, %v1417
      %1419 = vmatmul.f32.gmra.mxu0 %v1305
      %v1420 = vpop.f32.mrf.mxu0
      %v1421 = vadd.f32 0.0, %v1420
      %1422 = vmatmul.f32.gmra.mxu0 %v1308
      %v1423 = vpop.f32.mrf.mxu0
      %v1424 = vadd.f32 0.0, %v1423
      %1425 = vmatmul.f32.gmra.mxu0 %v1311
      %v1426 = vpop.f32.mrf.mxu0
      %v1427 = vadd.f32 0.0, %v1426
      %1428 = vmatmul.f32.gmra.mxu0 %v1314
      %v1429 = vpop.f32.mrf.mxu0
      %v1430 = vadd.f32 0.0, %v1429
      %1431 = vmatmul.f32.gmra.mxu0 %v1317
      %v1432 = vpop.f32.mrf.mxu0
      %v1433 = vadd.f32 0.0, %v1432
      %1434 = vmatmul.f32.gmra.mxu0 %v1320
      %v1435 = vpop.f32.mrf.mxu0
      %v1436 = vadd.f32 0.0, %v1435
      %1437 = vmatmul.f32.gmra.mxu0 %v1323
      %v1438 = vpop.f32.mrf.mxu0
      %v1439 = vadd.f32 0.0, %v1438
      %1440 = vmatmul.f32.gmra.mxu0 %v1326
      %v1441 = vpop.f32.mrf.mxu0
      %v1442 = vadd.f32 0.0, %v1441
      %1443 = vmatmul.f32.gmra.mxu0 %v1329
      %v1444 = vpop.f32.mrf.mxu0
      %v1445 = vadd.f32 0.0, %v1444
      %1446 = vmatmul.f32.gmra.mxu0 %v1332
      %v1447 = vpop.f32.mrf.mxu0
      %v1448 = vadd.f32 0.0, %v1447
      %1449 = vmatmul.f32.gmra.mxu0 %v1335
      %v1450 = vpop.f32.mrf.mxu0
      %v1451 = vadd.f32 0.0, %v1450
      %1452 = vmatmul.f32.gmra.mxu0 %v1338
      %v1453 = vpop.f32.mrf.mxu0
      %v1454 = vadd.f32 0.0, %v1453
      %1455 = vmatmul.f32.gmra.mxu0 %v1341
      %v1456 = vpop.f32.mrf.mxu0
      %v1457 = vadd.f32 0.0, %v1456
      %1458 = vmatmul.f32.gmra.mxu0 %v1344
      %v1459 = vpop.f32.mrf.mxu0
      %v1460 = vadd.f32 0.0, %v1459
      %1461 = vmatmul.f32.gmra.mxu0 %v1347
      %v1462 = vpop.f32.mrf.mxu0
      %v1463 = vadd.f32 0.0, %v1462
      %1464 = vmatmul.f32.gmra.mxu0 %v1350
      %v1465 = vpop.f32.mrf.mxu0
      %v1466 = vadd.f32 0.0, %v1465
      %1467 = vdwg.mxu0
      %v1468 = vadd.f32 %v1190, %v1373
      %v1469 = vadd.f32 %v1191, %v1376
      %v1470 = vadd.f32 %v1192, %v1379
      %v1471 = vadd.f32 %v1193, %v1382
      %v1472 = vadd.f32 %v1194, %v1385
      %v1473 = vadd.f32 %v1195, %v1388
      %v1474 = vadd.f32 %v1196, %v1391
      %v1475 = vadd.f32 %v1197, %v1394
      %v1476 = vadd.f32 %v1198, %v1397
      %v1477 = vadd.f32 %v1199, %v1400
      %v1478 = vadd.f32 %v1200, %v1403
      %v1479 = vadd.f32 %v1201, %v1406
      %v1480 = vadd.f32 %v1202, %v1409
      %v1481 = vadd.f32 %v1203, %v1412
      %v1482 = vadd.f32 %v1204, %v1415
      %v1483 = vadd.f32 %v1205, %v1418
      %v1484 = vadd.f32 %v1206, %v1421
      %v1485 = vadd.f32 %v1207, %v1424
      %v1486 = vadd.f32 %v1208, %v1427
      %v1487 = vadd.f32 %v1209, %v1430
      %v1488 = vadd.f32 %v1210, %v1433
      %v1489 = vadd.f32 %v1211, %v1436
      %v1490 = vadd.f32 %v1212, %v1439
      %v1491 = vadd.f32 %v1213, %v1442
      %v1492 = vadd.f32 %v1214, %v1445
      %v1493 = vadd.f32 %v1215, %v1448
      %v1494 = vadd.f32 %v1216, %v1451
      %v1495 = vadd.f32 %v1217, %v1454
      %v1496 = vadd.f32 %v1218, %v1457
      %v1497 = vadd.f32 %v1219, %v1460
      %v1498 = vadd.f32 %v1220, %v1463
      %v1499 = vadd.f32 %v1221, %v1466
      %v1500 = vld [vmem:[#allocation2 + $0x2] sm:$0xff]
      %v1501 = vld [vmem:[#allocation2 + $0xa] sm:$0xff]
      %v1502 = vld [vmem:[#allocation2 + $0x1a] sm:$0xff]
      %v1503 = vld [vmem:[#allocation2 + $0x22] sm:$0xff]
      %v1504 = vld [vmem:[#allocation2 + $0x32] sm:$0xff]
      %v1505 = vld [vmem:[#allocation2 + $0x3a] sm:$0xff]
      %v1506 = vld [vmem:[#allocation2 + $0x4a] sm:$0xff]
      %v1507 = vld [vmem:[#allocation2 + $0x52] sm:$0xff]
      %v1508 = vld [vmem:[#allocation2 + $0x62] sm:$0xff]
      %v1509 = vld [vmem:[#allocation2 + $0x6a] sm:$0xff]
      %v1510 = vld [vmem:[#allocation2 + $0x7a] sm:$0xff]
      %v1511 = vld [vmem:[#allocation2 + $0x82] sm:$0xff]
      %v1512 = vld [vmem:[#allocation2 + $0x92] sm:$0xff]
      %v1513 = vld [vmem:[#allocation2 + $0x9a] sm:$0xff]
      %v1514 = vld [vmem:[#allocation2 + $0xaa] sm:$0xff]
      %v1515 = vld [vmem:[#allocation2 + $0xb2] sm:$0xff]
      %v1516 = vld [vmem:[#allocation2 + $0xc2] sm:$0xff]
      %v1517 = vld [vmem:[#allocation2 + $0xca] sm:$0xff]
      %v1518 = vld [vmem:[#allocation2 + $0xda] sm:$0xff]
      %v1519 = vld [vmem:[#allocation2 + $0xe2] sm:$0xff]
      %v1520 = vld [vmem:[#allocation2 + $0xf2] sm:$0xff]
      %v1521 = vld [vmem:[#allocation2 + $0xfa] sm:$0xff]
      %v1522 = vld [vmem:[#allocation2 + $0x10a] sm:$0xff]
      %v1523 = vld [vmem:[#allocation2 + $0x112] sm:$0xff]
      %v1524 = vld [vmem:[#allocation2 + $0x122] sm:$0xff]
      %v1525 = vld [vmem:[#allocation2 + $0x12a] sm:$0xff]
      %v1526 = vld [vmem:[#allocation2 + $0x13a] sm:$0xff]
      %v1527 = vld [vmem:[#allocation2 + $0x142] sm:$0xff]
      %v1528 = vld [vmem:[#allocation2 + $0x152] sm:$0xff]
      %v1529 = vld [vmem:[#allocation2 + $0x15a] sm:$0xff]
      %v1530 = vld [vmem:[#allocation2 + $0x16a] sm:$0xff]
      %v1531 = vld [vmem:[#allocation2 + $0x172] sm:$0xff]
      %s1532 = scalar_lea.vmem %s3, 4
      %v1533 = vld [vmem:[%s1532] sm:$0x3]
      %v1535 = vsel %vm829, %v1500, 0
      %v1538 = vsel %vm829, %v1501, 0
      %v1541 = vsel %vm829, %v1502, 0
      %v1544 = vsel %vm829, %v1503, 0
      %v1547 = vsel %vm829, %v1504, 0
      %v1550 = vsel %vm829, %v1505, 0
      %v1553 = vsel %vm829, %v1506, 0
      %v1556 = vsel %vm829, %v1507, 0
      %v1559 = vsel %vm829, %v1508, 0
      %v1562 = vsel %vm829, %v1509, 0
      %v1565 = vsel %vm829, %v1510, 0
      %v1568 = vsel %vm829, %v1511, 0
      %v1571 = vsel %vm829, %v1512, 0
      %v1574 = vsel %vm829, %v1513, 0
      %v1577 = vsel %vm829, %v1514, 0
      %v1580 = vsel %vm829, %v1515, 0
      %v1583 = vsel %vm829, %v1516, 0
      %v1586 = vsel %vm829, %v1517, 0
      %v1589 = vsel %vm829, %v1518, 0
      %v1592 = vsel %vm829, %v1519, 0
      %v1595 = vsel %vm829, %v1520, 0
      %v1598 = vsel %vm829, %v1521, 0
      %v1601 = vsel %vm829, %v1522, 0
      %v1604 = vsel %vm829, %v1523, 0
      %v1607 = vsel %vm829, %v1524, 0
      %v1610 = vsel %vm829, %v1525, 0
      %v1613 = vsel %vm829, %v1526, 0
      %v1616 = vsel %vm829, %v1527, 0
      %v1619 = vsel %vm829, %v1528, 0
      %v1622 = vsel %vm829, %v1529, 0
      %v1625 = vsel %vm829, %v1530, 0
      %v1628 = vsel %vm829, %v1531, 0
      %v1631 = vsel %vm1073, %v1533, 0
      %1633 = vmatpush.msra.mxu0 0.0
      %1634 = vmatpush.msra.mxu0 0.0
      %1635 = vmatpush.msra.mxu0 0.0
      %1636 = vmatpush.msra.mxu0 0.0
      %1637 = vmatpush.msra.mxu0 0.0
      %1638 = vmatpush.msra.mxu0 0.0
      %1639 = vmatpush.msra.mxu0 0.0
      %1640 = vmatpush.msra.mxu0 0.0
      %1641 = vmatpush.msra.mxu0 0.0
      %1642 = vmatpush.msra.mxu0 0.0
      %1643 = vmatpush.msra.mxu0 0.0
      %1644 = vmatpush.msra.mxu0 0.0
      %1645 = vmatpush.msra.mxu0 0.0
      %1646 = vmatpush.msra.mxu0 0.0
      %1647 = vmatpush.msra.mxu0 0.0
      %1648 = vmatpush.msra.mxu0 %v1631
      %1649 = vmatmul.f32.gmra.mxu0 %v1535
      %v1650 = vpop.f32.mrf.mxu0
      %v1651 = vadd.f32 0.0, %v1650
      %1652 = vmatmul.f32.gmra.mxu0 %v1538
      %v1653 = vpop.f32.mrf.mxu0
      %v1654 = vadd.f32 0.0, %v1653
      %1655 = vmatmul.f32.gmra.mxu0 %v1541
      %v1656 = vpop.f32.mrf.mxu0
      %v1657 = vadd.f32 0.0, %v1656
      %1658 = vmatmul.f32.gmra.mxu0 %v1544
      %v1659 = vpop.f32.mrf.mxu0
      %v1660 = vadd.f32 0.0, %v1659
      %1661 = vmatmul.f32.gmra.mxu0 %v1547
      %v1662 = vpop.f32.mrf.mxu0
      %v1663 = vadd.f32 0.0, %v1662
      %1664 = vmatmul.f32.gmra.mxu0 %v1550
      %v1665 = vpop.f32.mrf.mxu0
      %v1666 = vadd.f32 0.0, %v1665
      %1667 = vmatmul.f32.gmra.mxu0 %v1553
      %v1668 = vpop.f32.mrf.mxu0
      %v1669 = vadd.f32 0.0, %v1668
      %1670 = vmatmul.f32.gmra.mxu0 %v1556
      %v1671 = vpop.f32.mrf.mxu0
      %v1672 = vadd.f32 0.0, %v1671
      %1673 = vmatmul.f32.gmra.mxu0 %v1559
      %v1674 = vpop.f32.mrf.mxu0
      %v1675 = vadd.f32 0.0, %v1674
      %1676 = vmatmul.f32.gmra.mxu0 %v1562
      %v1677 = vpop.f32.mrf.mxu0
      %v1678 = vadd.f32 0.0, %v1677
      %1679 = vmatmul.f32.gmra.mxu0 %v1565
      %v1680 = vpop.f32.mrf.mxu0
      %v1681 = vadd.f32 0.0, %v1680
      %1682 = vmatmul.f32.gmra.mxu0 %v1568
      %v1683 = vpop.f32.mrf.mxu0
      %v1684 = vadd.f32 0.0, %v1683
      %1685 = vmatmul.f32.gmra.mxu0 %v1571
      %v1686 = vpop.f32.mrf.mxu0
      %v1687 = vadd.f32 0.0, %v1686
      %1688 = vmatmul.f32.gmra.mxu0 %v1574
      %v1689 = vpop.f32.mrf.mxu0
      %v1690 = vadd.f32 0.0, %v1689
      %1691 = vmatmul.f32.gmra.mxu0 %v1577
      %v1692 = vpop.f32.mrf.mxu0
      %v1693 = vadd.f32 0.0, %v1692
      %1694 = vmatmul.f32.gmra.mxu0 %v1580
      %v1695 = vpop.f32.mrf.mxu0
      %v1696 = vadd.f32 0.0, %v1695
      %1697 = vmatmul.f32.gmra.mxu0 %v1583
      %v1698 = vpop.f32.mrf.mxu0
      %v1699 = vadd.f32 0.0, %v1698
      %1700 = vmatmul.f32.gmra.mxu0 %v1586
      %v1701 = vpop.f32.mrf.mxu0
      %v1702 = vadd.f32 0.0, %v1701
      %1703 = vmatmul.f32.gmra.mxu0 %v1589
      %v1704 = vpop.f32.mrf.mxu0
      %v1705 = vadd.f32 0.0, %v1704
      %1706 = vmatmul.f32.gmra.mxu0 %v1592
      %v1707 = vpop.f32.mrf.mxu0
      %v1708 = vadd.f32 0.0, %v1707
      %1709 = vmatmul.f32.gmra.mxu0 %v1595
      %v1710 = vpop.f32.mrf.mxu0
      %v1711 = vadd.f32 0.0, %v1710
      %1712 = vmatmul.f32.gmra.mxu0 %v1598
      %v1713 = vpop.f32.mrf.mxu0
      %v1714 = vadd.f32 0.0, %v1713
      %1715 = vmatmul.f32.gmra.mxu0 %v1601
      %v1716 = vpop.f32.mrf.mxu0
      %v1717 = vadd.f32 0.0, %v1716
      %1718 = vmatmul.f32.gmra.mxu0 %v1604
      %v1719 = vpop.f32.mrf.mxu0
      %v1720 = vadd.f32 0.0, %v1719
      %1721 = vmatmul.f32.gmra.mxu0 %v1607
      %v1722 = vpop.f32.mrf.mxu0
      %v1723 = vadd.f32 0.0, %v1722
      %1724 = vmatmul.f32.gmra.mxu0 %v1610
      %v1725 = vpop.f32.mrf.mxu0
      %v1726 = vadd.f32 0.0, %v1725
      %1727 = vmatmul.f32.gmra.mxu0 %v1613
      %v1728 = vpop.f32.mrf.mxu0
      %v1729 = vadd.f32 0.0, %v1728
      %1730 = vmatmul.f32.gmra.mxu0 %v1616
      %v1731 = vpop.f32.mrf.mxu0
      %v1732 = vadd.f32 0.0, %v1731
      %1733 = vmatmul.f32.gmra.mxu0 %v1619
      %v1734 = vpop.f32.mrf.mxu0
      %v1735 = vadd.f32 0.0, %v1734
      %1736 = vmatmul.f32.gmra.mxu0 %v1622
      %v1737 = vpop.f32.mrf.mxu0
      %v1738 = vadd.f32 0.0, %v1737
      %1739 = vmatmul.f32.gmra.mxu0 %v1625
      %v1740 = vpop.f32.mrf.mxu0
      %v1741 = vadd.f32 0.0, %v1740
      %1742 = vmatmul.f32.gmra.mxu0 %v1628
      %v1743 = vpop.f32.mrf.mxu0
      %v1744 = vadd.f32 0.0, %v1743
      %1745 = vdwg.mxu0
      %v1746 = vadd.f32 %v1468, %v1651
      %v1747 = vadd.f32 %v1469, %v1654
      %v1748 = vadd.f32 %v1470, %v1657
      %v1749 = vadd.f32 %v1471, %v1660
      %v1750 = vadd.f32 %v1472, %v1663
      %v1751 = vadd.f32 %v1473, %v1666
      %v1752 = vadd.f32 %v1474, %v1669
      %v1753 = vadd.f32 %v1475, %v1672
      %v1754 = vadd.f32 %v1476, %v1675
      %v1755 = vadd.f32 %v1477, %v1678
      %v1756 = vadd.f32 %v1478, %v1681
      %v1757 = vadd.f32 %v1479, %v1684
      %v1758 = vadd.f32 %v1480, %v1687
      %v1759 = vadd.f32 %v1481, %v1690
      %v1760 = vadd.f32 %v1482, %v1693
      %v1761 = vadd.f32 %v1483, %v1696
      %v1762 = vadd.f32 %v1484, %v1699
      %v1763 = vadd.f32 %v1485, %v1702
      %v1764 = vadd.f32 %v1486, %v1705
      %v1765 = vadd.f32 %v1487, %v1708
      %v1766 = vadd.f32 %v1488, %v1711
      %v1767 = vadd.f32 %v1489, %v1714
      %v1768 = vadd.f32 %v1490, %v1717
      %v1769 = vadd.f32 %v1491, %v1720
      %v1770 = vadd.f32 %v1492, %v1723
      %v1771 = vadd.f32 %v1493, %v1726
      %v1772 = vadd.f32 %v1494, %v1729
      %v1773 = vadd.f32 %v1495, %v1732
      %v1774 = vadd.f32 %v1496, %v1735
      %v1775 = vadd.f32 %v1497, %v1738
      %v1776 = vadd.f32 %v1498, %v1741
      %v1777 = vadd.f32 %v1499, %v1744
      %v1778 = vld [vmem:[%s828] sm:$0xff]
      %v1779 = vld [vmem:[%s828 + $0x8] sm:$0xff]
      %v1780 = vld [vmem:[%s828 + $0x18] sm:$0xff]
      %v1781 = vld [vmem:[%s828 + $0x20] sm:$0xff]
      %v1782 = vld [vmem:[%s828 + $0x30] sm:$0xff]
      %v1783 = vld [vmem:[%s828 + $0x38] sm:$0xff]
      %v1784 = vld [vmem:[%s828 + $0x48] sm:$0xff]
      %v1785 = vld [vmem:[%s828 + $0x50] sm:$0xff]
      %v1786 = vld [vmem:[%s828 + $0x60] sm:$0xff]
      %v1787 = vld [vmem:[%s828 + $0x68] sm:$0xff]
      %v1788 = vld [vmem:[%s828 + $0x78] sm:$0xff]
      %v1789 = vld [vmem:[%s828 + $0x80] sm:$0xff]
      %v1790 = vld [vmem:[%s828 + $0x90] sm:$0xff]
      %v1791 = vld [vmem:[%s828 + $0x98] sm:$0xff]
      %v1792 = vld [vmem:[%s828 + $0xa8] sm:$0xff]
      %v1793 = vld [vmem:[%s828 + $0xb0] sm:$0xff]
      %v1794 = vld [vmem:[%s828 + $0xc0] sm:$0xff]
      %v1795 = vld [vmem:[%s828 + $0xc8] sm:$0xff]
      %v1796 = vld [vmem:[%s828 + $0xd8] sm:$0xff]
      %v1797 = vld [vmem:[%s828 + $0xe0] sm:$0xff]
      %v1798 = vld [vmem:[%s828 + $0xf0] sm:$0xff]
      %v1799 = vld [vmem:[%s828 + $0xf8] sm:$0xff]
      %v1800 = vld [vmem:[%s828 + $0x108] sm:$0xff]
      %v1801 = vld [vmem:[%s828 + $0x110] sm:$0xff]
      %v1802 = vld [vmem:[%s828 + $0x120] sm:$0xff]
      %v1803 = vld [vmem:[%s828 + $0x128] sm:$0xff]
      %v1804 = vld [vmem:[%s828 + $0x138] sm:$0xff]
      %v1805 = vld [vmem:[%s828 + $0x140] sm:$0xff]
      %v1806 = vld [vmem:[%s828 + $0x150] sm:$0xff]
      %v1807 = vld [vmem:[%s828 + $0x158] sm:$0xff]
      %v1808 = vld [vmem:[%s828 + $0x168] sm:$0xff]
      %v1809 = vld [vmem:[%s828 + $0x170] sm:$0xff]
      %s1810 = scalar_lea.vmem %s3, 6
      %v1811 = vld [vmem:[%s1810] sm:$0x3]
      %v1813 = vsel %vm829, %v1778, 0
      %v1816 = vsel %vm829, %v1779, 0
      %v1819 = vsel %vm829, %v1780, 0
      %v1822 = vsel %vm829, %v1781, 0
      %v1825 = vsel %vm829, %v1782, 0
      %v1828 = vsel %vm829, %v1783, 0
      %v1831 = vsel %vm829, %v1784, 0
      %v1834 = vsel %vm829, %v1785, 0
      %v1837 = vsel %vm829, %v1786, 0
      %v1840 = vsel %vm829, %v1787, 0
      %v1843 = vsel %vm829, %v1788, 0
      %v1846 = vsel %vm829, %v1789, 0
      %v1849 = vsel %vm829, %v1790, 0
      %v1852 = vsel %vm829, %v1791, 0
      %v1855 = vsel %vm829, %v1792, 0
      %v1858 = vsel %vm829, %v1793, 0
      %v1861 = vsel %vm829, %v1794, 0
      %v1864 = vsel %vm829, %v1795, 0
      %v1867 = vsel %vm829, %v1796, 0
      %v1870 = vsel %vm829, %v1797, 0
      %v1873 = vsel %vm829, %v1798, 0
      %v1876 = vsel %vm829, %v1799, 0
      %v1879 = vsel %vm829, %v1800, 0
      %v1882 = vsel %vm829, %v1801, 0
      %v1885 = vsel %vm829, %v1802, 0
      %v1888 = vsel %vm829, %v1803, 0
      %v1891 = vsel %vm829, %v1804, 0
      %v1894 = vsel %vm829, %v1805, 0
      %v1897 = vsel %vm829, %v1806, 0
      %v1900 = vsel %vm829, %v1807, 0
      %v1903 = vsel %vm829, %v1808, 0
      %v1906 = vsel %vm829, %v1809, 0
      %v1909 = vsel %vm1073, %v1811, 0
      %1911 = vmatpush.msra.mxu0 0.0
      %1912 = vmatpush.msra.mxu0 0.0
      %1913 = vmatpush.msra.mxu0 0.0
      %1914 = vmatpush.msra.mxu0 0.0
      %1915 = vmatpush.msra.mxu0 0.0
      %1916 = vmatpush.msra.mxu0 0.0
      %1917 = vmatpush.msra.mxu0 0.0
      %1918 = vmatpush.msra.mxu0 0.0
      %1919 = vmatpush.msra.mxu0 0.0
      %1920 = vmatpush.msra.mxu0 0.0
      %1921 = vmatpush.msra.mxu0 0.0
      %1922 = vmatpush.msra.mxu0 0.0
      %1923 = vmatpush.msra.mxu0 0.0
      %1924 = vmatpush.msra.mxu0 0.0
      %1925 = vmatpush.msra.mxu0 0.0
      %1926 = vmatpush.msra.mxu0 %v1909
      %1927 = vmatmul.f32.gmra.mxu0 %v1813
      %v1928 = vpop.f32.mrf.mxu0
      %v1929 = vadd.f32 0.0, %v1928
      %1930 = vmatmul.f32.gmra.mxu0 %v1816
      %v1931 = vpop.f32.mrf.mxu0
      %v1932 = vadd.f32 0.0, %v1931
      %1933 = vmatmul.f32.gmra.mxu0 %v1819
      %v1934 = vpop.f32.mrf.mxu0
      %v1935 = vadd.f32 0.0, %v1934
      %1936 = vmatmul.f32.gmra.mxu0 %v1822
      %v1937 = vpop.f32.mrf.mxu0
      %v1938 = vadd.f32 0.0, %v1937
      %1939 = vmatmul.f32.gmra.mxu0 %v1825
      %v1940 = vpop.f32.mrf.mxu0
      %v1941 = vadd.f32 0.0, %v1940
      %1942 = vmatmul.f32.gmra.mxu0 %v1828
      %v1943 = vpop.f32.mrf.mxu0
      %v1944 = vadd.f32 0.0, %v1943
      %1945 = vmatmul.f32.gmra.mxu0 %v1831
      %v1946 = vpop.f32.mrf.mxu0
      %v1947 = vadd.f32 0.0, %v1946
      %1948 = vmatmul.f32.gmra.mxu0 %v1834
      %v1949 = vpop.f32.mrf.mxu0
      %v1950 = vadd.f32 0.0, %v1949
      %1951 = vmatmul.f32.gmra.mxu0 %v1837
      %v1952 = vpop.f32.mrf.mxu0
      %v1953 = vadd.f32 0.0, %v1952
      %1954 = vmatmul.f32.gmra.mxu0 %v1840
      %v1955 = vpop.f32.mrf.mxu0
      %v1956 = vadd.f32 0.0, %v1955
      %1957 = vmatmul.f32.gmra.mxu0 %v1843
      %v1958 = vpop.f32.mrf.mxu0
      %v1959 = vadd.f32 0.0, %v1958
      %1960 = vmatmul.f32.gmra.mxu0 %v1846
      %v1961 = vpop.f32.mrf.mxu0
      %v1962 = vadd.f32 0.0, %v1961
      %1963 = vmatmul.f32.gmra.mxu0 %v1849
      %v1964 = vpop.f32.mrf.mxu0
      %v1965 = vadd.f32 0.0, %v1964
      %1966 = vmatmul.f32.gmra.mxu0 %v1852
      %v1967 = vpop.f32.mrf.mxu0
      %v1968 = vadd.f32 0.0, %v1967
      %1969 = vmatmul.f32.gmra.mxu0 %v1855
      %v1970 = vpop.f32.mrf.mxu0
      %v1971 = vadd.f32 0.0, %v1970
      %1972 = vmatmul.f32.gmra.mxu0 %v1858
      %v1973 = vpop.f32.mrf.mxu0
      %v1974 = vadd.f32 0.0, %v1973
      %1975 = vmatmul.f32.gmra.mxu0 %v1861
      %v1976 = vpop.f32.mrf.mxu0
      %v1977 = vadd.f32 0.0, %v1976
      %1978 = vmatmul.f32.gmra.mxu0 %v1864
      %v1979 = vpop.f32.mrf.mxu0
      %v1980 = vadd.f32 0.0, %v1979
      %1981 = vmatmul.f32.gmra.mxu0 %v1867
      %v1982 = vpop.f32.mrf.mxu0
      %v1983 = vadd.f32 0.0, %v1982
      %1984 = vmatmul.f32.gmra.mxu0 %v1870
      %v1985 = vpop.f32.mrf.mxu0
      %v1986 = vadd.f32 0.0, %v1985
      %1987 = vmatmul.f32.gmra.mxu0 %v1873
      %v1988 = vpop.f32.mrf.mxu0
      %v1989 = vadd.f32 0.0, %v1988
      %1990 = vmatmul.f32.gmra.mxu0 %v1876
      %v1991 = vpop.f32.mrf.mxu0
      %v1992 = vadd.f32 0.0, %v1991
      %1993 = vmatmul.f32.gmra.mxu0 %v1879
      %v1994 = vpop.f32.mrf.mxu0
      %v1995 = vadd.f32 0.0, %v1994
      %1996 = vmatmul.f32.gmra.mxu0 %v1882
      %v1997 = vpop.f32.mrf.mxu0
      %v1998 = vadd.f32 0.0, %v1997
      %1999 = vmatmul.f32.gmra.mxu0 %v1885
      %v2000 = vpop.f32.mrf.mxu0
      %v2001 = vadd.f32 0.0, %v2000
      %2002 = vmatmul.f32.gmra.mxu0 %v1888
      %v2003 = vpop.f32.mrf.mxu0
      %v2004 = vadd.f32 0.0, %v2003
      %2005 = vmatmul.f32.gmra.mxu0 %v1891
      %v2006 = vpop.f32.mrf.mxu0
      %v2007 = vadd.f32 0.0, %v2006
      %2008 = vmatmul.f32.gmra.mxu0 %v1894
      %v2009 = vpop.f32.mrf.mxu0
      %v2010 = vadd.f32 0.0, %v2009
      %2011 = vmatmul.f32.gmra.mxu0 %v1897
      %v2012 = vpop.f32.mrf.mxu0
      %v2013 = vadd.f32 0.0, %v2012
      %2014 = vmatmul.f32.gmra.mxu0 %v1900
      %v2015 = vpop.f32.mrf.mxu0
      %v2016 = vadd.f32 0.0, %v2015
      %2017 = vmatmul.f32.gmra.mxu0 %v1903
      %v2018 = vpop.f32.mrf.mxu0
      %v2019 = vadd.f32 0.0, %v2018
      %2020 = vmatmul.f32.gmra.mxu0 %v1906
      %v2021 = vpop.f32.mrf.mxu0
      %v2022 = vadd.f32 0.0, %v2021
      %2023 = vdwg.mxu0
      %v2024 = vadd.f32 %v1746, %v1929
      %v2025 = vadd.f32 %v1747, %v1932
      %v2026 = vadd.f32 %v1748, %v1935
      %v2027 = vadd.f32 %v1749, %v1938
      %v2028 = vadd.f32 %v1750, %v1941
      %v2029 = vadd.f32 %v1751, %v1944
      %v2030 = vadd.f32 %v1752, %v1947
      %v2031 = vadd.f32 %v1753, %v1950
      %v2032 = vadd.f32 %v1754, %v1953
      %v2033 = vadd.f32 %v1755, %v1956
      %v2034 = vadd.f32 %v1756, %v1959
      %v2035 = vadd.f32 %v1757, %v1962
      %v2036 = vadd.f32 %v1758, %v1965
      %v2037 = vadd.f32 %v1759, %v1968
      %v2038 = vadd.f32 %v1760, %v1971
      %v2039 = vadd.f32 %v1761, %v1974
      %v2040 = vadd.f32 %v1762, %v1977
      %v2041 = vadd.f32 %v1763, %v1980
      %v2042 = vadd.f32 %v1764, %v1983
      %v2043 = vadd.f32 %v1765, %v1986
      %v2044 = vadd.f32 %v1766, %v1989
      %v2045 = vadd.f32 %v1767, %v1992
      %v2046 = vadd.f32 %v1768, %v1995
      %v2047 = vadd.f32 %v1769, %v1998
      %v2048 = vadd.f32 %v1770, %v2001
      %v2049 = vadd.f32 %v1771, %v2004
      %v2050 = vadd.f32 %v1772, %v2007
      %v2051 = vadd.f32 %v1773, %v2010
      %v2052 = vadd.f32 %v1774, %v2013
      %v2053 = vadd.f32 %v1775, %v2016
      %v2054 = vadd.f32 %v1776, %v2019
      %v2055 = vadd.f32 %v1777, %v2022
      %v2056 = vld [vmem:[%s828 + $0x1] sm:$0xff]
      %v2057 = vld [vmem:[%s828 + $0x9] sm:$0xff]
      %v2058 = vld [vmem:[%s828 + $0x19] sm:$0xff]
      %v2059 = vld [vmem:[%s828 + $0x21] sm:$0xff]
      %v2060 = vld [vmem:[%s828 + $0x31] sm:$0xff]
      %v2061 = vld [vmem:[%s828 + $0x39] sm:$0xff]
      %v2062 = vld [vmem:[%s828 + $0x49] sm:$0xff]
      %v2063 = vld [vmem:[%s828 + $0x51] sm:$0xff]
      %v2064 = vld [vmem:[%s828 + $0x61] sm:$0xff]
      %v2065 = vld [vmem:[%s828 + $0x69] sm:$0xff]
      %v2066 = vld [vmem:[%s828 + $0x79] sm:$0xff]
      %v2067 = vld [vmem:[%s828 + $0x81] sm:$0xff]
      %v2068 = vld [vmem:[%s828 + $0x91] sm:$0xff]
      %v2069 = vld [vmem:[%s828 + $0x99] sm:$0xff]
      %v2070 = vld [vmem:[%s828 + $0xa9] sm:$0xff]
      %v2071 = vld [vmem:[%s828 + $0xb1] sm:$0xff]
      %v2072 = vld [vmem:[%s828 + $0xc1] sm:$0xff]
      %v2073 = vld [vmem:[%s828 + $0xc9] sm:$0xff]
      %v2074 = vld [vmem:[%s828 + $0xd9] sm:$0xff]
      %v2075 = vld [vmem:[%s828 + $0xe1] sm:$0xff]
      %v2076 = vld [vmem:[%s828 + $0xf1] sm:$0xff]
      %v2077 = vld [vmem:[%s828 + $0xf9] sm:$0xff]
      %v2078 = vld [vmem:[%s828 + $0x109] sm:$0xff]
      %v2079 = vld [vmem:[%s828 + $0x111] sm:$0xff]
      %v2080 = vld [vmem:[%s828 + $0x121] sm:$0xff]
      %v2081 = vld [vmem:[%s828 + $0x129] sm:$0xff]
      %v2082 = vld [vmem:[%s828 + $0x139] sm:$0xff]
      %v2083 = vld [vmem:[%s828 + $0x141] sm:$0xff]
      %v2084 = vld [vmem:[%s828 + $0x151] sm:$0xff]
      %v2085 = vld [vmem:[%s828 + $0x159] sm:$0xff]
      %v2086 = vld [vmem:[%s828 + $0x169] sm:$0xff]
      %v2087 = vld [vmem:[%s828 + $0x171] sm:$0xff]
      %s2088 = scalar_lea.vmem %s3, 8
      %v2089 = vld [vmem:[%s2088] sm:$0x3]
      %v2091 = vsel %vm829, %v2056, 0
      %v2094 = vsel %vm829, %v2057, 0
      %v2097 = vsel %vm829, %v2058, 0
      %v2100 = vsel %vm829, %v2059, 0
      %v2103 = vsel %vm829, %v2060, 0
      %v2106 = vsel %vm829, %v2061, 0
      %v2109 = vsel %vm829, %v2062, 0
      %v2112 = vsel %vm829, %v2063, 0
      %v2115 = vsel %vm829, %v2064, 0
      %v2118 = vsel %vm829, %v2065, 0
      %v2121 = vsel %vm829, %v2066, 0
      %v2124 = vsel %vm829, %v2067, 0
      %v2127 = vsel %vm829, %v2068, 0
      %v2130 = vsel %vm829, %v2069, 0
      %v2133 = vsel %vm829, %v2070, 0
      %v2136 = vsel %vm829, %v2071, 0
      %v2139 = vsel %vm829, %v2072, 0
      %v2142 = vsel %vm829, %v2073, 0
      %v2145 = vsel %vm829, %v2074, 0
      %v2148 = vsel %vm829, %v2075, 0
      %v2151 = vsel %vm829, %v2076, 0
      %v2154 = vsel %vm829, %v2077, 0
      %v2157 = vsel %vm829, %v2078, 0
      %v2160 = vsel %vm829, %v2079, 0
      %v2163 = vsel %vm829, %v2080, 0
      %v2166 = vsel %vm829, %v2081, 0
      %v2169 = vsel %vm829, %v2082, 0
      %v2172 = vsel %vm829, %v2083, 0
      %v2175 = vsel %vm829, %v2084, 0
      %v2178 = vsel %vm829, %v2085, 0
      %v2181 = vsel %vm829, %v2086, 0
      %v2184 = vsel %vm829, %v2087, 0
      %v2187 = vsel %vm1073, %v2089, 0
      %2189 = vmatpush.msra.mxu0 0.0
      %2190 = vmatpush.msra.mxu0 0.0
      %2191 = vmatpush.msra.mxu0 0.0
      %2192 = vmatpush.msra.mxu0 0.0
      %2193 = vmatpush.msra.mxu0 0.0
      %2194 = vmatpush.msra.mxu0 0.0
      %2195 = vmatpush.msra.mxu0 0.0
      %2196 = vmatpush.msra.mxu0 0.0
      %2197 = vmatpush.msra.mxu0 0.0
      %2198 = vmatpush.msra.mxu0 0.0
      %2199 = vmatpush.msra.mxu0 0.0
      %2200 = vmatpush.msra.mxu0 0.0
      %2201 = vmatpush.msra.mxu0 0.0
      %2202 = vmatpush.msra.mxu0 0.0
      %2203 = vmatpush.msra.mxu0 0.0
      %2204 = vmatpush.msra.mxu0 %v2187
      %2205 = vmatmul.f32.gmra.mxu0 %v2091
      %v2206 = vpop.f32.mrf.mxu0
      %v2207 = vadd.f32 0.0, %v2206
      %2208 = vmatmul.f32.gmra.mxu0 %v2094
      %v2209 = vpop.f32.mrf.mxu0
      %v2210 = vadd.f32 0.0, %v2209
      %2211 = vmatmul.f32.gmra.mxu0 %v2097
      %v2212 = vpop.f32.mrf.mxu0
      %v2213 = vadd.f32 0.0, %v2212
      %2214 = vmatmul.f32.gmra.mxu0 %v2100
      %v2215 = vpop.f32.mrf.mxu0
      %v2216 = vadd.f32 0.0, %v2215
      %2217 = vmatmul.f32.gmra.mxu0 %v2103
      %v2218 = vpop.f32.mrf.mxu0
      %v2219 = vadd.f32 0.0, %v2218
      %2220 = vmatmul.f32.gmra.mxu0 %v2106
      %v2221 = vpop.f32.mrf.mxu0
      %v2222 = vadd.f32 0.0, %v2221
      %2223 = vmatmul.f32.gmra.mxu0 %v2109
      %v2224 = vpop.f32.mrf.mxu0
      %v2225 = vadd.f32 0.0, %v2224
      %2226 = vmatmul.f32.gmra.mxu0 %v2112
      %v2227 = vpop.f32.mrf.mxu0
      %v2228 = vadd.f32 0.0, %v2227
      %2229 = vmatmul.f32.gmra.mxu0 %v2115
      %v2230 = vpop.f32.mrf.mxu0
      %v2231 = vadd.f32 0.0, %v2230
      %2232 = vmatmul.f32.gmra.mxu0 %v2118
      %v2233 = vpop.f32.mrf.mxu0
      %v2234 = vadd.f32 0.0, %v2233
      %2235 = vmatmul.f32.gmra.mxu0 %v2121
      %v2236 = vpop.f32.mrf.mxu0
      %v2237 = vadd.f32 0.0, %v2236
      %2238 = vmatmul.f32.gmra.mxu0 %v2124
      %v2239 = vpop.f32.mrf.mxu0
      %v2240 = vadd.f32 0.0, %v2239
      %2241 = vmatmul.f32.gmra.mxu0 %v2127
      %v2242 = vpop.f32.mrf.mxu0
      %v2243 = vadd.f32 0.0, %v2242
      %2244 = vmatmul.f32.gmra.mxu0 %v2130
      %v2245 = vpop.f32.mrf.mxu0
      %v2246 = vadd.f32 0.0, %v2245
      %2247 = vmatmul.f32.gmra.mxu0 %v2133
      %v2248 = vpop.f32.mrf.mxu0
      %v2249 = vadd.f32 0.0, %v2248
      %2250 = vmatmul.f32.gmra.mxu0 %v2136
      %v2251 = vpop.f32.mrf.mxu0
      %v2252 = vadd.f32 0.0, %v2251
      %2253 = vmatmul.f32.gmra.mxu0 %v2139
      %v2254 = vpop.f32.mrf.mxu0
      %v2255 = vadd.f32 0.0, %v2254
      %2256 = vmatmul.f32.gmra.mxu0 %v2142
      %v2257 = vpop.f32.mrf.mxu0
      %v2258 = vadd.f32 0.0, %v2257
      %2259 = vmatmul.f32.gmra.mxu0 %v2145
      %v2260 = vpop.f32.mrf.mxu0
      %v2261 = vadd.f32 0.0, %v2260
      %2262 = vmatmul.f32.gmra.mxu0 %v2148
      %v2263 = vpop.f32.mrf.mxu0
      %v2264 = vadd.f32 0.0, %v2263
      %2265 = vmatmul.f32.gmra.mxu0 %v2151
      %v2266 = vpop.f32.mrf.mxu0
      %v2267 = vadd.f32 0.0, %v2266
      %2268 = vmatmul.f32.gmra.mxu0 %v2154
      %v2269 = vpop.f32.mrf.mxu0
      %v2270 = vadd.f32 0.0, %v2269
      %2271 = vmatmul.f32.gmra.mxu0 %v2157
      %v2272 = vpop.f32.mrf.mxu0
      %v2273 = vadd.f32 0.0, %v2272
      %2274 = vmatmul.f32.gmra.mxu0 %v2160
      %v2275 = vpop.f32.mrf.mxu0
      %v2276 = vadd.f32 0.0, %v2275
      %2277 = vmatmul.f32.gmra.mxu0 %v2163
      %v2278 = vpop.f32.mrf.mxu0
      %v2279 = vadd.f32 0.0, %v2278
      %2280 = vmatmul.f32.gmra.mxu0 %v2166
      %v2281 = vpop.f32.mrf.mxu0
      %v2282 = vadd.f32 0.0, %v2281
      %2283 = vmatmul.f32.gmra.mxu0 %v2169
      %v2284 = vpop.f32.mrf.mxu0
      %v2285 = vadd.f32 0.0, %v2284
      %2286 = vmatmul.f32.gmra.mxu0 %v2172
      %v2287 = vpop.f32.mrf.mxu0
      %v2288 = vadd.f32 0.0, %v2287
      %2289 = vmatmul.f32.gmra.mxu0 %v2175
      %v2290 = vpop.f32.mrf.mxu0
      %v2291 = vadd.f32 0.0, %v2290
      %2292 = vmatmul.f32.gmra.mxu0 %v2178
      %v2293 = vpop.f32.mrf.mxu0
      %v2294 = vadd.f32 0.0, %v2293
      %2295 = vmatmul.f32.gmra.mxu0 %v2181
      %v2296 = vpop.f32.mrf.mxu0
      %v2297 = vadd.f32 0.0, %v2296
      %2298 = vmatmul.f32.gmra.mxu0 %v2184
      %v2299 = vpop.f32.mrf.mxu0
      %v2300 = vadd.f32 0.0, %v2299
      %2301 = vdwg.mxu0
      %v2302 = vadd.f32 %v2024, %v2207
      %v2303 = vadd.f32 %v2025, %v2210
      %v2304 = vadd.f32 %v2026, %v2213
      %v2305 = vadd.f32 %v2027, %v2216
      %v2306 = vadd.f32 %v2028, %v2219
      %v2307 = vadd.f32 %v2029, %v2222
      %v2308 = vadd.f32 %v2030, %v2225
      %v2309 = vadd.f32 %v2031, %v2228
      %v2310 = vadd.f32 %v2032, %v2231
      %v2311 = vadd.f32 %v2033, %v2234
      %v2312 = vadd.f32 %v2034, %v2237
      %v2313 = vadd.f32 %v2035, %v2240
      %v2314 = vadd.f32 %v2036, %v2243
      %v2315 = vadd.f32 %v2037, %v2246
      %v2316 = vadd.f32 %v2038, %v2249
      %v2317 = vadd.f32 %v2039, %v2252
      %v2318 = vadd.f32 %v2040, %v2255
      %v2319 = vadd.f32 %v2041, %v2258
      %v2320 = vadd.f32 %v2042, %v2261
      %v2321 = vadd.f32 %v2043, %v2264
      %v2322 = vadd.f32 %v2044, %v2267
      %v2323 = vadd.f32 %v2045, %v2270
      %v2324 = vadd.f32 %v2046, %v2273
      %v2325 = vadd.f32 %v2047, %v2276
      %v2326 = vadd.f32 %v2048, %v2279
      %v2327 = vadd.f32 %v2049, %v2282
      %v2328 = vadd.f32 %v2050, %v2285
      %v2329 = vadd.f32 %v2051, %v2288
      %v2330 = vadd.f32 %v2052, %v2291
      %v2331 = vadd.f32 %v2053, %v2294
      %v2332 = vadd.f32 %v2054, %v2297
      %v2333 = vadd.f32 %v2055, %v2300
      %v2334 = vld [vmem:[%s828 + $0x2] sm:$0xff]
      %v2335 = vld [vmem:[%s828 + $0xa] sm:$0xff]
      %v2336 = vld [vmem:[%s828 + $0x1a] sm:$0xff]
      %v2337 = vld [vmem:[%s828 + $0x22] sm:$0xff]
      %v2338 = vld [vmem:[%s828 + $0x32] sm:$0xff]
      %v2339 = vld [vmem:[%s828 + $0x3a] sm:$0xff]
      %v2340 = vld [vmem:[%s828 + $0x4a] sm:$0xff]
      %v2341 = vld [vmem:[%s828 + $0x52] sm:$0xff]
      %v2342 = vld [vmem:[%s828 + $0x62] sm:$0xff]
      %v2343 = vld [vmem:[%s828 + $0x6a] sm:$0xff]
      %v2344 = vld [vmem:[%s828 + $0x7a] sm:$0xff]
      %v2345 = vld [vmem:[%s828 + $0x82] sm:$0xff]
      %v2346 = vld [vmem:[%s828 + $0x92] sm:$0xff]
      %v2347 = vld [vmem:[%s828 + $0x9a] sm:$0xff]
      %v2348 = vld [vmem:[%s828 + $0xaa] sm:$0xff]
      %v2349 = vld [vmem:[%s828 + $0xb2] sm:$0xff]
      %v2350 = vld [vmem:[%s828 + $0xc2] sm:$0xff]
      %v2351 = vld [vmem:[%s828 + $0xca] sm:$0xff]
      %v2352 = vld [vmem:[%s828 + $0xda] sm:$0xff]
      %v2353 = vld [vmem:[%s828 + $0xe2] sm:$0xff]
      %v2354 = vld [vmem:[%s828 + $0xf2] sm:$0xff]
      %v2355 = vld [vmem:[%s828 + $0xfa] sm:$0xff]
      %v2356 = vld [vmem:[%s828 + $0x10a] sm:$0xff]
      %v2357 = vld [vmem:[%s828 + $0x112] sm:$0xff]
      %v2358 = vld [vmem:[%s828 + $0x122] sm:$0xff]
      %v2359 = vld [vmem:[%s828 + $0x12a] sm:$0xff]
      %v2360 = vld [vmem:[%s828 + $0x13a] sm:$0xff]
      %v2361 = vld [vmem:[%s828 + $0x142] sm:$0xff]
      %v2362 = vld [vmem:[%s828 + $0x152] sm:$0xff]
      %v2363 = vld [vmem:[%s828 + $0x15a] sm:$0xff]
      %v2364 = vld [vmem:[%s828 + $0x16a] sm:$0xff]
      %v2365 = vld [vmem:[%s828 + $0x172] sm:$0xff]
      %s2366 = scalar_lea.vmem %s3, 10
      %v2367 = vld [vmem:[%s2366] sm:$0x3]
      %v2369 = vsel %vm829, %v2334, 0
      %v2372 = vsel %vm829, %v2335, 0
      %v2375 = vsel %vm829, %v2336, 0
      %v2378 = vsel %vm829, %v2337, 0
      %v2381 = vsel %vm829, %v2338, 0
      %v2384 = vsel %vm829, %v2339, 0
      %v2387 = vsel %vm829, %v2340, 0
      %v2390 = vsel %vm829, %v2341, 0
      %v2393 = vsel %vm829, %v2342, 0
      %v2396 = vsel %vm829, %v2343, 0
      %v2399 = vsel %vm829, %v2344, 0
      %v2402 = vsel %vm829, %v2345, 0
      %v2405 = vsel %vm829, %v2346, 0
      %v2408 = vsel %vm829, %v2347, 0
      %v2411 = vsel %vm829, %v2348, 0
      %v2414 = vsel %vm829, %v2349, 0
      %v2417 = vsel %vm829, %v2350, 0
      %v2420 = vsel %vm829, %v2351, 0
      %v2423 = vsel %vm829, %v2352, 0
      %v2426 = vsel %vm829, %v2353, 0
      %v2429 = vsel %vm829, %v2354, 0
      %v2432 = vsel %vm829, %v2355, 0
      %v2435 = vsel %vm829, %v2356, 0
      %v2438 = vsel %vm829, %v2357, 0
      %v2441 = vsel %vm829, %v2358, 0
      %v2444 = vsel %vm829, %v2359, 0
      %v2447 = vsel %vm829, %v2360, 0
      %v2450 = vsel %vm829, %v2361, 0
      %v2453 = vsel %vm829, %v2362, 0
      %v2456 = vsel %vm829, %v2363, 0
      %v2459 = vsel %vm829, %v2364, 0
      %v2462 = vsel %vm829, %v2365, 0
      %v2465 = vsel %vm1073, %v2367, 0
      %2467 = vmatpush.msra.mxu0 0.0
      %2468 = vmatpush.msra.mxu0 0.0
      %2469 = vmatpush.msra.mxu0 0.0
      %2470 = vmatpush.msra.mxu0 0.0
      %2471 = vmatpush.msra.mxu0 0.0
      %2472 = vmatpush.msra.mxu0 0.0
      %2473 = vmatpush.msra.mxu0 0.0
      %2474 = vmatpush.msra.mxu0 0.0
      %2475 = vmatpush.msra.mxu0 0.0
      %2476 = vmatpush.msra.mxu0 0.0
      %2477 = vmatpush.msra.mxu0 0.0
      %2478 = vmatpush.msra.mxu0 0.0
      %2479 = vmatpush.msra.mxu0 0.0
      %2480 = vmatpush.msra.mxu0 0.0
      %2481 = vmatpush.msra.mxu0 0.0
      %2482 = vmatpush.msra.mxu0 %v2465
      %2483 = vmatmul.f32.gmra.mxu0 %v2369
      %v2484 = vpop.f32.mrf.mxu0
      %v2485 = vadd.f32 0.0, %v2484
      %2486 = vmatmul.f32.gmra.mxu0 %v2372
      %v2487 = vpop.f32.mrf.mxu0
      %v2488 = vadd.f32 0.0, %v2487
      %2489 = vmatmul.f32.gmra.mxu0 %v2375
      %v2490 = vpop.f32.mrf.mxu0
      %v2491 = vadd.f32 0.0, %v2490
      %2492 = vmatmul.f32.gmra.mxu0 %v2378
      %v2493 = vpop.f32.mrf.mxu0
      %v2494 = vadd.f32 0.0, %v2493
      %2495 = vmatmul.f32.gmra.mxu0 %v2381
      %v2496 = vpop.f32.mrf.mxu0
      %v2497 = vadd.f32 0.0, %v2496
      %2498 = vmatmul.f32.gmra.mxu0 %v2384
      %v2499 = vpop.f32.mrf.mxu0
      %v2500 = vadd.f32 0.0, %v2499
      %2501 = vmatmul.f32.gmra.mxu0 %v2387
      %v2502 = vpop.f32.mrf.mxu0
      %v2503 = vadd.f32 0.0, %v2502
      %2504 = vmatmul.f32.gmra.mxu0 %v2390
      %v2505 = vpop.f32.mrf.mxu0
      %v2506 = vadd.f32 0.0, %v2505
      %2507 = vmatmul.f32.gmra.mxu0 %v2393
      %v2508 = vpop.f32.mrf.mxu0
      %v2509 = vadd.f32 0.0, %v2508
      %2510 = vmatmul.f32.gmra.mxu0 %v2396
      %v2511 = vpop.f32.mrf.mxu0
      %v2512 = vadd.f32 0.0, %v2511
      %2513 = vmatmul.f32.gmra.mxu0 %v2399
      %v2514 = vpop.f32.mrf.mxu0
      %v2515 = vadd.f32 0.0, %v2514
      %2516 = vmatmul.f32.gmra.mxu0 %v2402
      %v2517 = vpop.f32.mrf.mxu0
      %v2518 = vadd.f32 0.0, %v2517
      %2519 = vmatmul.f32.gmra.mxu0 %v2405
      %v2520 = vpop.f32.mrf.mxu0
      %v2521 = vadd.f32 0.0, %v2520
      %2522 = vmatmul.f32.gmra.mxu0 %v2408
      %v2523 = vpop.f32.mrf.mxu0
      %v2524 = vadd.f32 0.0, %v2523
      %2525 = vmatmul.f32.gmra.mxu0 %v2411
      %v2526 = vpop.f32.mrf.mxu0
      %v2527 = vadd.f32 0.0, %v2526
      %2528 = vmatmul.f32.gmra.mxu0 %v2414
      %v2529 = vpop.f32.mrf.mxu0
      %v2530 = vadd.f32 0.0, %v2529
      %2531 = vmatmul.f32.gmra.mxu0 %v2417
      %v2532 = vpop.f32.mrf.mxu0
      %v2533 = vadd.f32 0.0, %v2532
      %2534 = vmatmul.f32.gmra.mxu0 %v2420
      %v2535 = vpop.f32.mrf.mxu0
      %v2536 = vadd.f32 0.0, %v2535
      %2537 = vmatmul.f32.gmra.mxu0 %v2423
      %v2538 = vpop.f32.mrf.mxu0
      %v2539 = vadd.f32 0.0, %v2538
      %2540 = vmatmul.f32.gmra.mxu0 %v2426
      %v2541 = vpop.f32.mrf.mxu0
      %v2542 = vadd.f32 0.0, %v2541
      %2543 = vmatmul.f32.gmra.mxu0 %v2429
      %v2544 = vpop.f32.mrf.mxu0
      %v2545 = vadd.f32 0.0, %v2544
      %2546 = vmatmul.f32.gmra.mxu0 %v2432
      %v2547 = vpop.f32.mrf.mxu0
      %v2548 = vadd.f32 0.0, %v2547
      %2549 = vmatmul.f32.gmra.mxu0 %v2435
      %v2550 = vpop.f32.mrf.mxu0
      %v2551 = vadd.f32 0.0, %v2550
      %2552 = vmatmul.f32.gmra.mxu0 %v2438
      %v2553 = vpop.f32.mrf.mxu0
      %v2554 = vadd.f32 0.0, %v2553
      %2555 = vmatmul.f32.gmra.mxu0 %v2441
      %v2556 = vpop.f32.mrf.mxu0
      %v2557 = vadd.f32 0.0, %v2556
      %2558 = vmatmul.f32.gmra.mxu0 %v2444
      %v2559 = vpop.f32.mrf.mxu0
      %v2560 = vadd.f32 0.0, %v2559
      %2561 = vmatmul.f32.gmra.mxu0 %v2447
      %v2562 = vpop.f32.mrf.mxu0
      %v2563 = vadd.f32 0.0, %v2562
      %2564 = vmatmul.f32.gmra.mxu0 %v2450
      %v2565 = vpop.f32.mrf.mxu0
      %v2566 = vadd.f32 0.0, %v2565
      %2567 = vmatmul.f32.gmra.mxu0 %v2453
      %v2568 = vpop.f32.mrf.mxu0
      %v2569 = vadd.f32 0.0, %v2568
      %2570 = vmatmul.f32.gmra.mxu0 %v2456
      %v2571 = vpop.f32.mrf.mxu0
      %v2572 = vadd.f32 0.0, %v2571
      %2573 = vmatmul.f32.gmra.mxu0 %v2459
      %v2574 = vpop.f32.mrf.mxu0
      %v2575 = vadd.f32 0.0, %v2574
      %2576 = vmatmul.f32.gmra.mxu0 %v2462
      %v2577 = vpop.f32.mrf.mxu0
      %v2578 = vadd.f32 0.0, %v2577
      %2579 = vdwg.mxu0
      %v2580 = vadd.f32 %v2302, %v2485
      %v2581 = vadd.f32 %v2303, %v2488
      %v2582 = vadd.f32 %v2304, %v2491
      %v2583 = vadd.f32 %v2305, %v2494
      %v2584 = vadd.f32 %v2306, %v2497
      %v2585 = vadd.f32 %v2307, %v2500
      %v2586 = vadd.f32 %v2308, %v2503
      %v2587 = vadd.f32 %v2309, %v2506
      %v2588 = vadd.f32 %v2310, %v2509
      %v2589 = vadd.f32 %v2311, %v2512
      %v2590 = vadd.f32 %v2312, %v2515
      %v2591 = vadd.f32 %v2313, %v2518
      %v2592 = vadd.f32 %v2314, %v2521
      %v2593 = vadd.f32 %v2315, %v2524
      %v2594 = vadd.f32 %v2316, %v2527
      %v2595 = vadd.f32 %v2317, %v2530
      %v2596 = vadd.f32 %v2318, %v2533
      %v2597 = vadd.f32 %v2319, %v2536
      %v2598 = vadd.f32 %v2320, %v2539
      %v2599 = vadd.f32 %v2321, %v2542
      %v2600 = vadd.f32 %v2322, %v2545
      %v2601 = vadd.f32 %v2323, %v2548
      %v2602 = vadd.f32 %v2324, %v2551
      %v2603 = vadd.f32 %v2325, %v2554
      %v2604 = vadd.f32 %v2326, %v2557
      %v2605 = vadd.f32 %v2327, %v2560
      %v2606 = vadd.f32 %v2328, %v2563
      %v2607 = vadd.f32 %v2329, %v2566
      %v2608 = vadd.f32 %v2330, %v2569
      %v2609 = vadd.f32 %v2331, %v2572
      %v2610 = vadd.f32 %v2332, %v2575
      %v2611 = vadd.f32 %v2333, %v2578
      %s2612 = scalar_lea.vmem [#allocation2], 48
      %v2613 = vld [vmem:[%s2612] sm:$0xff]
      %v2614 = vld [vmem:[%s2612 + $0x8] sm:$0xff]
      %v2615 = vld [vmem:[%s2612 + $0x18] sm:$0xff]
      %v2616 = vld [vmem:[%s2612 + $0x20] sm:$0xff]
      %v2617 = vld [vmem:[%s2612 + $0x30] sm:$0xff]
      %v2618 = vld [vmem:[%s2612 + $0x38] sm:$0xff]
      %v2619 = vld [vmem:[%s2612 + $0x48] sm:$0xff]
      %v2620 = vld [vmem:[%s2612 + $0x50] sm:$0xff]
      %v2621 = vld [vmem:[%s2612 + $0x60] sm:$0xff]
      %v2622 = vld [vmem:[%s2612 + $0x68] sm:$0xff]
      %v2623 = vld [vmem:[%s2612 + $0x78] sm:$0xff]
      %v2624 = vld [vmem:[%s2612 + $0x80] sm:$0xff]
      %v2625 = vld [vmem:[%s2612 + $0x90] sm:$0xff]
      %v2626 = vld [vmem:[%s2612 + $0x98] sm:$0xff]
      %v2627 = vld [vmem:[%s2612 + $0xa8] sm:$0xff]
      %v2628 = vld [vmem:[%s2612 + $0xb0] sm:$0xff]
      %v2629 = vld [vmem:[%s2612 + $0xc0] sm:$0xff]
      %v2630 = vld [vmem:[%s2612 + $0xc8] sm:$0xff]
      %v2631 = vld [vmem:[%s2612 + $0xd8] sm:$0xff]
      %v2632 = vld [vmem:[%s2612 + $0xe0] sm:$0xff]
      %v2633 = vld [vmem:[%s2612 + $0xf0] sm:$0xff]
      %v2634 = vld [vmem:[%s2612 + $0xf8] sm:$0xff]
      %v2635 = vld [vmem:[%s2612 + $0x108] sm:$0xff]
      %v2636 = vld [vmem:[%s2612 + $0x110] sm:$0xff]
      %v2637 = vld [vmem:[%s2612 + $0x120] sm:$0xff]
      %v2638 = vld [vmem:[%s2612 + $0x128] sm:$0xff]
      %v2639 = vld [vmem:[%s2612 + $0x138] sm:$0xff]
      %v2640 = vld [vmem:[%s2612 + $0x140] sm:$0xff]
      %v2641 = vld [vmem:[%s2612 + $0x150] sm:$0xff]
      %v2642 = vld [vmem:[%s2612 + $0x158] sm:$0xff]
      %v2643 = vld [vmem:[%s2612 + $0x168] sm:$0xff]
      %v2644 = vld [vmem:[%s2612 + $0x170] sm:$0xff]
      %s2645 = scalar_lea.vmem %s3, 12
      %v2646 = vld [vmem:[%s2645] sm:$0x3]
      %v2648 = vsel %vm829, %v2613, 0
      %v2651 = vsel %vm829, %v2614, 0
      %v2654 = vsel %vm829, %v2615, 0
      %v2657 = vsel %vm829, %v2616, 0
      %v2660 = vsel %vm829, %v2617, 0
      %v2663 = vsel %vm829, %v2618, 0
      %v2666 = vsel %vm829, %v2619, 0
      %v2669 = vsel %vm829, %v2620, 0
      %v2672 = vsel %vm829, %v2621, 0
      %v2675 = vsel %vm829, %v2622, 0
      %v2678 = vsel %vm829, %v2623, 0
      %v2681 = vsel %vm829, %v2624, 0
      %v2684 = vsel %vm829, %v2625, 0
      %v2687 = vsel %vm829, %v2626, 0
      %v2690 = vsel %vm829, %v2627, 0
      %v2693 = vsel %vm829, %v2628, 0
      %v2696 = vsel %vm829, %v2629, 0
      %v2699 = vsel %vm829, %v2630, 0
      %v2702 = vsel %vm829, %v2631, 0
      %v2705 = vsel %vm829, %v2632, 0
      %v2708 = vsel %vm829, %v2633, 0
      %v2711 = vsel %vm829, %v2634, 0
      %v2714 = vsel %vm829, %v2635, 0
      %v2717 = vsel %vm829, %v2636, 0
      %v2720 = vsel %vm829, %v2637, 0
      %v2723 = vsel %vm829, %v2638, 0
      %v2726 = vsel %vm829, %v2639, 0
      %v2729 = vsel %vm829, %v2640, 0
      %v2732 = vsel %vm829, %v2641, 0
      %v2735 = vsel %vm829, %v2642, 0
      %v2738 = vsel %vm829, %v2643, 0
      %v2741 = vsel %vm829, %v2644, 0
      %v2744 = vsel %vm1073, %v2646, 0
      %2746 = vmatpush.msra.mxu0 0.0
      %2747 = vmatpush.msra.mxu0 0.0
      %2748 = vmatpush.msra.mxu0 0.0
      %2749 = vmatpush.msra.mxu0 0.0
      %2750 = vmatpush.msra.mxu0 0.0
      %2751 = vmatpush.msra.mxu0 0.0
      %2752 = vmatpush.msra.mxu0 0.0
      %2753 = vmatpush.msra.mxu0 0.0
      %2754 = vmatpush.msra.mxu0 0.0
      %2755 = vmatpush.msra.mxu0 0.0
      %2756 = vmatpush.msra.mxu0 0.0
      %2757 = vmatpush.msra.mxu0 0.0
      %2758 = vmatpush.msra.mxu0 0.0
      %2759 = vmatpush.msra.mxu0 0.0
      %2760 = vmatpush.msra.mxu0 0.0
      %2761 = vmatpush.msra.mxu0 %v2744
      %2762 = vmatmul.f32.gmra.mxu0 %v2648
      %v2763 = vpop.f32.mrf.mxu0
      %v2764 = vadd.f32 0.0, %v2763
      %2765 = vmatmul.f32.gmra.mxu0 %v2651
      %v2766 = vpop.f32.mrf.mxu0
      %v2767 = vadd.f32 0.0, %v2766
      %2768 = vmatmul.f32.gmra.mxu0 %v2654
      %v2769 = vpop.f32.mrf.mxu0
      %v2770 = vadd.f32 0.0, %v2769
      %2771 = vmatmul.f32.gmra.mxu0 %v2657
      %v2772 = vpop.f32.mrf.mxu0
      %v2773 = vadd.f32 0.0, %v2772
      %2774 = vmatmul.f32.gmra.mxu0 %v2660
      %v2775 = vpop.f32.mrf.mxu0
      %v2776 = vadd.f32 0.0, %v2775
      %2777 = vmatmul.f32.gmra.mxu0 %v2663
      %v2778 = vpop.f32.mrf.mxu0
      %v2779 = vadd.f32 0.0, %v2778
      %2780 = vmatmul.f32.gmra.mxu0 %v2666
      %v2781 = vpop.f32.mrf.mxu0
      %v2782 = vadd.f32 0.0, %v2781
      %2783 = vmatmul.f32.gmra.mxu0 %v2669
      %v2784 = vpop.f32.mrf.mxu0
      %v2785 = vadd.f32 0.0, %v2784
      %2786 = vmatmul.f32.gmra.mxu0 %v2672
      %v2787 = vpop.f32.mrf.mxu0
      %v2788 = vadd.f32 0.0, %v2787
      %2789 = vmatmul.f32.gmra.mxu0 %v2675
      %v2790 = vpop.f32.mrf.mxu0
      %v2791 = vadd.f32 0.0, %v2790
      %2792 = vmatmul.f32.gmra.mxu0 %v2678
      %v2793 = vpop.f32.mrf.mxu0
      %v2794 = vadd.f32 0.0, %v2793
      %2795 = vmatmul.f32.gmra.mxu0 %v2681
      %v2796 = vpop.f32.mrf.mxu0
      %v2797 = vadd.f32 0.0, %v2796
      %2798 = vmatmul.f32.gmra.mxu0 %v2684
      %v2799 = vpop.f32.mrf.mxu0
      %v2800 = vadd.f32 0.0, %v2799
      %2801 = vmatmul.f32.gmra.mxu0 %v2687
      %v2802 = vpop.f32.mrf.mxu0
      %v2803 = vadd.f32 0.0, %v2802
      %2804 = vmatmul.f32.gmra.mxu0 %v2690
      %v2805 = vpop.f32.mrf.mxu0
      %v2806 = vadd.f32 0.0, %v2805
      %2807 = vmatmul.f32.gmra.mxu0 %v2693
      %v2808 = vpop.f32.mrf.mxu0
      %v2809 = vadd.f32 0.0, %v2808
      %2810 = vmatmul.f32.gmra.mxu0 %v2696
      %v2811 = vpop.f32.mrf.mxu0
      %v2812 = vadd.f32 0.0, %v2811
      %2813 = vmatmul.f32.gmra.mxu0 %v2699
      %v2814 = vpop.f32.mrf.mxu0
      %v2815 = vadd.f32 0.0, %v2814
      %2816 = vmatmul.f32.gmra.mxu0 %v2702
      %v2817 = vpop.f32.mrf.mxu0
      %v2818 = vadd.f32 0.0, %v2817
      %2819 = vmatmul.f32.gmra.mxu0 %v2705
      %v2820 = vpop.f32.mrf.mxu0
      %v2821 = vadd.f32 0.0, %v2820
      %2822 = vmatmul.f32.gmra.mxu0 %v2708
      %v2823 = vpop.f32.mrf.mxu0
      %v2824 = vadd.f32 0.0, %v2823
      %2825 = vmatmul.f32.gmra.mxu0 %v2711
      %v2826 = vpop.f32.mrf.mxu0
      %v2827 = vadd.f32 0.0, %v2826
      %2828 = vmatmul.f32.gmra.mxu0 %v2714
      %v2829 = vpop.f32.mrf.mxu0
      %v2830 = vadd.f32 0.0, %v2829
      %2831 = vmatmul.f32.gmra.mxu0 %v2717
      %v2832 = vpop.f32.mrf.mxu0
      %v2833 = vadd.f32 0.0, %v2832
      %2834 = vmatmul.f32.gmra.mxu0 %v2720
      %v2835 = vpop.f32.mrf.mxu0
      %v2836 = vadd.f32 0.0, %v2835
      %2837 = vmatmul.f32.gmra.mxu0 %v2723
      %v2838 = vpop.f32.mrf.mxu0
      %v2839 = vadd.f32 0.0, %v2838
      %2840 = vmatmul.f32.gmra.mxu0 %v2726
      %v2841 = vpop.f32.mrf.mxu0
      %v2842 = vadd.f32 0.0, %v2841
      %2843 = vmatmul.f32.gmra.mxu0 %v2729
      %v2844 = vpop.f32.mrf.mxu0
      %v2845 = vadd.f32 0.0, %v2844
      %2846 = vmatmul.f32.gmra.mxu0 %v2732
      %v2847 = vpop.f32.mrf.mxu0
      %v2848 = vadd.f32 0.0, %v2847
      %2849 = vmatmul.f32.gmra.mxu0 %v2735
      %v2850 = vpop.f32.mrf.mxu0
      %v2851 = vadd.f32 0.0, %v2850
      %2852 = vmatmul.f32.gmra.mxu0 %v2738
      %v2853 = vpop.f32.mrf.mxu0
      %v2854 = vadd.f32 0.0, %v2853
      %2855 = vmatmul.f32.gmra.mxu0 %v2741
      %v2856 = vpop.f32.mrf.mxu0
      %v2857 = vadd.f32 0.0, %v2856
      %2858 = vdwg.mxu0
      %v2859 = vadd.f32 %v2580, %v2764
      %v2860 = vadd.f32 %v2581, %v2767
      %v2861 = vadd.f32 %v2582, %v2770
      %v2862 = vadd.f32 %v2583, %v2773
      %v2863 = vadd.f32 %v2584, %v2776
      %v2864 = vadd.f32 %v2585, %v2779
      %v2865 = vadd.f32 %v2586, %v2782
      %v2866 = vadd.f32 %v2587, %v2785
      %v2867 = vadd.f32 %v2588, %v2788
      %v2868 = vadd.f32 %v2589, %v2791
      %v2869 = vadd.f32 %v2590, %v2794
      %v2870 = vadd.f32 %v2591, %v2797
      %v2871 = vadd.f32 %v2592, %v2800
      %v2872 = vadd.f32 %v2593, %v2803
      %v2873 = vadd.f32 %v2594, %v2806
      %v2874 = vadd.f32 %v2595, %v2809
      %v2875 = vadd.f32 %v2596, %v2812
      %v2876 = vadd.f32 %v2597, %v2815
      %v2877 = vadd.f32 %v2598, %v2818
      %v2878 = vadd.f32 %v2599, %v2821
      %v2879 = vadd.f32 %v2600, %v2824
      %v2880 = vadd.f32 %v2601, %v2827
      %v2881 = vadd.f32 %v2602, %v2830
      %v2882 = vadd.f32 %v2603, %v2833
      %v2883 = vadd.f32 %v2604, %v2836
      %v2884 = vadd.f32 %v2605, %v2839
      %v2885 = vadd.f32 %v2606, %v2842
      %v2886 = vadd.f32 %v2607, %v2845
      %v2887 = vadd.f32 %v2608, %v2848
      %v2888 = vadd.f32 %v2609, %v2851
      %v2889 = vadd.f32 %v2610, %v2854
      %v2890 = vadd.f32 %v2611, %v2857
      %v2891 = vld [vmem:[%s2612 + $0x1] sm:$0xff]
      %v2892 = vld [vmem:[%s2612 + $0x9] sm:$0xff]
      %v2893 = vld [vmem:[%s2612 + $0x19] sm:$0xff]
      %v2894 = vld [vmem:[%s2612 + $0x21] sm:$0xff]
      %v2895 = vld [vmem:[%s2612 + $0x31] sm:$0xff]
      %v2896 = vld [vmem:[%s2612 + $0x39] sm:$0xff]
      %v2897 = vld [vmem:[%s2612 + $0x49] sm:$0xff]
      %v2898 = vld [vmem:[%s2612 + $0x51] sm:$0xff]
      %v2899 = vld [vmem:[%s2612 + $0x61] sm:$0xff]
      %v2900 = vld [vmem:[%s2612 + $0x69] sm:$0xff]
      %v2901 = vld [vmem:[%s2612 + $0x79] sm:$0xff]
      %v2902 = vld [vmem:[%s2612 + $0x81] sm:$0xff]
      %v2903 = vld [vmem:[%s2612 + $0x91] sm:$0xff]
      %v2904 = vld [vmem:[%s2612 + $0x99] sm:$0xff]
      %v2905 = vld [vmem:[%s2612 + $0xa9] sm:$0xff]
      %v2906 = vld [vmem:[%s2612 + $0xb1] sm:$0xff]
      %v2907 = vld [vmem:[%s2612 + $0xc1] sm:$0xff]
      %v2908 = vld [vmem:[%s2612 + $0xc9] sm:$0xff]
      %v2909 = vld [vmem:[%s2612 + $0xd9] sm:$0xff]
      %v2910 = vld [vmem:[%s2612 + $0xe1] sm:$0xff]
      %v2911 = vld [vmem:[%s2612 + $0xf1] sm:$0xff]
      %v2912 = vld [vmem:[%s2612 + $0xf9] sm:$0xff]
      %v2913 = vld [vmem:[%s2612 + $0x109] sm:$0xff]
      %v2914 = vld [vmem:[%s2612 + $0x111] sm:$0xff]
      %v2915 = vld [vmem:[%s2612 + $0x121] sm:$0xff]
      %v2916 = vld [vmem:[%s2612 + $0x129] sm:$0xff]
      %v2917 = vld [vmem:[%s2612 + $0x139] sm:$0xff]
      %v2918 = vld [vmem:[%s2612 + $0x141] sm:$0xff]
      %v2919 = vld [vmem:[%s2612 + $0x151] sm:$0xff]
      %v2920 = vld [vmem:[%s2612 + $0x159] sm:$0xff]
      %v2921 = vld [vmem:[%s2612 + $0x169] sm:$0xff]
      %v2922 = vld [vmem:[%s2612 + $0x171] sm:$0xff]
      %s2923 = scalar_lea.vmem %s3, 14
      %v2924 = vld [vmem:[%s2923] sm:$0x3]
      %v2926 = vsel %vm829, %v2891, 0
      %v2929 = vsel %vm829, %v2892, 0
      %v2932 = vsel %vm829, %v2893, 0
      %v2935 = vsel %vm829, %v2894, 0
      %v2938 = vsel %vm829, %v2895, 0
      %v2941 = vsel %vm829, %v2896, 0
      %v2944 = vsel %vm829, %v2897, 0
      %v2947 = vsel %vm829, %v2898, 0
      %v2950 = vsel %vm829, %v2899, 0
      %v2953 = vsel %vm829, %v2900, 0
      %v2956 = vsel %vm829, %v2901, 0
      %v2959 = vsel %vm829, %v2902, 0
      %v2962 = vsel %vm829, %v2903, 0
      %v2965 = vsel %vm829, %v2904, 0
      %v2968 = vsel %vm829, %v2905, 0
      %v2971 = vsel %vm829, %v2906, 0
      %v2974 = vsel %vm829, %v2907, 0
      %v2977 = vsel %vm829, %v2908, 0
      %v2980 = vsel %vm829, %v2909, 0
      %v2983 = vsel %vm829, %v2910, 0
      %v2986 = vsel %vm829, %v2911, 0
      %v2989 = vsel %vm829, %v2912, 0
      %v2992 = vsel %vm829, %v2913, 0
      %v2995 = vsel %vm829, %v2914, 0
      %v2998 = vsel %vm829, %v2915, 0
      %v3001 = vsel %vm829, %v2916, 0
      %v3004 = vsel %vm829, %v2917, 0
      %v3007 = vsel %vm829, %v2918, 0
      %v3010 = vsel %vm829, %v2919, 0
      %v3013 = vsel %vm829, %v2920, 0
      %v3016 = vsel %vm829, %v2921, 0
      %v3019 = vsel %vm829, %v2922, 0
      %v3022 = vsel %vm1073, %v2924, 0
      %3024 = vmatpush.msra.mxu0 0.0
      %3025 = vmatpush.msra.mxu0 0.0
      %3026 = vmatpush.msra.mxu0 0.0
      %3027 = vmatpush.msra.mxu0 0.0
      %3028 = vmatpush.msra.mxu0 0.0
      %3029 = vmatpush.msra.mxu0 0.0
      %3030 = vmatpush.msra.mxu0 0.0
      %3031 = vmatpush.msra.mxu0 0.0
      %3032 = vmatpush.msra.mxu0 0.0
      %3033 = vmatpush.msra.mxu0 0.0
      %3034 = vmatpush.msra.mxu0 0.0
      %3035 = vmatpush.msra.mxu0 0.0
      %3036 = vmatpush.msra.mxu0 0.0
      %3037 = vmatpush.msra.mxu0 0.0
      %3038 = vmatpush.msra.mxu0 0.0
      %3039 = vmatpush.msra.mxu0 %v3022
      %3040 = vmatmul.f32.gmra.mxu0 %v2926
      %v3041 = vpop.f32.mrf.mxu0
      %v3042 = vadd.f32 0.0, %v3041
      %3043 = vmatmul.f32.gmra.mxu0 %v2929
      %v3044 = vpop.f32.mrf.mxu0
      %v3045 = vadd.f32 0.0, %v3044
      %3046 = vmatmul.f32.gmra.mxu0 %v2932
      %v3047 = vpop.f32.mrf.mxu0
      %v3048 = vadd.f32 0.0, %v3047
      %3049 = vmatmul.f32.gmra.mxu0 %v2935
      %v3050 = vpop.f32.mrf.mxu0
      %v3051 = vadd.f32 0.0, %v3050
      %3052 = vmatmul.f32.gmra.mxu0 %v2938
      %v3053 = vpop.f32.mrf.mxu0
      %v3054 = vadd.f32 0.0, %v3053
      %3055 = vmatmul.f32.gmra.mxu0 %v2941
      %v3056 = vpop.f32.mrf.mxu0
      %v3057 = vadd.f32 0.0, %v3056
      %3058 = vmatmul.f32.gmra.mxu0 %v2944
      %v3059 = vpop.f32.mrf.mxu0
      %v3060 = vadd.f32 0.0, %v3059
      %3061 = vmatmul.f32.gmra.mxu0 %v2947
      %v3062 = vpop.f32.mrf.mxu0
      %v3063 = vadd.f32 0.0, %v3062
      %3064 = vmatmul.f32.gmra.mxu0 %v2950
      %v3065 = vpop.f32.mrf.mxu0
      %v3066 = vadd.f32 0.0, %v3065
      %3067 = vmatmul.f32.gmra.mxu0 %v2953
      %v3068 = vpop.f32.mrf.mxu0
      %v3069 = vadd.f32 0.0, %v3068
      %3070 = vmatmul.f32.gmra.mxu0 %v2956
      %v3071 = vpop.f32.mrf.mxu0
      %v3072 = vadd.f32 0.0, %v3071
      %3073 = vmatmul.f32.gmra.mxu0 %v2959
      %v3074 = vpop.f32.mrf.mxu0
      %v3075 = vadd.f32 0.0, %v3074
      %3076 = vmatmul.f32.gmra.mxu0 %v2962
      %v3077 = vpop.f32.mrf.mxu0
      %v3078 = vadd.f32 0.0, %v3077
      %3079 = vmatmul.f32.gmra.mxu0 %v2965
      %v3080 = vpop.f32.mrf.mxu0
      %v3081 = vadd.f32 0.0, %v3080
      %3082 = vmatmul.f32.gmra.mxu0 %v2968
      %v3083 = vpop.f32.mrf.mxu0
      %v3084 = vadd.f32 0.0, %v3083
      %3085 = vmatmul.f32.gmra.mxu0 %v2971
      %v3086 = vpop.f32.mrf.mxu0
      %v3087 = vadd.f32 0.0, %v3086
      %3088 = vmatmul.f32.gmra.mxu0 %v2974
      %v3089 = vpop.f32.mrf.mxu0
      %v3090 = vadd.f32 0.0, %v3089
      %3091 = vmatmul.f32.gmra.mxu0 %v2977
      %v3092 = vpop.f32.mrf.mxu0
      %v3093 = vadd.f32 0.0, %v3092
      %3094 = vmatmul.f32.gmra.mxu0 %v2980
      %v3095 = vpop.f32.mrf.mxu0
      %v3096 = vadd.f32 0.0, %v3095
      %3097 = vmatmul.f32.gmra.mxu0 %v2983
      %v3098 = vpop.f32.mrf.mxu0
      %v3099 = vadd.f32 0.0, %v3098
      %3100 = vmatmul.f32.gmra.mxu0 %v2986
      %v3101 = vpop.f32.mrf.mxu0
      %v3102 = vadd.f32 0.0, %v3101
      %3103 = vmatmul.f32.gmra.mxu0 %v2989
      %v3104 = vpop.f32.mrf.mxu0
      %v3105 = vadd.f32 0.0, %v3104
      %3106 = vmatmul.f32.gmra.mxu0 %v2992
      %v3107 = vpop.f32.mrf.mxu0
      %v3108 = vadd.f32 0.0, %v3107
      %3109 = vmatmul.f32.gmra.mxu0 %v2995
      %v3110 = vpop.f32.mrf.mxu0
      %v3111 = vadd.f32 0.0, %v3110
      %3112 = vmatmul.f32.gmra.mxu0 %v2998
      %v3113 = vpop.f32.mrf.mxu0
      %v3114 = vadd.f32 0.0, %v3113
      %3115 = vmatmul.f32.gmra.mxu0 %v3001
      %v3116 = vpop.f32.mrf.mxu0
      %v3117 = vadd.f32 0.0, %v3116
      %3118 = vmatmul.f32.gmra.mxu0 %v3004
      %v3119 = vpop.f32.mrf.mxu0
      %v3120 = vadd.f32 0.0, %v3119
      %3121 = vmatmul.f32.gmra.mxu0 %v3007
      %v3122 = vpop.f32.mrf.mxu0
      %v3123 = vadd.f32 0.0, %v3122
      %3124 = vmatmul.f32.gmra.mxu0 %v3010
      %v3125 = vpop.f32.mrf.mxu0
      %v3126 = vadd.f32 0.0, %v3125
      %3127 = vmatmul.f32.gmra.mxu0 %v3013
      %v3128 = vpop.f32.mrf.mxu0
      %v3129 = vadd.f32 0.0, %v3128
      %3130 = vmatmul.f32.gmra.mxu0 %v3016
      %v3131 = vpop.f32.mrf.mxu0
      %v3132 = vadd.f32 0.0, %v3131
      %3133 = vmatmul.f32.gmra.mxu0 %v3019
      %v3134 = vpop.f32.mrf.mxu0
      %v3135 = vadd.f32 0.0, %v3134
      %3136 = vdwg.mxu0
      %v3137 = vadd.f32 %v2859, %v3042
      %v3138 = vadd.f32 %v2860, %v3045
      %v3139 = vadd.f32 %v2861, %v3048
      %v3140 = vadd.f32 %v2862, %v3051
      %v3141 = vadd.f32 %v2863, %v3054
      %v3142 = vadd.f32 %v2864, %v3057
      %v3143 = vadd.f32 %v2865, %v3060
      %v3144 = vadd.f32 %v2866, %v3063
      %v3145 = vadd.f32 %v2867, %v3066
      %v3146 = vadd.f32 %v2868, %v3069
      %v3147 = vadd.f32 %v2869, %v3072
      %v3148 = vadd.f32 %v2870, %v3075
      %v3149 = vadd.f32 %v2871, %v3078
      %v3150 = vadd.f32 %v2872, %v3081
      %v3151 = vadd.f32 %v2873, %v3084
      %v3152 = vadd.f32 %v2874, %v3087
      %v3153 = vadd.f32 %v2875, %v3090
      %v3154 = vadd.f32 %v2876, %v3093
      %v3155 = vadd.f32 %v2877, %v3096
      %v3156 = vadd.f32 %v2878, %v3099
      %v3157 = vadd.f32 %v2879, %v3102
      %v3158 = vadd.f32 %v2880, %v3105
      %v3159 = vadd.f32 %v2881, %v3108
      %v3160 = vadd.f32 %v2882, %v3111
      %v3161 = vadd.f32 %v2883, %v3114
      %v3162 = vadd.f32 %v2884, %v3117
      %v3163 = vadd.f32 %v2885, %v3120
      %v3164 = vadd.f32 %v2886, %v3123
      %v3165 = vadd.f32 %v2887, %v3126
      %v3166 = vadd.f32 %v2888, %v3129
      %v3167 = vadd.f32 %v2889, %v3132
      %v3168 = vadd.f32 %v2890, %v3135
      %v3169 = vld [vmem:[%s2612 + $0x2] sm:$0xff]
      %v3170 = vld [vmem:[%s2612 + $0xa] sm:$0xff]
      %v3171 = vld [vmem:[%s2612 + $0x1a] sm:$0xff]
      %v3172 = vld [vmem:[%s2612 + $0x22] sm:$0xff]
      %v3173 = vld [vmem:[%s2612 + $0x32] sm:$0xff]
      %v3174 = vld [vmem:[%s2612 + $0x3a] sm:$0xff]
      %v3175 = vld [vmem:[%s2612 + $0x4a] sm:$0xff]
      %v3176 = vld [vmem:[%s2612 + $0x52] sm:$0xff]
      %v3177 = vld [vmem:[%s2612 + $0x62] sm:$0xff]
      %v3178 = vld [vmem:[%s2612 + $0x6a] sm:$0xff]
      %v3179 = vld [vmem:[%s2612 + $0x7a] sm:$0xff]
      %v3180 = vld [vmem:[%s2612 + $0x82] sm:$0xff]
      %v3181 = vld [vmem:[%s2612 + $0x92] sm:$0xff]
      %v3182 = vld [vmem:[%s2612 + $0x9a] sm:$0xff]
      %v3183 = vld [vmem:[%s2612 + $0xaa] sm:$0xff]
      %v3184 = vld [vmem:[%s2612 + $0xb2] sm:$0xff]
      %v3185 = vld [vmem:[%s2612 + $0xc2] sm:$0xff]
      %v3186 = vld [vmem:[%s2612 + $0xca] sm:$0xff]
      %v3187 = vld [vmem:[%s2612 + $0xda] sm:$0xff]
      %v3188 = vld [vmem:[%s2612 + $0xe2] sm:$0xff]
      %v3189 = vld [vmem:[%s2612 + $0xf2] sm:$0xff]
      %v3190 = vld [vmem:[%s2612 + $0xfa] sm:$0xff]
      %v3191 = vld [vmem:[%s2612 + $0x10a] sm:$0xff]
      %v3192 = vld [vmem:[%s2612 + $0x112] sm:$0xff]
      %v3193 = vld [vmem:[%s2612 + $0x122] sm:$0xff]
      %v3194 = vld [vmem:[%s2612 + $0x12a] sm:$0xff]
      %v3195 = vld [vmem:[%s2612 + $0x13a] sm:$0xff]
      %v3196 = vld [vmem:[%s2612 + $0x142] sm:$0xff]
      %v3197 = vld [vmem:[%s2612 + $0x152] sm:$0xff]
      %v3198 = vld [vmem:[%s2612 + $0x15a] sm:$0xff]
      %v3199 = vld [vmem:[%s2612 + $0x16a] sm:$0xff]
      %v3200 = vld [vmem:[%s2612 + $0x172] sm:$0xff]
      %s3201 = scalar_lea.vmem %s3, 16
      %v3202 = vld [vmem:[%s3201] sm:$0x3]
      %v3204 = vsel %vm829, %v3169, 0
      %v3207 = vsel %vm829, %v3170, 0
      %v3210 = vsel %vm829, %v3171, 0
      %v3213 = vsel %vm829, %v3172, 0
      %v3216 = vsel %vm829, %v3173, 0
      %v3219 = vsel %vm829, %v3174, 0
      %v3222 = vsel %vm829, %v3175, 0
      %v3225 = vsel %vm829, %v3176, 0
      %v3228 = vsel %vm829, %v3177, 0
      %v3231 = vsel %vm829, %v3178, 0
      %v3234 = vsel %vm829, %v3179, 0
      %v3237 = vsel %vm829, %v3180, 0
      %v3240 = vsel %vm829, %v3181, 0
      %v3243 = vsel %vm829, %v3182, 0
      %v3246 = vsel %vm829, %v3183, 0
      %v3249 = vsel %vm829, %v3184, 0
      %v3252 = vsel %vm829, %v3185, 0
      %v3255 = vsel %vm829, %v3186, 0
      %v3258 = vsel %vm829, %v3187, 0
      %v3261 = vsel %vm829, %v3188, 0
      %v3264 = vsel %vm829, %v3189, 0
      %v3267 = vsel %vm829, %v3190, 0
      %v3270 = vsel %vm829, %v3191, 0
      %v3273 = vsel %vm829, %v3192, 0
      %v3276 = vsel %vm829, %v3193, 0
      %v3279 = vsel %vm829, %v3194, 0
      %v3282 = vsel %vm829, %v3195, 0
      %v3285 = vsel %vm829, %v3196, 0
      %v3288 = vsel %vm829, %v3197, 0
      %v3291 = vsel %vm829, %v3198, 0
      %v3294 = vsel %vm829, %v3199, 0
      %v3297 = vsel %vm829, %v3200, 0
      %v3300 = vsel %vm1073, %v3202, 0
      %3302 = vmatpush.msra.mxu0 0.0
      %3303 = vmatpush.msra.mxu0 0.0
      %3304 = vmatpush.msra.mxu0 0.0
      %3305 = vmatpush.msra.mxu0 0.0
      %3306 = vmatpush.msra.mxu0 0.0
      %3307 = vmatpush.msra.mxu0 0.0
      %3308 = vmatpush.msra.mxu0 0.0
      %3309 = vmatpush.msra.mxu0 0.0
      %3310 = vmatpush.msra.mxu0 0.0
      %3311 = vmatpush.msra.mxu0 0.0
      %3312 = vmatpush.msra.mxu0 0.0
      %3313 = vmatpush.msra.mxu0 0.0
      %3314 = vmatpush.msra.mxu0 0.0
      %3315 = vmatpush.msra.mxu0 0.0
      %3316 = vmatpush.msra.mxu0 0.0
      %3317 = vmatpush.msra.mxu0 %v3300
      %3318 = vmatmul.f32.gmra.mxu0 %v3204
      %v3319 = vpop.f32.mrf.mxu0
      %v3320 = vadd.f32 0.0, %v3319
      %3321 = vmatmul.f32.gmra.mxu0 %v3207
      %v3322 = vpop.f32.mrf.mxu0
      %v3323 = vadd.f32 0.0, %v3322
      %3324 = vmatmul.f32.gmra.mxu0 %v3210
      %v3325 = vpop.f32.mrf.mxu0
      %v3326 = vadd.f32 0.0, %v3325
      %3327 = vmatmul.f32.gmra.mxu0 %v3213
      %v3328 = vpop.f32.mrf.mxu0
      %v3329 = vadd.f32 0.0, %v3328
      %3330 = vmatmul.f32.gmra.mxu0 %v3216
      %v3331 = vpop.f32.mrf.mxu0
      %v3332 = vadd.f32 0.0, %v3331
      %3333 = vmatmul.f32.gmra.mxu0 %v3219
      %v3334 = vpop.f32.mrf.mxu0
      %v3335 = vadd.f32 0.0, %v3334
      %3336 = vmatmul.f32.gmra.mxu0 %v3222
      %v3337 = vpop.f32.mrf.mxu0
      %v3338 = vadd.f32 0.0, %v3337
      %3339 = vmatmul.f32.gmra.mxu0 %v3225
      %v3340 = vpop.f32.mrf.mxu0
      %v3341 = vadd.f32 0.0, %v3340
      %3342 = vmatmul.f32.gmra.mxu0 %v3228
      %v3343 = vpop.f32.mrf.mxu0
      %v3344 = vadd.f32 0.0, %v3343
      %3345 = vmatmul.f32.gmra.mxu0 %v3231
      %v3346 = vpop.f32.mrf.mxu0
      %v3347 = vadd.f32 0.0, %v3346
      %3348 = vmatmul.f32.gmra.mxu0 %v3234
      %v3349 = vpop.f32.mrf.mxu0
      %v3350 = vadd.f32 0.0, %v3349
      %3351 = vmatmul.f32.gmra.mxu0 %v3237
      %v3352 = vpop.f32.mrf.mxu0
      %v3353 = vadd.f32 0.0, %v3352
      %3354 = vmatmul.f32.gmra.mxu0 %v3240
      %v3355 = vpop.f32.mrf.mxu0
      %v3356 = vadd.f32 0.0, %v3355
      %3357 = vmatmul.f32.gmra.mxu0 %v3243
      %v3358 = vpop.f32.mrf.mxu0
      %v3359 = vadd.f32 0.0, %v3358
      %3360 = vmatmul.f32.gmra.mxu0 %v3246
      %v3361 = vpop.f32.mrf.mxu0
      %v3362 = vadd.f32 0.0, %v3361
      %3363 = vmatmul.f32.gmra.mxu0 %v3249
      %v3364 = vpop.f32.mrf.mxu0
      %v3365 = vadd.f32 0.0, %v3364
      %3366 = vmatmul.f32.gmra.mxu0 %v3252
      %v3367 = vpop.f32.mrf.mxu0
      %v3368 = vadd.f32 0.0, %v3367
      %3369 = vmatmul.f32.gmra.mxu0 %v3255
      %v3370 = vpop.f32.mrf.mxu0
      %v3371 = vadd.f32 0.0, %v3370
      %3372 = vmatmul.f32.gmra.mxu0 %v3258
      %v3373 = vpop.f32.mrf.mxu0
      %v3374 = vadd.f32 0.0, %v3373
      %3375 = vmatmul.f32.gmra.mxu0 %v3261
      %v3376 = vpop.f32.mrf.mxu0
      %v3377 = vadd.f32 0.0, %v3376
      %3378 = vmatmul.f32.gmra.mxu0 %v3264
      %v3379 = vpop.f32.mrf.mxu0
      %v3380 = vadd.f32 0.0, %v3379
      %3381 = vmatmul.f32.gmra.mxu0 %v3267
      %v3382 = vpop.f32.mrf.mxu0
      %v3383 = vadd.f32 0.0, %v3382
      %3384 = vmatmul.f32.gmra.mxu0 %v3270
      %v3385 = vpop.f32.mrf.mxu0
      %v3386 = vadd.f32 0.0, %v3385
      %3387 = vmatmul.f32.gmra.mxu0 %v3273
      %v3388 = vpop.f32.mrf.mxu0
      %v3389 = vadd.f32 0.0, %v3388
      %3390 = vmatmul.f32.gmra.mxu0 %v3276
      %v3391 = vpop.f32.mrf.mxu0
      %v3392 = vadd.f32 0.0, %v3391
      %3393 = vmatmul.f32.gmra.mxu0 %v3279
      %v3394 = vpop.f32.mrf.mxu0
      %v3395 = vadd.f32 0.0, %v3394
      %3396 = vmatmul.f32.gmra.mxu0 %v3282
      %v3397 = vpop.f32.mrf.mxu0
      %v3398 = vadd.f32 0.0, %v3397
      %3399 = vmatmul.f32.gmra.mxu0 %v3285
      %v3400 = vpop.f32.mrf.mxu0
      %v3401 = vadd.f32 0.0, %v3400
      %3402 = vmatmul.f32.gmra.mxu0 %v3288
      %v3403 = vpop.f32.mrf.mxu0
      %v3404 = vadd.f32 0.0, %v3403
      %3405 = vmatmul.f32.gmra.mxu0 %v3291
      %v3406 = vpop.f32.mrf.mxu0
      %v3407 = vadd.f32 0.0, %v3406
      %3408 = vmatmul.f32.gmra.mxu0 %v3294
      %v3409 = vpop.f32.mrf.mxu0
      %v3410 = vadd.f32 0.0, %v3409
      %3411 = vmatmul.f32.gmra.mxu0 %v3297
      %v3412 = vpop.f32.mrf.mxu0
      %v3413 = vadd.f32 0.0, %v3412
      %3414 = vdwg.mxu0
      %v3415 = vadd.f32 %v3137, %v3320
      %v3416 = vadd.f32 %v3138, %v3323
      %v3417 = vadd.f32 %v3139, %v3326
      %v3418 = vadd.f32 %v3140, %v3329
      %v3419 = vadd.f32 %v3141, %v3332
      %v3420 = vadd.f32 %v3142, %v3335
      %v3421 = vadd.f32 %v3143, %v3338
      %v3422 = vadd.f32 %v3144, %v3341
      %v3423 = vadd.f32 %v3145, %v3344
      %v3424 = vadd.f32 %v3146, %v3347
      %v3425 = vadd.f32 %v3147, %v3350
      %v3426 = vadd.f32 %v3148, %v3353
      %v3427 = vadd.f32 %v3149, %v3356
      %v3428 = vadd.f32 %v3150, %v3359
      %v3429 = vadd.f32 %v3151, %v3362
      %v3430 = vadd.f32 %v3152, %v3365
      %v3431 = vadd.f32 %v3153, %v3368
      %v3432 = vadd.f32 %v3154, %v3371
      %v3433 = vadd.f32 %v3155, %v3374
      %v3434 = vadd.f32 %v3156, %v3377
      %v3435 = vadd.f32 %v3157, %v3380
      %v3436 = vadd.f32 %v3158, %v3383
      %v3437 = vadd.f32 %v3159, %v3386
      %v3438 = vadd.f32 %v3160, %v3389
      %v3439 = vadd.f32 %v3161, %v3392
      %v3440 = vadd.f32 %v3162, %v3395
      %v3441 = vadd.f32 %v3163, %v3398
      %v3442 = vadd.f32 %v3164, %v3401
      %v3443 = vadd.f32 %v3165, %v3404
      %v3444 = vadd.f32 %v3166, %v3407
      %v3445 = vadd.f32 %v3167, %v3410
      %v3446 = vadd.f32 %v3168, %v3413
      %v3447 = vmax.f32 %v3415, 0.0
      %v3448 = vmax.f32 %v3416, 0.0
      %v3449 = vmax.f32 %v3417, 0.0
      %v3450 = vmax.f32 %v3418, 0.0
      %v3451 = vmax.f32 %v3419, 0.0
      %v3452 = vmax.f32 %v3420, 0.0
      %v3453 = vmax.f32 %v3421, 0.0
      %v3454 = vmax.f32 %v3422, 0.0
      %v3455 = vmax.f32 %v3423, 0.0
      %v3456 = vmax.f32 %v3424, 0.0
      %v3457 = vmax.f32 %v3425, 0.0
      %v3458 = vmax.f32 %v3426, 0.0
      %v3459 = vmax.f32 %v3427, 0.0
      %v3460 = vmax.f32 %v3428, 0.0
      %v3461 = vmax.f32 %v3429, 0.0
      %v3462 = vmax.f32 %v3430, 0.0
      %v3463 = vmax.f32 %v3431, 0.0
      %v3464 = vmax.f32 %v3432, 0.0
      %v3465 = vmax.f32 %v3433, 0.0
      %v3466 = vmax.f32 %v3434, 0.0
      %v3467 = vmax.f32 %v3435, 0.0
      %v3468 = vmax.f32 %v3436, 0.0
      %v3469 = vmax.f32 %v3437, 0.0
      %v3470 = vmax.f32 %v3438, 0.0
      %v3471 = vmax.f32 %v3439, 0.0
      %v3472 = vmax.f32 %v3440, 0.0
      %v3473 = vmax.f32 %v3441, 0.0
      %v3474 = vmax.f32 %v3442, 0.0
      %v3475 = vmax.f32 %v3443, 0.0
      %v3476 = vmax.f32 %v3444, 0.0
      %v3477 = vmax.f32 %v3445, 0.0
      %v3478 = vmax.f32 %v3446, 0.0
      %v3479 = vand.u32 2147483647, %v3415
      %v3480 = vand.u32 2147483647, %v3416
      %v3481 = vand.u32 2147483647, %v3417
      %v3482 = vand.u32 2147483647, %v3418
      %v3483 = vand.u32 2147483647, %v3419
      %v3484 = vand.u32 2147483647, %v3420
      %v3485 = vand.u32 2147483647, %v3421
      %v3486 = vand.u32 2147483647, %v3422
      %v3487 = vand.u32 2147483647, %v3423
      %v3488 = vand.u32 2147483647, %v3424
      %v3489 = vand.u32 2147483647, %v3425
      %v3490 = vand.u32 2147483647, %v3426
      %v3491 = vand.u32 2147483647, %v3427
      %v3492 = vand.u32 2147483647, %v3428
      %v3493 = vand.u32 2147483647, %v3429
      %v3494 = vand.u32 2147483647, %v3430
      %v3495 = vand.u32 2147483647, %v3431
      %v3496 = vand.u32 2147483647, %v3432
      %v3497 = vand.u32 2147483647, %v3433
      %v3498 = vand.u32 2147483647, %v3434
      %v3499 = vand.u32 2147483647, %v3435
      %v3500 = vand.u32 2147483647, %v3436
      %v3501 = vand.u32 2147483647, %v3437
      %v3502 = vand.u32 2147483647, %v3438
      %v3503 = vand.u32 2147483647, %v3439
      %v3504 = vand.u32 2147483647, %v3440
      %v3505 = vand.u32 2147483647, %v3441
      %v3506 = vand.u32 2147483647, %v3442
      %v3507 = vand.u32 2147483647, %v3443
      %v3508 = vand.u32 2147483647, %v3444
      %v3509 = vand.u32 2147483647, %v3445
      %v3510 = vand.u32 2147483647, %v3446
      %v3511 = vsub.f32 0.0, %v3479
      %v3512 = vsub.f32 0.0, %v3480
      %v3513 = vsub.f32 0.0, %v3481
      %v3514 = vsub.f32 0.0, %v3482
      %v3515 = vsub.f32 0.0, %v3483
      %v3516 = vsub.f32 0.0, %v3484
      %v3517 = vsub.f32 0.0, %v3485
      %v3518 = vsub.f32 0.0, %v3486
      %v3519 = vsub.f32 0.0, %v3487
      %v3520 = vsub.f32 0.0, %v3488
      %v3521 = vsub.f32 0.0, %v3489
      %v3522 = vsub.f32 0.0, %v3490
      %v3523 = vsub.f32 0.0, %v3491
      %v3524 = vsub.f32 0.0, %v3492
      %v3525 = vsub.f32 0.0, %v3493
      %v3526 = vsub.f32 0.0, %v3494
      %v3527 = vsub.f32 0.0, %v3495
      %v3528 = vsub.f32 0.0, %v3496
      %v3529 = vsub.f32 0.0, %v3497
      %v3530 = vsub.f32 0.0, %v3498
      %v3531 = vsub.f32 0.0, %v3499
      %v3532 = vsub.f32 0.0, %v3500
      %v3533 = vsub.f32 0.0, %v3501
      %v3534 = vsub.f32 0.0, %v3502
      %v3535 = vsub.f32 0.0, %v3503
      %v3536 = vsub.f32 0.0, %v3504
      %v3537 = vsub.f32 0.0, %v3505
      %v3538 = vsub.f32 0.0, %v3506
      %v3539 = vsub.f32 0.0, %v3507
      %v3540 = vsub.f32 0.0, %v3508
      %v3541 = vsub.f32 0.0, %v3509
      %v3542 = vsub.f32 0.0, %v3510
      %v3543 = vmul.f32 %v3511, 1.442695
      %v3544 = vpow.pop %v3543
      %v3545 = vmul.f32 %v3512, 1.442695
      %v3546 = vpow.pop %v3545
      %v3547 = vmul.f32 %v3513, 1.442695
      %v3548 = vpow.pop %v3547
      %v3549 = vmul.f32 %v3514, 1.442695
      %v3550 = vpow.pop %v3549
      %v3551 = vmul.f32 %v3515, 1.442695
      %v3552 = vpow.pop %v3551
      %v3553 = vmul.f32 %v3516, 1.442695
      %v3554 = vpow.pop %v3553
      %v3555 = vmul.f32 %v3517, 1.442695
      %v3556 = vpow.pop %v3555
      %v3557 = vmul.f32 %v3518, 1.442695
      %v3558 = vpow.pop %v3557
      %v3559 = vmul.f32 %v3519, 1.442695
      %v3560 = vpow.pop %v3559
      %v3561 = vmul.f32 %v3520, 1.442695
      %v3562 = vpow.pop %v3561
      %v3563 = vmul.f32 %v3521, 1.442695
      %v3564 = vpow.pop %v3563
      %v3565 = vmul.f32 %v3522, 1.442695
      %v3566 = vpow.pop %v3565
      %v3567 = vmul.f32 %v3523, 1.442695
      %v3568 = vpow.pop %v3567
      %v3569 = vmul.f32 %v3524, 1.442695
      %v3570 = vpow.pop %v3569
      %v3571 = vmul.f32 %v3525, 1.442695
      %v3572 = vpow.pop %v3571
      %v3573 = vmul.f32 %v3526, 1.442695
      %v3574 = vpow.pop %v3573
      %v3575 = vmul.f32 %v3527, 1.442695
      %v3576 = vpow.pop %v3575
      %v3577 = vmul.f32 %v3528, 1.442695
      %v3578 = vpow.pop %v3577
      %v3579 = vmul.f32 %v3529, 1.442695
      %v3580 = vpow.pop %v3579
      %v3581 = vmul.f32 %v3530, 1.442695
      %v3582 = vpow.pop %v3581
      %v3583 = vmul.f32 %v3531, 1.442695
      %v3584 = vpow.pop %v3583
      %v3585 = vmul.f32 %v3532, 1.442695
      %v3586 = vpow.pop %v3585
      %v3587 = vmul.f32 %v3533, 1.442695
      %v3588 = vpow.pop %v3587
      %v3589 = vmul.f32 %v3534, 1.442695
      %v3590 = vpow.pop %v3589
      %v3591 = vmul.f32 %v3535, 1.442695
      %v3592 = vpow.pop %v3591
      %v3593 = vmul.f32 %v3536, 1.442695
      %v3594 = vpow.pop %v3593
      %v3595 = vmul.f32 %v3537, 1.442695
      %v3596 = vpow.pop %v3595
      %v3597 = vmul.f32 %v3538, 1.442695
      %v3598 = vpow.pop %v3597
      %v3599 = vmul.f32 %v3539, 1.442695
      %v3600 = vpow.pop %v3599
      %v3601 = vmul.f32 %v3540, 1.442695
      %v3602 = vpow.pop %v3601
      %v3603 = vmul.f32 %v3541, 1.442695
      %v3604 = vpow.pop %v3603
      %v3605 = vmul.f32 %v3542, 1.442695
      %v3606 = vpow.pop %v3605
      %v3607 = vadd.f32 %v3544, 1.0
      %v3608 = vadd.f32 %v3546, 1.0
      %v3609 = vadd.f32 %v3548, 1.0
      %v3610 = vadd.f32 %v3550, 1.0
      %v3611 = vadd.f32 %v3552, 1.0
      %v3612 = vadd.f32 %v3554, 1.0
      %v3613 = vadd.f32 %v3556, 1.0
      %v3614 = vadd.f32 %v3558, 1.0
      %v3615 = vadd.f32 %v3560, 1.0
      %v3616 = vadd.f32 %v3562, 1.0
      %v3617 = vadd.f32 %v3564, 1.0
      %v3618 = vadd.f32 %v3566, 1.0
      %v3619 = vadd.f32 %v3568, 1.0
      %v3620 = vadd.f32 %v3570, 1.0
      %v3621 = vadd.f32 %v3572, 1.0
      %v3622 = vadd.f32 %v3574, 1.0
      %v3623 = vadd.f32 %v3576, 1.0
      %v3624 = vadd.f32 %v3578, 1.0
      %v3625 = vadd.f32 %v3580, 1.0
      %v3626 = vadd.f32 %v3582, 1.0
      %v3627 = vadd.f32 %v3584, 1.0
      %v3628 = vadd.f32 %v3586, 1.0
      %v3629 = vadd.f32 %v3588, 1.0
      %v3630 = vadd.f32 %v3590, 1.0
      %v3631 = vadd.f32 %v3592, 1.0
      %v3632 = vadd.f32 %v3594, 1.0
      %v3633 = vadd.f32 %v3596, 1.0
      %v3634 = vadd.f32 %v3598, 1.0
      %v3635 = vadd.f32 %v3600, 1.0
      %v3636 = vadd.f32 %v3602, 1.0
      %v3637 = vadd.f32 %v3604, 1.0
      %v3638 = vadd.f32 %v3606, 1.0
      %v3639 = vlog2.pop %v3607
      %v3640 = vmul.f32 %v3639, 0.6931472
      %v3641 = vlog2.pop %v3608
      %v3642 = vmul.f32 %v3641, 0.6931472
      %v3643 = vlog2.pop %v3609
      %v3644 = vmul.f32 %v3643, 0.6931472
      %v3645 = vlog2.pop %v3610
      %v3646 = vmul.f32 %v3645, 0.6931472
      %v3647 = vlog2.pop %v3611
      %v3648 = vmul.f32 %v3647, 0.6931472
      %v3649 = vlog2.pop %v3612
      %v3650 = vmul.f32 %v3649, 0.6931472
      %v3651 = vlog2.pop %v3613
      %v3652 = vmul.f32 %v3651, 0.6931472
      %v3653 = vlog2.pop %v3614
      %v3654 = vmul.f32 %v3653, 0.6931472
      %v3655 = vlog2.pop %v3615
      %v3656 = vmul.f32 %v3655, 0.6931472
      %v3657 = vlog2.pop %v3616
      %v3658 = vmul.f32 %v3657, 0.6931472
      %v3659 = vlog2.pop %v3617
      %v3660 = vmul.f32 %v3659, 0.6931472
      %v3661 = vlog2.pop %v3618
      %v3662 = vmul.f32 %v3661, 0.6931472
      %v3663 = vlog2.pop %v3619
      %v3664 = vmul.f32 %v3663, 0.6931472
      %v3665 = vlog2.pop %v3620
      %v3666 = vmul.f32 %v3665, 0.6931472
      %v3667 = vlog2.pop %v3621
      %v3668 = vmul.f32 %v3667, 0.6931472
      %v3669 = vlog2.pop %v3622
      %v3670 = vmul.f32 %v3669, 0.6931472
      %v3671 = vlog2.pop %v3623
      %v3672 = vmul.f32 %v3671, 0.6931472
      %v3673 = vlog2.pop %v3624
      %v3674 = vmul.f32 %v3673, 0.6931472
      %v3675 = vlog2.pop %v3625
      %v3676 = vmul.f32 %v3675, 0.6931472
      %v3677 = vlog2.pop %v3626
      %v3678 = vmul.f32 %v3677, 0.6931472
      %v3679 = vlog2.pop %v3627
      %v3680 = vmul.f32 %v3679, 0.6931472
      %v3681 = vlog2.pop %v3628
      %v3682 = vmul.f32 %v3681, 0.6931472
      %v3683 = vlog2.pop %v3629
      %v3684 = vmul.f32 %v3683, 0.6931472
      %v3685 = vlog2.pop %v3630
      %v3686 = vmul.f32 %v3685, 0.6931472
      %v3687 = vlog2.pop %v3631
      %v3688 = vmul.f32 %v3687, 0.6931472
      %v3689 = vlog2.pop %v3632
      %v3690 = vmul.f32 %v3689, 0.6931472
      %v3691 = vlog2.pop %v3633
      %v3692 = vmul.f32 %v3691, 0.6931472
      %v3693 = vlog2.pop %v3634
      %v3694 = vmul.f32 %v3693, 0.6931472
      %v3695 = vlog2.pop %v3635
      %v3696 = vmul.f32 %v3695, 0.6931472
      %v3697 = vlog2.pop %v3636
      %v3698 = vmul.f32 %v3697, 0.6931472
      %v3699 = vlog2.pop %v3637
      %v3700 = vmul.f32 %v3699, 0.6931472
      %v3701 = vlog2.pop %v3638
      %v3702 = vmul.f32 %v3701, 0.6931472
      %v3703 = vadd.f32 %v3447, %v3640
      %v3704 = vadd.f32 %v3448, %v3642
      %v3705 = vadd.f32 %v3449, %v3644
      %v3706 = vadd.f32 %v3450, %v3646
      %v3707 = vadd.f32 %v3451, %v3648
      %v3708 = vadd.f32 %v3452, %v3650
      %v3709 = vadd.f32 %v3453, %v3652
      %v3710 = vadd.f32 %v3454, %v3654
      %v3711 = vadd.f32 %v3455, %v3656
      %v3712 = vadd.f32 %v3456, %v3658
      %v3713 = vadd.f32 %v3457, %v3660
      %v3714 = vadd.f32 %v3458, %v3662
      %v3715 = vadd.f32 %v3459, %v3664
      %v3716 = vadd.f32 %v3460, %v3666
      %v3717 = vadd.f32 %v3461, %v3668
      %v3718 = vadd.f32 %v3462, %v3670
      %v3719 = vadd.f32 %v3463, %v3672
      %v3720 = vadd.f32 %v3464, %v3674
      %v3721 = vadd.f32 %v3465, %v3676
      %v3722 = vadd.f32 %v3466, %v3678
      %v3723 = vadd.f32 %v3467, %v3680
      %v3724 = vadd.f32 %v3468, %v3682
      %v3725 = vadd.f32 %v3469, %v3684
      %v3726 = vadd.f32 %v3470, %v3686
      %v3727 = vadd.f32 %v3471, %v3688
      %v3728 = vadd.f32 %v3472, %v3690
      %v3729 = vadd.f32 %v3473, %v3692
      %v3730 = vadd.f32 %v3474, %v3694
      %v3731 = vadd.f32 %v3475, %v3696
      %v3732 = vadd.f32 %v3476, %v3698
      %v3733 = vadd.f32 %v3477, %v3700
      %v3734 = vadd.f32 %v3478, %v3702
      %v3735 = vtanh.pop %v3703
      %v3736 = vtanh.pop %v3704
      %v3737 = vtanh.pop %v3705
      %v3738 = vtanh.pop %v3706
      %v3739 = vtanh.pop %v3707
      %v3740 = vtanh.pop %v3708
      %v3741 = vtanh.pop %v3709
      %v3742 = vtanh.pop %v3710
      %v3743 = vtanh.pop %v3711
      %v3744 = vtanh.pop %v3712
      %v3745 = vtanh.pop %v3713
      %v3746 = vtanh.pop %v3714
      %v3747 = vtanh.pop %v3715
      %v3748 = vtanh.pop %v3716
      %v3749 = vtanh.pop %v3717
      %v3750 = vtanh.pop %v3718
      %v3751 = vtanh.pop %v3719
      %v3752 = vtanh.pop %v3720
      %v3753 = vtanh.pop %v3721
      %v3754 = vtanh.pop %v3722
      %v3755 = vtanh.pop %v3723
      %v3756 = vtanh.pop %v3724
      %v3757 = vtanh.pop %v3725
      %v3758 = vtanh.pop %v3726
      %v3759 = vtanh.pop %v3727
      %v3760 = vtanh.pop %v3728
      %v3761 = vtanh.pop %v3729
      %v3762 = vtanh.pop %v3730
      %v3763 = vtanh.pop %v3731
      %v3764 = vtanh.pop %v3732
      %v3765 = vtanh.pop %v3733
      %v3766 = vtanh.pop %v3734
      %v3767 = vmul.f32 %v3415, %v3735
      %v3768 = vmul.f32 %v3416, %v3736
      %v3769 = vmul.f32 %v3417, %v3737
      %v3770 = vmul.f32 %v3418, %v3738
      %v3771 = vmul.f32 %v3419, %v3739
      %v3772 = vmul.f32 %v3420, %v3740
      %v3773 = vmul.f32 %v3421, %v3741
      %v3774 = vmul.f32 %v3422, %v3742
      %v3775 = vmul.f32 %v3423, %v3743
      %v3776 = vmul.f32 %v3424, %v3744
      %v3777 = vmul.f32 %v3425, %v3745
      %v3778 = vmul.f32 %v3426, %v3746
      %v3779 = vmul.f32 %v3427, %v3747
      %v3780 = vmul.f32 %v3428, %v3748
      %v3781 = vmul.f32 %v3429, %v3749
      %v3782 = vmul.f32 %v3430, %v3750
      %v3783 = vmul.f32 %v3431, %v3751
      %v3784 = vmul.f32 %v3432, %v3752
      %v3785 = vmul.f32 %v3433, %v3753
      %v3786 = vmul.f32 %v3434, %v3754
      %v3787 = vmul.f32 %v3435, %v3755
      %v3788 = vmul.f32 %v3436, %v3756
      %v3789 = vmul.f32 %v3437, %v3757
      %v3790 = vmul.f32 %v3438, %v3758
      %v3791 = vmul.f32 %v3439, %v3759
      %v3792 = vmul.f32 %v3440, %v3760
      %v3793 = vmul.f32 %v3441, %v3761
      %v3794 = vmul.f32 %v3442, %v3762
      %v3795 = vmul.f32 %v3443, %v3763
      %v3796 = vmul.f32 %v3444, %v3764
      %v3797 = vmul.f32 %v3445, %v3765
      %v3798 = vmul.f32 %v3446, %v3766
      %vm3799 = vcmask 64512
      %3800 = vst.msk [vmem:[%s224] sm:$0xff] %vm3799, %v3767
      %3801 = vst.msk [vmem:[%s224 + $0x8] sm:$0xff] %vm3799, %v3768
      %3802 = vst.msk [vmem:[%s224 + $0x10] sm:$0xff] %vm3799, %v3769
      %3803 = vst.msk [vmem:[%s224 + $0x18] sm:$0xff] %vm3799, %v3770
      %3804 = vst.msk [vmem:[%s224 + $0x20] sm:$0xff] %vm3799, %v3771
      %3805 = vst.msk [vmem:[%s224 + $0x28] sm:$0xff] %vm3799, %v3772
      %3806 = vst.msk [vmem:[%s224 + $0x30] sm:$0xff] %vm3799, %v3773
      %3807 = vst.msk [vmem:[%s224 + $0x38] sm:$0xff] %vm3799, %v3774
      %3808 = vst.msk [vmem:[%s224 + $0x40] sm:$0xff] %vm3799, %v3775
      %3809 = vst.msk [vmem:[%s224 + $0x48] sm:$0xff] %vm3799, %v3776
      %3810 = vst.msk [vmem:[%s224 + $0x50] sm:$0xff] %vm3799, %v3777
      %3811 = vst.msk [vmem:[%s224 + $0x58] sm:$0xff] %vm3799, %v3778
      %3812 = vst.msk [vmem:[%s224 + $0x60] sm:$0xff] %vm3799, %v3779
      %3813 = vst.msk [vmem:[%s224 + $0x68] sm:$0xff] %vm3799, %v3780
      %3814 = vst.msk [vmem:[%s224 + $0x70] sm:$0xff] %vm3799, %v3781
      %3815 = vst.msk [vmem:[%s224 + $0x78] sm:$0xff] %vm3799, %v3782
      %3816 = vst.msk [vmem:[%s224 + $0x80] sm:$0xff] %vm3799, %v3783
      %3817 = vst.msk [vmem:[%s224 + $0x88] sm:$0xff] %vm3799, %v3784
      %3818 = vst.msk [vmem:[%s224 + $0x90] sm:$0xff] %vm3799, %v3785
      %3819 = vst.msk [vmem:[%s224 + $0x98] sm:$0xff] %vm3799, %v3786
      %3820 = vst.msk [vmem:[%s224 + $0xa0] sm:$0xff] %vm3799, %v3787
      %3821 = vst.msk [vmem:[%s224 + $0xa8] sm:$0xff] %vm3799, %v3788
      %3822 = vst.msk [vmem:[%s224 + $0xb0] sm:$0xff] %vm3799, %v3789
      %3823 = vst.msk [vmem:[%s224 + $0xb8] sm:$0xff] %vm3799, %v3790
      %3824 = vst.msk [vmem:[%s224 + $0xc0] sm:$0xff] %vm3799, %v3791
      %3825 = vst.msk [vmem:[%s224 + $0xc8] sm:$0xff] %vm3799, %v3792
      %3826 = vst.msk [vmem:[%s224 + $0xd0] sm:$0xff] %vm3799, %v3793
      %3827 = vst.msk [vmem:[%s224 + $0xd8] sm:$0xff] %vm3799, %v3794
      %3828 = vst.msk [vmem:[%s224 + $0xe0] sm:$0xff] %vm3799, %v3795
      %3829 = vst.msk [vmem:[%s224 + $0xe8] sm:$0xff] %vm3799, %v3796
      %3830 = vst.msk [vmem:[%s224 + $0xf0] sm:$0xff] %vm3799, %v3797
      %3831 = vst.msk [vmem:[%s224 + $0xf8] sm:$0xff] %vm3799, %v3798
      %p3832 = scmp.lt.s32.totalorder %s16, 1
      %s3833 = scalar_select %p3832, %s16, 1
      %s3834 = smul.addr %s3833, 32
      %s3835 = smul.addr %s3834, 8
      %s3836 = scalar_lea.vmem %s5, %s3835
      // Predicated region
      $region41: #{tpu_custom_call.1} parent=39 // pred_check
        %p3837 = pneg %p144
      $region42: #{tpu_custom_call.1} parent=39 // pred_check_branch
        %3839 = sbr.rel (%p3837) target = $region44
      $region43: #{tpu_custom_call.1} parent=39 // pred_region
        _
      $region44: #{tpu_custom_call.1} parent=39 // pred_fallthru
        _
    $region40: #{tpu_custom_call.1} parent=5 // pred_fallthru
      _
    %p3840 = scmp.le.s32.totalorder 2, %s11
    // Predicated region
    $region45: #{tpu_custom_call.1} parent=5 // pred_check
      %p3841 = pneg %p3840
    $region46: #{tpu_custom_call.1} parent=5 // pred_check_branch
      %3843 = sbr.rel (%p3841) target = $region48
    $region47: #{tpu_custom_call.1} parent=5 // pred_region
      %s3844 = ssub.s32 %s11, 2
      // Predicated region
      $region49: #{tpu_custom_call.1} parent=47 // pred_check
        %p3845 = pneg %p150
      $region50: #{tpu_custom_call.1} parent=47 // pred_check_branch
        %3847 = sbr.rel (%p3845) target = $region52
      $region51: #{tpu_custom_call.1} parent=47 // pred_region
        %p3848 = scmp.lt.s32.totalorder %s17, 1
        %s3849 = scalar_select %p3848, %s17, 1
        %s3850 = smul.addr %s3849, 32
        %s3851 = smul.addr %s3850, 8
        %s3852 = scalar_lea.vmem %s5, %s3851
      $region52: #{tpu_custom_call.1} parent=47 // pred_fallthru
        _
    $region48: #{tpu_custom_call.1} parent=5 // pred_fallthru
      _
  $region6: #{tpu_custom_call.1} parent=0 // loop_footer
    %s15 = sadd.s32 1, %s11
  $region7: #{tpu_custom_call.1} parent=0 // loop_footer_branch
    %10 = sbr.rel target = $region3
  $region8: #{tpu_custom_call.1} parent=0 // loop_exit
    _

</llo_original>
